<compile_context>
chip_gen: v7x
topology: tpu7x:2x2x1
jax: 0.10.0
libtpu: 0.0.40
codegen_flags: <defaults>
</compile_context>

<pallas_src>
import functools
import jax
import jax.numpy as jnp
from jax import lax
from jax.experimental import pallas as pl
from jax.experimental.pallas import tpu as pltpu

# ----------------- small synthetic config (mirrors module __init__ shapes) ----
PREFIX_LENGTH = 8            # <= 10  -> MLP clip_project path
PREFIX_SIZE = 16             # CLIP feature dim (512 in original)
EMBED = 32                   # gpt_embedding_size (768 in real GPT-2)
N_HEAD = 4
HEAD_DIM = EMBED // N_HEAD
N_LAYER = 2
VOCAB = 64
TEXT_LEN = 8                 # length of `tokens`
SEQ = PREFIX_LENGTH + TEXT_LEN
MLP_HIDDEN = 4 * EMBED
CLIP_HIDDEN = EMBED * PREFIX_LENGTH // 2     # 128
LN_EPS = 1e-5
ATTN_SCALE = 1.0 / float(HEAD_DIM) ** 0.5


# ------------------------------ in-kernel helpers ------------------------------
def _layernorm(x, g, b):
    mu = jnp.mean(x, axis=-1, keepdims=True)
    var = jnp.mean(jnp.square(x - mu), axis=-1, keepdims=True)
    return (x - mu) * lax.rsqrt(var + LN_EPS) * g + b


def _gelu_new(x):
    c = 0.7978845608028654  # sqrt(2/pi)
    return 0.5 * x * (1.0 + jnp.tanh(c * (x + 0.044715 * x * x * x)))


def _bf16(x):
    return x.astype(jnp.bfloat16)


# --------------------------- fully fused forward kernel ------------------------
def _fused_forward_kernel(prefix_ref, emb_ref, wpe_ref, wte_ref,
                          cw1_ref, cb1_ref, cw2_ref, cb2_ref,
                          ln1g_ref, ln1b_ref, attnw_ref, attnb_ref,
                          projw_ref, projb_ref, ln2g_ref, ln2b_ref,
                          fcw_ref, fcb_ref, mlpw_ref, mlpb_ref,
                          lnfg_ref, lnfb_ref,
                          logits_ref):
    b = pl.program_id(0)

    # ---- clip_project: Linear -> Tanh -> Linear (output laid out per prefix row) ----
    pvec = prefix_ref[pl.ds(b, 1), :]                                   # [1, PREFIX_SIZE] f32
    h1 = jnp.dot(_bf16(pvec), cw1_ref[...],
                 preferred_element_type=jnp.float32) + cb1_ref[...]
    h1 = _bf16(jnp.tanh(h1))                                            # [1, CLIP_HIDDEN]
    rows = []
    for p in range(PREFIX_LENGTH):
        r = jnp.dot(h1, cw2_ref[p],
                    preferred_element_type=jnp.float32) + cb2_ref[p]    # [1, EMBED]
        rows.append(r)

    # ---- concat(prefix_projections, embedding_text) + position embeddings ----
    rows.append(emb_ref[b])                                             # [TEXT_LEN, EMBED]
    x = jnp.concatenate(rows, axis=0)                                   # [SEQ, EMBED] f32
    h = x + wpe_ref[...]                                                # residual stream (f32)

    row_ids = lax.broadcasted_iota(jnp.int32, (SEQ, SEQ), 0)
    col_ids = lax.broadcasted_iota(jnp.int32, (SEQ, SEQ), 1)
    causal = col_ids <= row_ids

    # ---- GPT-2 transformer blocks (statically unrolled, everything VMEM-resident) ----
    for l in range(N_LAYER):
        xn = _bf16(_layernorm(h, ln1g_ref[l], ln1b_ref[l]))
        qkv = jnp.dot(xn, attnw_ref[l],
                      preferred_element_type=jnp.float32) + attnb_ref[l]   # [SEQ, 3E] f32

        heads = []
        for hh in range(N_HEAD):
            q = _bf16(qkv[:, hh * HEAD_DIM:(hh + 1) * HEAD_DIM] * ATTN_SCALE)
            k = _bf16(qkv[:, EMBED + hh * HEAD_DIM: EMBED + (hh + 1) * HEAD_DIM])
            v = _bf16(qkv[:, 2 * EMBED + hh * HEAD_DIM: 2 * EMBED + (hh + 1) * HEAD_DIM])
            s = lax.dot_general(q, k, (((1,), (1,)), ((), ())),
                                preferred_element_type=jnp.float32)        # [SEQ, SEQ] f32
            s = jnp.where(causal, s, -1e9)
            s = s - jnp.max(s, axis=-1, keepdims=True)
            pr = jnp.exp(s)
            pr = pr * pl.reciprocal(jnp.sum(pr, axis=-1, keepdims=True), approx=True)
            heads.append(jnp.dot(_bf16(pr), v,
                                 preferred_element_type=jnp.float32))      # [SEQ, HEAD_DIM]
        a = _bf16(jnp.concatenate(heads, axis=-1))                          # [SEQ, EMBED]

        # attention output projection with fused residual add
        h = h + jnp.dot(a, projw_ref[l],
                        preferred_element_type=jnp.float32) + projb_ref[l]

        # MLP (gelu_new) with fused residual add
        xn2 = _bf16(_layernorm(h, ln2g_ref[l], ln2b_ref[l]))
        m = jnp.dot(xn2, fcw_ref[l],
                    preferred_element_type=jnp.float32) + fcb_ref[l]
        m = _bf16(_gelu_new(m))
        h = h + jnp.dot(m, mlpw_ref[l],
                        preferred_element_type=jnp.float32) + mlpb_ref[l]

    # ---- final LN + tied lm_head (contract wte on its embedding dim, no transpose) ----
    hf = _bf16(_layernorm(h, lnfg_ref[...], lnfb_ref[...]))
    logits_ref[0] = lax.dot_general(hf, wte_ref[...], (((1,), (1,)), ((), ())),
                                    preferred_element_type=jnp.float32)     # [SEQ, VOCAB]


# ------------------------------ full forward pass ------------------------------
def clip_caption_forward(params, tokens, prefix, mask=None, labels=None):
    """Mirrors ClipCaptionModel.forward(tokens, prefix, mask, labels)."""
    # TODO(synk): attention_mask handling (GPT-2 extended mask for padded batches) is not
    #             implemented; only mask=None (pure causal attention) is supported.
    assert mask is None
    B, Lt = tokens.shape
    assert Lt == TEXT_LEN
    T = PREFIX_LENGTH + Lt

    # embedding_text = gpt.transformer.wte(tokens)  (single tiny XLA gather feeding the kernel)
    emb_text = jnp.take(params["wte"], tokens, axis=0).astype(jnp.float32)   # [B, Lt, E]

    def full_spec(arr):
        ndim = arr.ndim
        return pl.BlockSpec(arr.shape, lambda b, _n=ndim: (0,) * _n)

    inputs = (prefix, emb_text, params["wpe"], params["wte"],
              params["clip_w1"], params["clip_b1"], params["clip_w2"], params["clip_b2"],
              params["ln1_g"], params["ln1_b"], params["attn_w"], params["attn_b"],
              params["proj_w"], params["proj_b"], params["ln2_g"], params["ln2_b"],
              params["fc_w"], params["fc_b"], params["mlp_w"], params["mlp_b"],
              params["lnf_g"], params["lnf_b"])

    logits = pl.pallas_call(
        _fused_forward_kernel,
        out_shape=jax.ShapeDtypeStruct((B, T, VOCAB), jnp.float32),
        grid=(B,),
        in_specs=[full_spec(a) for a in inputs],
        out_specs=pl.BlockSpec((1, T, VOCAB), lambda b: (b, 0, 0)),
        compiler_params=pltpu.CompilerParams(dimension_semantics=("parallel",)),
    )(*inputs)

    loss = None
    if labels is not None:
        # labels = cat((zeros dummy_token, tokens), dim=1); GPT-2 shifted CE loss
        dummy = jnp.zeros((B, PREFIX_LENGTH), dtype=tokens.dtype)
        full_labels = jnp.concatenate([dummy, tokens], axis=1)
        shift_logits = logits[:, :-1, :]
        shift_labels = full_labels[:, 1:]
        logp = jax.nn.log_softmax(shift_logits, axis=-1)
        ll = jnp.take_along_axis(logp, shift_labels[..., None], axis=-1)[..., 0]
        loss = -jnp.mean(ll)
    return {"logits": logits, "loss": loss}


# ------------------------------ deterministic init -----------------------------
def init_params(key):
    keys = jax.random.split(key, 64)
    it = iter(keys)

    def norm(shape, std=0.02, dtype=jnp.bfloat16):
        return (jax.random.normal(next(it), shape, jnp.float32) * std).astype(dtype)

    # clip_project second linear: [CLIP_HIDDEN, P*E] pre-laid-out once as [P, CLIP_HIDDEN, E]
    clip_w2_flat = jax.random.normal(next(it), (CLIP_HIDDEN, PREFIX_LENGTH * EMBED),
                                     jnp.float32) * 0.02
    clip_w2 = clip_w2_flat.reshape(CLIP_HIDDEN, PREFIX_LENGTH, EMBED)
    clip_w2 = jnp.transpose(clip_w2, (1, 0, 2)).astype(jnp.bfloat16)

    params = {
        "wte": norm((VOCAB, EMBED)),                                   # bf16, tied lm_head
        "wpe": norm((SEQ, EMBED), 0.01, jnp.float32),
        "clip_w1": norm((PREFIX_SIZE, CLIP_HIDDEN)),
        "clip_b1": jnp.zeros((1, CLIP_HIDDEN), jnp.float32),
        "clip_w2": clip_w2,
        "clip_b2": jnp.zeros((PREFIX_LENGTH, 1, EMBED), jnp.float32),
        "lnf_g": jnp.ones((1, EMBED), jnp.float32),
        "lnf_b": jnp.zeros((1, EMBED), jnp.float32),
    }

    ln1_g, ln1_b, attn_w, attn_b, proj_w, proj_b = [], [], [], [], [], []
    ln2_g, ln2_b, fc_w, fc_b, mlp_w, mlp_b = [], [], [], [], [], []
    for _ in range(N_LAYER):
        ln1_g.append(jnp.ones((1, EMBED), jnp.float32))
        ln1_b.append(jnp.zeros((1, EMBED), jnp.float32))
        attn_w.append(norm((EMBED, 3 * EMBED)))
        attn_b.append(jnp.zeros((1, 3 * EMBED), jnp.float32))
        proj_w.append(norm((EMBED, EMBED)))
        proj_b.append(jnp.zeros((1, EMBED), jnp.float32))
        ln2_g.append(jnp.ones((1, EMBED), jnp.float32))
        ln2_b.append(jnp.zeros((1, EMBED), jnp.float32))
        fc_w.append(norm((EMBED, MLP_HIDDEN)))
        fc_b.append(jnp.zeros((1, MLP_HIDDEN), jnp.float32))
        mlp_w.append(norm((MLP_HIDDEN, EMBED)))
        mlp_b.append(jnp.zeros((1, EMBED), jnp.float32))

    params.update({
        "ln1_g": jnp.stack(ln1_g), "ln1_b": jnp.stack(ln1_b),
        "attn_w": jnp.stack(attn_w), "attn_b": jnp.stack(attn_b),
        "proj_w": jnp.stack(proj_w), "proj_b": jnp.stack(proj_b),
        "ln2_g": jnp.stack(ln2_g), "ln2_b": jnp.stack(ln2_b),
        "fc_w": jnp.stack(fc_w), "fc_b": jnp.stack(fc_b),
        "mlp_w": jnp.stack(mlp_w), "mlp_b": jnp.stack(mlp_b),
    })
    return params


if __name__ == "__main__":
    key = jax.random.PRNGKey(0)
    pkey, tkey, xkey = jax.random.split(key, 3)
    params = init_params(pkey)
    tokens = jax.random.randint(tkey, (2, TEXT_LEN), 0, VOCAB, dtype=jnp.int32)
    prefix = jax.random.normal(xkey, (2, PREFIX_SIZE), jnp.float32)

    fwd = jax.jit(clip_caption_forward)
    out = fwd(params, tokens, prefix, None, tokens)
    jax.block_until_ready(out["logits"])
    jax.block_until_ready(out["loss"])
    assert out["logits"].shape == (2, PREFIX_LENGTH + TEXT_LEN, VOCAB)
    assert bool(jnp.isfinite(out["loss"]))
    print("KERNEL_OK")
</pallas_src>

<mosaic_0001>
module attributes {stable_mosaic.version = 11 : i64} {
  func.func @_fused_forward_kernel(%arg0: i32, %arg1: memref<2x16xf32, #tpu.memory_space<vmem>>, %arg2: memref<2x8x32xf32, #tpu.memory_space<vmem>>, %arg3: memref<16x32xf32, #tpu.memory_space<vmem>>, %arg4: memref<64x32xbf16, #tpu.memory_space<vmem>>, %arg5: memref<16x128xbf16, #tpu.memory_space<vmem>>, %arg6: memref<1x128xf32, #tpu.memory_space<vmem>>, %arg7: memref<8x128x32xbf16, #tpu.memory_space<vmem>>, %arg8: memref<8x1x32xf32, #tpu.memory_space<vmem>>, %arg9: memref<2x1x32xf32, #tpu.memory_space<vmem>>, %arg10: memref<2x1x32xf32, #tpu.memory_space<vmem>>, %arg11: memref<2x32x96xbf16, #tpu.memory_space<vmem>>, %arg12: memref<2x1x96xf32, #tpu.memory_space<vmem>>, %arg13: memref<2x32x32xbf16, #tpu.memory_space<vmem>>, %arg14: memref<2x1x32xf32, #tpu.memory_space<vmem>>, %arg15: memref<2x1x32xf32, #tpu.memory_space<vmem>>, %arg16: memref<2x1x32xf32, #tpu.memory_space<vmem>>, %arg17: memref<2x32x128xbf16, #tpu.memory_space<vmem>>, %arg18: memref<2x1x128xf32, #tpu.memory_space<vmem>>, %arg19: memref<2x128x32xbf16, #tpu.memory_space<vmem>>, %arg20: memref<2x1x32xf32, #tpu.memory_space<vmem>>, %arg21: memref<1x32xf32, #tpu.memory_space<vmem>>, %arg22: memref<1x32xf32, #tpu.memory_space<vmem>>, %arg23: memref<1x16x64xf32, #tpu.memory_space<vmem>>) attributes {dimension_semantics = [#tpu.dimension_semantics<parallel>], iteration_bounds = array<i64: 2>, scalar_prefetch = 0 : i64, scratch_operands = 0 : i64, tpu.core_type = #tpu.core_type<tc>, window_params = [{pipeline_mode = #tpu.pipeline_mode<synchronous>, transform_indices = @transform_0, window_bounds = array<i64: 2, 16>}, {pipeline_mode = #tpu.pipeline_mode<synchronous>, transform_indices = @transform_1, window_bounds = array<i64: 2, 8, 32>}, {pipeline_mode = #tpu.pipeline_mode<synchronous>, transform_indices = @transform_2, window_bounds = array<i64: 16, 32>}, {pipeline_mode = #tpu.pipeline_mode<synchronous>, transform_indices = @transform_3, window_bounds = array<i64: 64, 32>}, {pipeline_mode = #tpu.pipeline_mode<synchronous>, transform_indices = @transform_4, window_bounds = array<i64: 16, 128>}, {pipeline_mode = #tpu.pipeline_mode<synchronous>, transform_indices = @transform_5, window_bounds = array<i64: 1, 128>}, {pipeline_mode = #tpu.pipeline_mode<synchronous>, transform_indices = @transform_6, window_bounds = array<i64: 8, 128, 32>}, {pipeline_mode = #tpu.pipeline_mode<synchronous>, transform_indices = @transform_7, window_bounds = array<i64: 8, 1, 32>}, {pipeline_mode = #tpu.pipeline_mode<synchronous>, transform_indices = @transform_8, window_bounds = array<i64: 2, 1, 32>}, {pipeline_mode = #tpu.pipeline_mode<synchronous>, transform_indices = @transform_9, window_bounds = array<i64: 2, 1, 32>}, {pipeline_mode = #tpu.pipeline_mode<synchronous>, transform_indices = @transform_10, window_bounds = array<i64: 2, 32, 96>}, {pipeline_mode = #tpu.pipeline_mode<synchronous>, transform_indices = @transform_11, window_bounds = array<i64: 2, 1, 96>}, {pipeline_mode = #tpu.pipeline_mode<synchronous>, transform_indices = @transform_12, window_bounds = array<i64: 2, 32, 32>}, {pipeline_mode = #tpu.pipeline_mode<synchronous>, transform_indices = @transform_13, window_bounds = array<i64: 2, 1, 32>}, {pipeline_mode = #tpu.pipeline_mode<synchronous>, transform_indices = @transform_14, window_bounds = array<i64: 2, 1, 32>}, {pipeline_mode = #tpu.pipeline_mode<synchronous>, transform_indices = @transform_15, window_bounds = array<i64: 2, 1, 32>}, {pipeline_mode = #tpu.pipeline_mode<synchronous>, transform_indices = @transform_16, window_bounds = array<i64: 2, 32, 128>}, {pipeline_mode = #tpu.pipeline_mode<synchronous>, transform_indices = @transform_17, window_bounds = array<i64: 2, 1, 128>}, {pipeline_mode = #tpu.pipeline_mode<synchronous>, transform_indices = @transform_18, window_bounds = array<i64: 2, 128, 32>}, {pipeline_mode = #tpu.pipeline_mode<synchronous>, transform_indices = @transform_19, window_bounds = array<i64: 2, 1, 32>}, {pipeline_mode = #tpu.pipeline_mode<synchronous>, transform_indices = @transform_20, window_bounds = array<i64: 1, 32>}, {pipeline_mode = #tpu.pipeline_mode<synchronous>, transform_indices = @transform_21, window_bounds = array<i64: 1, 32>}, {transform_indices = @transform_22, window_bounds = array<i64: 1, 16, 64>}]} {
    %0 = arith.index_cast %arg0 : i32 to index
    %c0 = arith.constant 0 : index
    %1 = vector.load %arg1[%0, %c0] : memref<2x16xf32, #tpu.memory_space<vmem>>, vector<1x16xf32>
    %2 = arith.truncf %1 : vector<1x16xf32> to vector<1x16xbf16>
    %c0_0 = arith.constant 0 : index
    %c0_1 = arith.constant 0 : index
    %3 = vector.load %arg5[%c0_0, %c0_1] : memref<16x128xbf16, #tpu.memory_space<vmem>>, vector<16x128xbf16>
    %cst = arith.constant dense<0.000000e+00> : vector<1x128xf32>
    %4 = tpu.matmul %2, %3, %cst {dimension_numbers = #tpu.dot_dimension_numbers<[1], [0], [0], [1], [0, 0, 1, 1], [], []>} : vector<1x16xbf16>, vector<16x128xbf16>, vector<1x128xf32> -> vector<1x128xf32>
    %c0_2 = arith.constant 0 : index
    %c0_3 = arith.constant 0 : index
    %5 = vector.load %arg6[%c0_2, %c0_3] : memref<1x128xf32, #tpu.memory_space<vmem>>, vector<1x128xf32>
    %6 = arith.addf %4, %5 : vector<1x128xf32>
    %7 = math.tanh %6 : vector<1x128xf32>
    %8 = arith.truncf %7 : vector<1x128xf32> to vector<1x128xbf16>
    %c0_4 = arith.constant 0 : index
    %c0_5 = arith.constant 0 : index
    %c0_6 = arith.constant 0 : index
    %9 = vector.load %arg7[%c0_4, %c0_5, %c0_6] : memref<8x128x32xbf16, #tpu.memory_space<vmem>>, vector<1x128x32xbf16>
    %10 = vector.shape_cast %9 : vector<1x128x32xbf16> to vector<128x32xbf16>
    %cst_7 = arith.constant dense<0.000000e+00> : vector<1x32xf32>
    %11 = tpu.matmul %8, %10, %cst_7 {dimension_numbers = #tpu.dot_dimension_numbers<[1], [0], [0], [1], [0, 0, 1, 1], [], []>} : vector<1x128xbf16>, vector<128x32xbf16>, vector<1x32xf32> -> vector<1x32xf32>
    %c0_8 = arith.constant 0 : index
    %c0_9 = arith.constant 0 : index
    %c0_10 = arith.constant 0 : index
    %12 = vector.load %arg8[%c0_8, %c0_9, %c0_10] : memref<8x1x32xf32, #tpu.memory_space<vmem>>, vector<1x1x32xf32>
    %13 = vector.shape_cast %12 : vector<1x1x32xf32> to vector<1x32xf32>
    %14 = arith.addf %11, %13 : vector<1x32xf32>
    %c1 = arith.constant 1 : index
    %c0_11 = arith.constant 0 : index
    %c0_12 = arith.constant 0 : index
    %15 = vector.load %arg7[%c1, %c0_11, %c0_12] : memref<8x128x32xbf16, #tpu.memory_space<vmem>>, vector<1x128x32xbf16>
    %16 = vector.shape_cast %15 : vector<1x128x32xbf16> to vector<128x32xbf16>
    %cst_13 = arith.constant dense<0.000000e+00> : vector<1x32xf32>
    %17 = tpu.matmul %8, %16, %cst_13 {dimension_numbers = #tpu.dot_dimension_numbers<[1], [0], [0], [1], [0, 0, 1, 1], [], []>} : vector<1x128xbf16>, vector<128x32xbf16>, vector<1x32xf32> -> vector<1x32xf32>
    %c1_14 = arith.constant 1 : index
    %c0_15 = arith.constant 0 : index
    %c0_16 = arith.constant 0 : index
    %18 = vector.load %arg8[%c1_14, %c0_15, %c0_16] : memref<8x1x32xf32, #tpu.memory_space<vmem>>, vector<1x1x32xf32>
    %19 = vector.shape_cast %18 : vector<1x1x32xf32> to vector<1x32xf32>
    %20 = arith.addf %17, %19 : vector<1x32xf32>
    %c2 = arith.constant 2 : index
    %c0_17 = arith.constant 0 : index
    %c0_18 = arith.constant 0 : index
    %21 = vector.load %arg7[%c2, %c0_17, %c0_18] : memref<8x128x32xbf16, #tpu.memory_space<vmem>>, vector<1x128x32xbf16>
    %22 = vector.shape_cast %21 : vector<1x128x32xbf16> to vector<128x32xbf16>
    %cst_19 = arith.constant dense<0.000000e+00> : vector<1x32xf32>
    %23 = tpu.matmul %8, %22, %cst_19 {dimension_numbers = #tpu.dot_dimension_numbers<[1], [0], [0], [1], [0, 0, 1, 1], [], []>} : vector<1x128xbf16>, vector<128x32xbf16>, vector<1x32xf32> -> vector<1x32xf32>
    %c2_20 = arith.constant 2 : index
    %c0_21 = arith.constant 0 : index
    %c0_22 = arith.constant 0 : index
    %24 = vector.load %arg8[%c2_20, %c0_21, %c0_22] : memref<8x1x32xf32, #tpu.memory_space<vmem>>, vector<1x1x32xf32>
    %25 = vector.shape_cast %24 : vector<1x1x32xf32> to vector<1x32xf32>
    %26 = arith.addf %23, %25 : vector<1x32xf32>
    %c3 = arith.constant 3 : index
    %c0_23 = arith.constant 0 : index
    %c0_24 = arith.constant 0 : index
    %27 = vector.load %arg7[%c3, %c0_23, %c0_24] : memref<8x128x32xbf16, #tpu.memory_space<vmem>>, vector<1x128x32xbf16>
    %28 = vector.shape_cast %27 : vector<1x128x32xbf16> to vector<128x32xbf16>
    %cst_25 = arith.constant dense<0.000000e+00> : vector<1x32xf32>
    %29 = tpu.matmul %8, %28, %cst_25 {dimension_numbers = #tpu.dot_dimension_numbers<[1], [0], [0], [1], [0, 0, 1, 1], [], []>} : vector<1x128xbf16>, vector<128x32xbf16>, vector<1x32xf32> -> vector<1x32xf32>
    %c3_26 = arith.constant 3 : index
    %c0_27 = arith.constant 0 : index
    %c0_28 = arith.constant 0 : index
    %30 = vector.load %arg8[%c3_26, %c0_27, %c0_28] : memref<8x1x32xf32, #tpu.memory_space<vmem>>, vector<1x1x32xf32>
    %31 = vector.shape_cast %30 : vector<1x1x32xf32> to vector<1x32xf32>
    %32 = arith.addf %29, %31 : vector<1x32xf32>
    %c4 = arith.constant 4 : index
    %c0_29 = arith.constant 0 : index
    %c0_30 = arith.constant 0 : index
    %33 = vector.load %arg7[%c4, %c0_29, %c0_30] : memref<8x128x32xbf16, #tpu.memory_space<vmem>>, vector<1x128x32xbf16>
    %34 = vector.shape_cast %33 : vector<1x128x32xbf16> to vector<128x32xbf16>
    %cst_31 = arith.constant dense<0.000000e+00> : vector<1x32xf32>
    %35 = tpu.matmul %8, %34, %cst_31 {dimension_numbers = #tpu.dot_dimension_numbers<[1], [0], [0], [1], [0, 0, 1, 1], [], []>} : vector<1x128xbf16>, vector<128x32xbf16>, vector<1x32xf32> -> vector<1x32xf32>
    %c4_32 = arith.constant 4 : index
    %c0_33 = arith.constant 0 : index
    %c0_34 = arith.constant 0 : index
    %36 = vector.load %arg8[%c4_32, %c0_33, %c0_34] : memref<8x1x32xf32, #tpu.memory_space<vmem>>, vector<1x1x32xf32>
    %37 = vector.shape_cast %36 : vector<1x1x32xf32> to vector<1x32xf32>
    %38 = arith.addf %35, %37 : vector<1x32xf32>
    %c5 = arith.constant 5 : index
    %c0_35 = arith.constant 0 : index
    %c0_36 = arith.constant 0 : index
    %39 = vector.load %arg7[%c5, %c0_35, %c0_36] : memref<8x128x32xbf16, #tpu.memory_space<vmem>>, vector<1x128x32xbf16>
    %40 = vector.shape_cast %39 : vector<1x128x32xbf16> to vector<128x32xbf16>
    %cst_37 = arith.constant dense<0.000000e+00> : vector<1x32xf32>
    %41 = tpu.matmul %8, %40, %cst_37 {dimension_numbers = #tpu.dot_dimension_numbers<[1], [0], [0], [1], [0, 0, 1, 1], [], []>} : vector<1x128xbf16>, vector<128x32xbf16>, vector<1x32xf32> -> vector<1x32xf32>
    %c5_38 = arith.constant 5 : index
    %c0_39 = arith.constant 0 : index
    %c0_40 = arith.constant 0 : index
    %42 = vector.load %arg8[%c5_38, %c0_39, %c0_40] : memref<8x1x32xf32, #tpu.memory_space<vmem>>, vector<1x1x32xf32>
    %43 = vector.shape_cast %42 : vector<1x1x32xf32> to vector<1x32xf32>
    %44 = arith.addf %41, %43 : vector<1x32xf32>
    %c6 = arith.constant 6 : index
    %c0_41 = arith.constant 0 : index
    %c0_42 = arith.constant 0 : index
    %45 = vector.load %arg7[%c6, %c0_41, %c0_42] : memref<8x128x32xbf16, #tpu.memory_space<vmem>>, vector<1x128x32xbf16>
    %46 = vector.shape_cast %45 : vector<1x128x32xbf16> to vector<128x32xbf16>
    %cst_43 = arith.constant dense<0.000000e+00> : vector<1x32xf32>
    %47 = tpu.matmul %8, %46, %cst_43 {dimension_numbers = #tpu.dot_dimension_numbers<[1], [0], [0], [1], [0, 0, 1, 1], [], []>} : vector<1x128xbf16>, vector<128x32xbf16>, vector<1x32xf32> -> vector<1x32xf32>
    %c6_44 = arith.constant 6 : index
    %c0_45 = arith.constant 0 : index
    %c0_46 = arith.constant 0 : index
    %48 = vector.load %arg8[%c6_44, %c0_45, %c0_46] : memref<8x1x32xf32, #tpu.memory_space<vmem>>, vector<1x1x32xf32>
    %49 = vector.shape_cast %48 : vector<1x1x32xf32> to vector<1x32xf32>
    %50 = arith.addf %47, %49 : vector<1x32xf32>
    %c7 = arith.constant 7 : index
    %c0_47 = arith.constant 0 : index
    %c0_48 = arith.constant 0 : index
    %51 = vector.load %arg7[%c7, %c0_47, %c0_48] : memref<8x128x32xbf16, #tpu.memory_space<vmem>>, vector<1x128x32xbf16>
    %52 = vector.shape_cast %51 : vector<1x128x32xbf16> to vector<128x32xbf16>
    %cst_49 = arith.constant dense<0.000000e+00> : vector<1x32xf32>
    %53 = tpu.matmul %8, %52, %cst_49 {dimension_numbers = #tpu.dot_dimension_numbers<[1], [0], [0], [1], [0, 0, 1, 1], [], []>} : vector<1x128xbf16>, vector<128x32xbf16>, vector<1x32xf32> -> vector<1x32xf32>
    %c7_50 = arith.constant 7 : index
    %c0_51 = arith.constant 0 : index
    %c0_52 = arith.constant 0 : index
    %54 = vector.load %arg8[%c7_50, %c0_51, %c0_52] : memref<8x1x32xf32, #tpu.memory_space<vmem>>, vector<1x1x32xf32>
    %55 = vector.shape_cast %54 : vector<1x1x32xf32> to vector<1x32xf32>
    %56 = arith.addf %53, %55 : vector<1x32xf32>
    %57 = arith.index_cast %arg0 : i32 to index
    %c0_53 = arith.constant 0 : index
    %c0_54 = arith.constant 0 : index
    %58 = vector.load %arg2[%57, %c0_53, %c0_54] : memref<2x8x32xf32, #tpu.memory_space<vmem>>, vector<1x8x32xf32>
    %59 = vector.shape_cast %58 : vector<1x8x32xf32> to vector<8x32xf32>
    %60 = tpu.concatenate %14, %20, %26, %32, %38, %44, %50, %56, %59 in 0 : vector<1x32xf32>, vector<1x32xf32>, vector<1x32xf32>, vector<1x32xf32>, vector<1x32xf32>, vector<1x32xf32>, vector<1x32xf32>, vector<1x32xf32>, vector<8x32xf32> -> vector<16x32xf32>
    %c0_55 = arith.constant 0 : index
    %c0_56 = arith.constant 0 : index
    %61 = vector.load %arg3[%c0_55, %c0_56] : memref<16x32xf32, #tpu.memory_space<vmem>>, vector<16x32xf32>
    %62 = arith.addf %60, %61 : vector<16x32xf32>
    %63 = tpu.iota {dimensions = array<i32: 0>} : vector<16x16xi32>
    %64 = tpu.iota {dimensions = array<i32: 1>} : vector<16x16xi32>
    %65 = arith.cmpi sle, %64, %63 : vector<16x16xi32>
    %c0_57 = arith.constant 0 : index
    %c0_58 = arith.constant 0 : index
    %c0_59 = arith.constant 0 : index
    %66 = vector.load %arg9[%c0_57, %c0_58, %c0_59] : memref<2x1x32xf32, #tpu.memory_space<vmem>>, vector<1x1x32xf32>
    %67 = vector.shape_cast %66 : vector<1x1x32xf32> to vector<1x32xf32>
    %c0_60 = arith.constant 0 : index
    %c0_61 = arith.constant 0 : index
    %c0_62 = arith.constant 0 : index
    %68 = vector.load %arg10[%c0_60, %c0_61, %c0_62] : memref<2x1x32xf32, #tpu.memory_space<vmem>>, vector<1x1x32xf32>
    %69 = vector.shape_cast %68 : vector<1x1x32xf32> to vector<1x32xf32>
    %cst_63 = arith.constant dense<0.000000e+00> : vector<16xf32>
    %70 = vector.multi_reduction <add>, %62, %cst_63 [1] : vector<16x32xf32> to vector<16xf32>
    %71 = vector.shape_cast %70 : vector<16xf32> to vector<16x1xf32>
    %cst_64 = arith.constant 3.200000e+01 : f32
    %72 = vector.broadcast %cst_64 : f32 to vector<16x1xf32>
    %73 = arith.divf %71, %72 : vector<16x1xf32>
    %74 = vector.broadcast %73 : vector<16x1xf32> to vector<16x32xf32>
    %75 = arith.subf %62, %74 : vector<16x32xf32>
    %76 = arith.mulf %75, %75 : vector<16x32xf32>
    %cst_65 = arith.constant dense<0.000000e+00> : vector<16xf32>
    %77 = vector.multi_reduction <add>, %76, %cst_65 [1] : vector<16x32xf32> to vector<16xf32>
    %78 = vector.shape_cast %77 : vector<16xf32> to vector<16x1xf32>
    %cst_66 = arith.constant 3.200000e+01 : f32
    %79 = vector.broadcast %cst_66 : f32 to vector<16x1xf32>
    %80 = arith.divf %78, %79 : vector<16x1xf32>
    %81 = vector.broadcast %73 : vector<16x1xf32> to vector<16x32xf32>
    %82 = arith.subf %62, %81 : vector<16x32xf32>
    %cst_67 = arith.constant 9.99999974E-6 : f32
    %83 = vector.broadcast %cst_67 : f32 to vector<16x1xf32>
    %84 = arith.addf %80, %83 : vector<16x1xf32>
    %85 = math.rsqrt %84 : vector<16x1xf32>
    %86 = vector.broadcast %85 : vector<16x1xf32> to vector<16x32xf32>
    %87 = arith.mulf %82, %86 : vector<16x32xf32>
    %88 = vector.broadcast %67 : vector<1x32xf32> to vector<16x32xf32>
    %89 = arith.mulf %87, %88 : vector<16x32xf32>
    %90 = vector.broadcast %69 : vector<1x32xf32> to vector<16x32xf32>
    %91 = arith.addf %89, %90 : vector<16x32xf32>
    %92 = arith.truncf %91 : vector<16x32xf32> to vector<16x32xbf16>
    %c0_68 = arith.constant 0 : index
    %c0_69 = arith.constant 0 : index
    %c0_70 = arith.constant 0 : index
    %93 = vector.load %arg11[%c0_68, %c0_69, %c0_70] : memref<2x32x96xbf16, #tpu.memory_space<vmem>>, vector<1x32x96xbf16>
    %94 = vector.shape_cast %93 : vector<1x32x96xbf16> to vector<32x96xbf16>
    %cst_71 = arith.constant dense<0.000000e+00> : vector<16x96xf32>
    %95 = tpu.matmul %92, %94, %cst_71 {dimension_numbers = #tpu.dot_dimension_numbers<[1], [0], [0], [1], [0, 0, 1, 1], [], []>} : vector<16x32xbf16>, vector<32x96xbf16>, vector<16x96xf32> -> vector<16x96xf32>
    %c0_72 = arith.constant 0 : index
    %c0_73 = arith.constant 0 : index
    %c0_74 = arith.constant 0 : index
    %96 = vector.load %arg12[%c0_72, %c0_73, %c0_74] : memref<2x1x96xf32, #tpu.memory_space<vmem>>, vector<1x1x96xf32>
    %97 = vector.shape_cast %96 : vector<1x1x96xf32> to vector<1x96xf32>
    %98 = vector.broadcast %97 : vector<1x96xf32> to vector<16x96xf32>
    %99 = arith.addf %95, %98 : vector<16x96xf32>
    %100 = vector.extract_strided_slice %99 {offsets = [0, 0], sizes = [16, 8], strides = [1, 1]} : vector<16x96xf32> to vector<16x8xf32>
    %cst_75 = arith.constant 0.353553385 : f32
    %101 = vector.broadcast %cst_75 : f32 to vector<16x8xf32>
    %102 = arith.mulf %100, %101 : vector<16x8xf32>
    %103 = arith.truncf %102 : vector<16x8xf32> to vector<16x8xbf16>
    %104 = vector.extract_strided_slice %99 {offsets = [0, 32], sizes = [16, 8], strides = [1, 1]} : vector<16x96xf32> to vector<16x8xf32>
    %105 = arith.truncf %104 : vector<16x8xf32> to vector<16x8xbf16>
    %106 = vector.extract_strided_slice %99 {offsets = [0, 64], sizes = [16, 8], strides = [1, 1]} : vector<16x96xf32> to vector<16x8xf32>
    %107 = arith.truncf %106 : vector<16x8xf32> to vector<16x8xbf16>
    %cst_76 = arith.constant dense<0.000000e+00> : vector<16x16xf32>
    %108 = tpu.matmul %103, %105, %cst_76 {dimension_numbers = #tpu.dot_dimension_numbers<[1], [1], [0], [0], [0, 0, 1, 0], [], []>} : vector<16x8xbf16>, vector<16x8xbf16>, vector<16x16xf32> -> vector<16x16xf32>
    %cst_77 = arith.constant -1.000000e+09 : f32
    %109 = vector.broadcast %cst_77 : f32 to vector<16x16xf32>
    %110 = arith.select %65, %108, %109 : vector<16x16xi1>, vector<16x16xf32>
    %cst_78 = arith.constant dense<0xFF800000> : vector<16xf32>
    %111 = vector.multi_reduction <maximumf>, %110, %cst_78 [1] : vector<16x16xf32> to vector<16xf32>
    %112 = vector.shape_cast %111 : vector<16xf32> to vector<16x1xf32>
    %113 = vector.broadcast %112 : vector<16x1xf32> to vector<16x16xf32>
    %114 = arith.subf %110, %113 : vector<16x16xf32>
    %115 = math.exp %114 : vector<16x16xf32>
    %cst_79 = arith.constant dense<0.000000e+00> : vector<16xf32>
    %116 = vector.multi_reduction <add>, %115, %cst_79 [1] : vector<16x16xf32> to vector<16xf32>
    %117 = vector.shape_cast %116 : vector<16xf32> to vector<16x1xf32>
    %118 = tpu.reciprocal %117 {approx = true} : vector<16x1xf32> -> vector<16x1xf32>
    %119 = vector.broadcast %118 : vector<16x1xf32> to vector<16x16xf32>
    %120 = arith.mulf %115, %119 : vector<16x16xf32>
    %121 = arith.truncf %120 : vector<16x16xf32> to vector<16x16xbf16>
    %cst_80 = arith.constant dense<0.000000e+00> : vector<16x8xf32>
    %122 = tpu.matmul %121, %107, %cst_80 {dimension_numbers = #tpu.dot_dimension_numbers<[1], [0], [0], [1], [0, 0, 1, 1], [], []>} : vector<16x16xbf16>, vector<16x8xbf16>, vector<16x8xf32> -> vector<16x8xf32>
    %123 = vector.extract_strided_slice %99 {offsets = [0, 8], sizes = [16, 8], strides = [1, 1]} : vector<16x96xf32> to vector<16x8xf32>
    %cst_81 = arith.constant 0.353553385 : f32
    %124 = vector.broadcast %cst_81 : f32 to vector<16x8xf32>
    %125 = arith.mulf %123, %124 : vector<16x8xf32>
    %126 = arith.truncf %125 : vector<16x8xf32> to vector<16x8xbf16>
    %127 = vector.extract_strided_slice %99 {offsets = [0, 40], sizes = [16, 8], strides = [1, 1]} : vector<16x96xf32> to vector<16x8xf32>
    %128 = arith.truncf %127 : vector<16x8xf32> to vector<16x8xbf16>
    %129 = vector.extract_strided_slice %99 {offsets = [0, 72], sizes = [16, 8], strides = [1, 1]} : vector<16x96xf32> to vector<16x8xf32>
    %130 = arith.truncf %129 : vector<16x8xf32> to vector<16x8xbf16>
    %cst_82 = arith.constant dense<0.000000e+00> : vector<16x16xf32>
    %131 = tpu.matmul %126, %128, %cst_82 {dimension_numbers = #tpu.dot_dimension_numbers<[1], [1], [0], [0], [0, 0, 1, 0], [], []>} : vector<16x8xbf16>, vector<16x8xbf16>, vector<16x16xf32> -> vector<16x16xf32>
    %cst_83 = arith.constant -1.000000e+09 : f32
    %132 = vector.broadcast %cst_83 : f32 to vector<16x16xf32>
    %133 = arith.select %65, %131, %132 : vector<16x16xi1>, vector<16x16xf32>
    %cst_84 = arith.constant dense<0xFF800000> : vector<16xf32>
    %134 = vector.multi_reduction <maximumf>, %133, %cst_84 [1] : vector<16x16xf32> to vector<16xf32>
    %135 = vector.shape_cast %134 : vector<16xf32> to vector<16x1xf32>
    %136 = vector.broadcast %135 : vector<16x1xf32> to vector<16x16xf32>
    %137 = arith.subf %133, %136 : vector<16x16xf32>
    %138 = math.exp %137 : vector<16x16xf32>
    %cst_85 = arith.constant dense<0.000000e+00> : vector<16xf32>
    %139 = vector.multi_reduction <add>, %138, %cst_85 [1] : vector<16x16xf32> to vector<16xf32>
    %140 = vector.shape_cast %139 : vector<16xf32> to vector<16x1xf32>
    %141 = tpu.reciprocal %140 {approx = true} : vector<16x1xf32> -> vector<16x1xf32>
    %142 = vector.broadcast %141 : vector<16x1xf32> to vector<16x16xf32>
    %143 = arith.mulf %138, %142 : vector<16x16xf32>
    %144 = arith.truncf %143 : vector<16x16xf32> to vector<16x16xbf16>
    %cst_86 = arith.constant dense<0.000000e+00> : vector<16x8xf32>
    %145 = tpu.matmul %144, %130, %cst_86 {dimension_numbers = #tpu.dot_dimension_numbers<[1], [0], [0], [1], [0, 0, 1, 1], [], []>} : vector<16x16xbf16>, vector<16x8xbf16>, vector<16x8xf32> -> vector<16x8xf32>
    %146 = vector.extract_strided_slice %99 {offsets = [0, 16], sizes = [16, 8], strides = [1, 1]} : vector<16x96xf32> to vector<16x8xf32>
    %cst_87 = arith.constant 0.353553385 : f32
    %147 = vector.broadcast %cst_87 : f32 to vector<16x8xf32>
    %148 = arith.mulf %146, %147 : vector<16x8xf32>
    %149 = arith.truncf %148 : vector<16x8xf32> to vector<16x8xbf16>
    %150 = vector.extract_strided_slice %99 {offsets = [0, 48], sizes = [16, 8], strides = [1, 1]} : vector<16x96xf32> to vector<16x8xf32>
    %151 = arith.truncf %150 : vector<16x8xf32> to vector<16x8xbf16>
    %152 = vector.extract_strided_slice %99 {offsets = [0, 80], sizes = [16, 8], strides = [1, 1]} : vector<16x96xf32> to vector<16x8xf32>
    %153 = arith.truncf %152 : vector<16x8xf32> to vector<16x8xbf16>
    %cst_88 = arith.constant dense<0.000000e+00> : vector<16x16xf32>
    %154 = tpu.matmul %149, %151, %cst_88 {dimension_numbers = #tpu.dot_dimension_numbers<[1], [1], [0], [0], [0, 0, 1, 0], [], []>} : vector<16x8xbf16>, vector<16x8xbf16>, vector<16x16xf32> -> vector<16x16xf32>
    %cst_89 = arith.constant -1.000000e+09 : f32
    %155 = vector.broadcast %cst_89 : f32 to vector<16x16xf32>
    %156 = arith.select %65, %154, %155 : vector<16x16xi1>, vector<16x16xf32>
    %cst_90 = arith.constant dense<0xFF800000> : vector<16xf32>
    %157 = vector.multi_reduction <maximumf>, %156, %cst_90 [1] : vector<16x16xf32> to vector<16xf32>
    %158 = vector.shape_cast %157 : vector<16xf32> to vector<16x1xf32>
    %159 = vector.broadcast %158 : vector<16x1xf32> to vector<16x16xf32>
    %160 = arith.subf %156, %159 : vector<16x16xf32>
    %161 = math.exp %160 : vector<16x16xf32>
    %cst_91 = arith.constant dense<0.000000e+00> : vector<16xf32>
    %162 = vector.multi_reduction <add>, %161, %cst_91 [1] : vector<16x16xf32> to vector<16xf32>
    %163 = vector.shape_cast %162 : vector<16xf32> to vector<16x1xf32>
    %164 = tpu.reciprocal %163 {approx = true} : vector<16x1xf32> -> vector<16x1xf32>
    %165 = vector.broadcast %164 : vector<16x1xf32> to vector<16x16xf32>
    %166 = arith.mulf %161, %165 : vector<16x16xf32>
    %167 = arith.truncf %166 : vector<16x16xf32> to vector<16x16xbf16>
    %cst_92 = arith.constant dense<0.000000e+00> : vector<16x8xf32>
    %168 = tpu.matmul %167, %153, %cst_92 {dimension_numbers = #tpu.dot_dimension_numbers<[1], [0], [0], [1], [0, 0, 1, 1], [], []>} : vector<16x16xbf16>, vector<16x8xbf16>, vector<16x8xf32> -> vector<16x8xf32>
    %169 = vector.extract_strided_slice %99 {offsets = [0, 24], sizes = [16, 8], strides = [1, 1]} : vector<16x96xf32> to vector<16x8xf32>
    %cst_93 = arith.constant 0.353553385 : f32
    %170 = vector.broadcast %cst_93 : f32 to vector<16x8xf32>
    %171 = arith.mulf %169, %170 : vector<16x8xf32>
    %172 = arith.truncf %171 : vector<16x8xf32> to vector<16x8xbf16>
    %173 = vector.extract_strided_slice %99 {offsets = [0, 56], sizes = [16, 8], strides = [1, 1]} : vector<16x96xf32> to vector<16x8xf32>
    %174 = arith.truncf %173 : vector<16x8xf32> to vector<16x8xbf16>
    %175 = vector.extract_strided_slice %99 {offsets = [0, 88], sizes = [16, 8], strides = [1, 1]} : vector<16x96xf32> to vector<16x8xf32>
    %176 = arith.truncf %175 : vector<16x8xf32> to vector<16x8xbf16>
    %cst_94 = arith.constant dense<0.000000e+00> : vector<16x16xf32>
    %177 = tpu.matmul %172, %174, %cst_94 {dimension_numbers = #tpu.dot_dimension_numbers<[1], [1], [0], [0], [0, 0, 1, 0], [], []>} : vector<16x8xbf16>, vector<16x8xbf16>, vector<16x16xf32> -> vector<16x16xf32>
    %cst_95 = arith.constant -1.000000e+09 : f32
    %178 = vector.broadcast %cst_95 : f32 to vector<16x16xf32>
    %179 = arith.select %65, %177, %178 : vector<16x16xi1>, vector<16x16xf32>
    %cst_96 = arith.constant dense<0xFF800000> : vector<16xf32>
    %180 = vector.multi_reduction <maximumf>, %179, %cst_96 [1] : vector<16x16xf32> to vector<16xf32>
    %181 = vector.shape_cast %180 : vector<16xf32> to vector<16x1xf32>
    %182 = vector.broadcast %181 : vector<16x1xf32> to vector<16x16xf32>
    %183 = arith.subf %179, %182 : vector<16x16xf32>
    %184 = math.exp %183 : vector<16x16xf32>
    %cst_97 = arith.constant dense<0.000000e+00> : vector<16xf32>
    %185 = vector.multi_reduction <add>, %184, %cst_97 [1] : vector<16x16xf32> to vector<16xf32>
    %186 = vector.shape_cast %185 : vector<16xf32> to vector<16x1xf32>
    %187 = tpu.reciprocal %186 {approx = true} : vector<16x1xf32> -> vector<16x1xf32>
    %188 = vector.broadcast %187 : vector<16x1xf32> to vector<16x16xf32>
    %189 = arith.mulf %184, %188 : vector<16x16xf32>
    %190 = arith.truncf %189 : vector<16x16xf32> to vector<16x16xbf16>
    %cst_98 = arith.constant dense<0.000000e+00> : vector<16x8xf32>
    %191 = tpu.matmul %190, %176, %cst_98 {dimension_numbers = #tpu.dot_dimension_numbers<[1], [0], [0], [1], [0, 0, 1, 1], [], []>} : vector<16x16xbf16>, vector<16x8xbf16>, vector<16x8xf32> -> vector<16x8xf32>
    %192 = tpu.concatenate %122, %145, %168, %191 in 1 : vector<16x8xf32>, vector<16x8xf32>, vector<16x8xf32>, vector<16x8xf32> -> vector<16x32xf32>
    %193 = arith.truncf %192 : vector<16x32xf32> to vector<16x32xbf16>
    %c0_99 = arith.constant 0 : index
    %c0_100 = arith.constant 0 : index
    %c0_101 = arith.constant 0 : index
    %194 = vector.load %arg13[%c0_99, %c0_100, %c0_101] : memref<2x32x32xbf16, #tpu.memory_space<vmem>>, vector<1x32x32xbf16>
    %195 = vector.shape_cast %194 : vector<1x32x32xbf16> to vector<32x32xbf16>
    %cst_102 = arith.constant dense<0.000000e+00> : vector<16x32xf32>
    %196 = tpu.matmul %193, %195, %cst_102 {dimension_numbers = #tpu.dot_dimension_numbers<[1], [0], [0], [1], [0, 0, 1, 1], [], []>} : vector<16x32xbf16>, vector<32x32xbf16>, vector<16x32xf32> -> vector<16x32xf32>
    %197 = arith.addf %62, %196 : vector<16x32xf32>
    %c0_103 = arith.constant 0 : index
    %c0_104 = arith.constant 0 : index
    %c0_105 = arith.constant 0 : index
    %198 = vector.load %arg14[%c0_103, %c0_104, %c0_105] : memref<2x1x32xf32, #tpu.memory_space<vmem>>, vector<1x1x32xf32>
    %199 = vector.shape_cast %198 : vector<1x1x32xf32> to vector<1x32xf32>
    %200 = vector.broadcast %199 : vector<1x32xf32> to vector<16x32xf32>
    %201 = arith.addf %197, %200 : vector<16x32xf32>
    %c0_106 = arith.constant 0 : index
    %c0_107 = arith.constant 0 : index
    %c0_108 = arith.constant 0 : index
    %202 = vector.load %arg15[%c0_106, %c0_107, %c0_108] : memref<2x1x32xf32, #tpu.memory_space<vmem>>, vector<1x1x32xf32>
    %203 = vector.shape_cast %202 : vector<1x1x32xf32> to vector<1x32xf32>
    %c0_109 = arith.constant 0 : index
    %c0_110 = arith.constant 0 : index
    %c0_111 = arith.constant 0 : index
    %204 = vector.load %arg16[%c0_109, %c0_110, %c0_111] : memref<2x1x32xf32, #tpu.memory_space<vmem>>, vector<1x1x32xf32>
    %205 = vector.shape_cast %204 : vector<1x1x32xf32> to vector<1x32xf32>
    %cst_112 = arith.constant dense<0.000000e+00> : vector<16xf32>
    %206 = vector.multi_reduction <add>, %201, %cst_112 [1] : vector<16x32xf32> to vector<16xf32>
    %207 = vector.shape_cast %206 : vector<16xf32> to vector<16x1xf32>
    %cst_113 = arith.constant 3.200000e+01 : f32
    %208 = vector.broadcast %cst_113 : f32 to vector<16x1xf32>
    %209 = arith.divf %207, %208 : vector<16x1xf32>
    %210 = vector.broadcast %209 : vector<16x1xf32> to vector<16x32xf32>
    %211 = arith.subf %201, %210 : vector<16x32xf32>
    %212 = arith.mulf %211, %211 : vector<16x32xf32>
    %cst_114 = arith.constant dense<0.000000e+00> : vector<16xf32>
    %213 = vector.multi_reduction <add>, %212, %cst_114 [1] : vector<16x32xf32> to vector<16xf32>
    %214 = vector.shape_cast %213 : vector<16xf32> to vector<16x1xf32>
    %cst_115 = arith.constant 3.200000e+01 : f32
    %215 = vector.broadcast %cst_115 : f32 to vector<16x1xf32>
    %216 = arith.divf %214, %215 : vector<16x1xf32>
    %217 = vector.broadcast %209 : vector<16x1xf32> to vector<16x32xf32>
    %218 = arith.subf %201, %217 : vector<16x32xf32>
    %cst_116 = arith.constant 9.99999974E-6 : f32
    %219 = vector.broadcast %cst_116 : f32 to vector<16x1xf32>
    %220 = arith.addf %216, %219 : vector<16x1xf32>
    %221 = math.rsqrt %220 : vector<16x1xf32>
    %222 = vector.broadcast %221 : vector<16x1xf32> to vector<16x32xf32>
    %223 = arith.mulf %218, %222 : vector<16x32xf32>
    %224 = vector.broadcast %203 : vector<1x32xf32> to vector<16x32xf32>
    %225 = arith.mulf %223, %224 : vector<16x32xf32>
    %226 = vector.broadcast %205 : vector<1x32xf32> to vector<16x32xf32>
    %227 = arith.addf %225, %226 : vector<16x32xf32>
    %228 = arith.truncf %227 : vector<16x32xf32> to vector<16x32xbf16>
    %c0_117 = arith.constant 0 : index
    %c0_118 = arith.constant 0 : index
    %c0_119 = arith.constant 0 : index
    %229 = vector.load %arg17[%c0_117, %c0_118, %c0_119] : memref<2x32x128xbf16, #tpu.memory_space<vmem>>, vector<1x32x128xbf16>
    %230 = vector.shape_cast %229 : vector<1x32x128xbf16> to vector<32x128xbf16>
    %cst_120 = arith.constant dense<0.000000e+00> : vector<16x128xf32>
    %231 = tpu.matmul %228, %230, %cst_120 {dimension_numbers = #tpu.dot_dimension_numbers<[1], [0], [0], [1], [0, 0, 1, 1], [], []>} : vector<16x32xbf16>, vector<32x128xbf16>, vector<16x128xf32> -> vector<16x128xf32>
    %c0_121 = arith.constant 0 : index
    %c0_122 = arith.constant 0 : index
    %c0_123 = arith.constant 0 : index
    %232 = vector.load %arg18[%c0_121, %c0_122, %c0_123] : memref<2x1x128xf32, #tpu.memory_space<vmem>>, vector<1x1x128xf32>
    %233 = vector.shape_cast %232 : vector<1x1x128xf32> to vector<1x128xf32>
    %234 = vector.broadcast %233 : vector<1x128xf32> to vector<16x128xf32>
    %235 = arith.addf %231, %234 : vector<16x128xf32>
    %cst_124 = arith.constant 5.000000e-01 : f32
    %236 = vector.broadcast %cst_124 : f32 to vector<16x128xf32>
    %237 = arith.mulf %236, %235 : vector<16x128xf32>
    %cst_125 = arith.constant 4.471500e-02 : f32
    %238 = vector.broadcast %cst_125 : f32 to vector<16x128xf32>
    %239 = arith.mulf %238, %235 : vector<16x128xf32>
    %240 = arith.mulf %239, %235 : vector<16x128xf32>
    %241 = arith.mulf %240, %235 : vector<16x128xf32>
    %242 = arith.addf %235, %241 : vector<16x128xf32>
    %cst_126 = arith.constant 0.797884583 : f32
    %243 = vector.broadcast %cst_126 : f32 to vector<16x128xf32>
    %244 = arith.mulf %243, %242 : vector<16x128xf32>
    %245 = math.tanh %244 : vector<16x128xf32>
    %cst_127 = arith.constant 1.000000e+00 : f32
    %246 = vector.broadcast %cst_127 : f32 to vector<16x128xf32>
    %247 = arith.addf %246, %245 : vector<16x128xf32>
    %248 = arith.mulf %237, %247 : vector<16x128xf32>
    %249 = arith.truncf %248 : vector<16x128xf32> to vector<16x128xbf16>
    %c0_128 = arith.constant 0 : index
    %c0_129 = arith.constant 0 : index
    %c0_130 = arith.constant 0 : index
    %250 = vector.load %arg19[%c0_128, %c0_129, %c0_130] : memref<2x128x32xbf16, #tpu.memory_space<vmem>>, vector<1x128x32xbf16>
    %251 = vector.shape_cast %250 : vector<1x128x32xbf16> to vector<128x32xbf16>
    %cst_131 = arith.constant dense<0.000000e+00> : vector<16x32xf32>
    %252 = tpu.matmul %249, %251, %cst_131 {dimension_numbers = #tpu.dot_dimension_numbers<[1], [0], [0], [1], [0, 0, 1, 1], [], []>} : vector<16x128xbf16>, vector<128x32xbf16>, vector<16x32xf32> -> vector<16x32xf32>
    %253 = arith.addf %201, %252 : vector<16x32xf32>
    %c0_132 = arith.constant 0 : index
    %c0_133 = arith.constant 0 : index
    %c0_134 = arith.constant 0 : index
    %254 = vector.load %arg20[%c0_132, %c0_133, %c0_134] : memref<2x1x32xf32, #tpu.memory_space<vmem>>, vector<1x1x32xf32>
    %255 = vector.shape_cast %254 : vector<1x1x32xf32> to vector<1x32xf32>
    %256 = vector.broadcast %255 : vector<1x32xf32> to vector<16x32xf32>
    %257 = arith.addf %253, %256 : vector<16x32xf32>
    %c1_135 = arith.constant 1 : index
    %c0_136 = arith.constant 0 : index
    %c0_137 = arith.constant 0 : index
    %258 = vector.load %arg9[%c1_135, %c0_136, %c0_137] : memref<2x1x32xf32, #tpu.memory_space<vmem>>, vector<1x1x32xf32>
    %259 = vector.shape_cast %258 : vector<1x1x32xf32> to vector<1x32xf32>
    %c1_138 = arith.constant 1 : index
    %c0_139 = arith.constant 0 : index
    %c0_140 = arith.constant 0 : index
    %260 = vector.load %arg10[%c1_138, %c0_139, %c0_140] : memref<2x1x32xf32, #tpu.memory_space<vmem>>, vector<1x1x32xf32>
    %261 = vector.shape_cast %260 : vector<1x1x32xf32> to vector<1x32xf32>
    %cst_141 = arith.constant dense<0.000000e+00> : vector<16xf32>
    %262 = vector.multi_reduction <add>, %257, %cst_141 [1] : vector<16x32xf32> to vector<16xf32>
    %263 = vector.shape_cast %262 : vector<16xf32> to vector<16x1xf32>
    %cst_142 = arith.constant 3.200000e+01 : f32
    %264 = vector.broadcast %cst_142 : f32 to vector<16x1xf32>
    %265 = arith.divf %263, %264 : vector<16x1xf32>
    %266 = vector.broadcast %265 : vector<16x1xf32> to vector<16x32xf32>
    %267 = arith.subf %257, %266 : vector<16x32xf32>
    %268 = arith.mulf %267, %267 : vector<16x32xf32>
    %cst_143 = arith.constant dense<0.000000e+00> : vector<16xf32>
    %269 = vector.multi_reduction <add>, %268, %cst_143 [1] : vector<16x32xf32> to vector<16xf32>
    %270 = vector.shape_cast %269 : vector<16xf32> to vector<16x1xf32>
    %cst_144 = arith.constant 3.200000e+01 : f32
    %271 = vector.broadcast %cst_144 : f32 to vector<16x1xf32>
    %272 = arith.divf %270, %271 : vector<16x1xf32>
    %273 = vector.broadcast %265 : vector<16x1xf32> to vector<16x32xf32>
    %274 = arith.subf %257, %273 : vector<16x32xf32>
    %cst_145 = arith.constant 9.99999974E-6 : f32
    %275 = vector.broadcast %cst_145 : f32 to vector<16x1xf32>
    %276 = arith.addf %272, %275 : vector<16x1xf32>
    %277 = math.rsqrt %276 : vector<16x1xf32>
    %278 = vector.broadcast %277 : vector<16x1xf32> to vector<16x32xf32>
    %279 = arith.mulf %274, %278 : vector<16x32xf32>
    %280 = vector.broadcast %259 : vector<1x32xf32> to vector<16x32xf32>
    %281 = arith.mulf %279, %280 : vector<16x32xf32>
    %282 = vector.broadcast %261 : vector<1x32xf32> to vector<16x32xf32>
    %283 = arith.addf %281, %282 : vector<16x32xf32>
    %284 = arith.truncf %283 : vector<16x32xf32> to vector<16x32xbf16>
    %c1_146 = arith.constant 1 : index
    %c0_147 = arith.constant 0 : index
    %c0_148 = arith.constant 0 : index
    %285 = vector.load %arg11[%c1_146, %c0_147, %c0_148] : memref<2x32x96xbf16, #tpu.memory_space<vmem>>, vector<1x32x96xbf16>
    %286 = vector.shape_cast %285 : vector<1x32x96xbf16> to vector<32x96xbf16>
    %cst_149 = arith.constant dense<0.000000e+00> : vector<16x96xf32>
    %287 = tpu.matmul %284, %286, %cst_149 {dimension_numbers = #tpu.dot_dimension_numbers<[1], [0], [0], [1], [0, 0, 1, 1], [], []>} : vector<16x32xbf16>, vector<32x96xbf16>, vector<16x96xf32> -> vector<16x96xf32>
    %c1_150 = arith.constant 1 : index
    %c0_151 = arith.constant 0 : index
    %c0_152 = arith.constant 0 : index
    %288 = vector.load %arg12[%c1_150, %c0_151, %c0_152] : memref<2x1x96xf32, #tpu.memory_space<vmem>>, vector<1x1x96xf32>
    %289 = vector.shape_cast %288 : vector<1x1x96xf32> to vector<1x96xf32>
    %290 = vector.broadcast %289 : vector<1x96xf32> to vector<16x96xf32>
    %291 = arith.addf %287, %290 : vector<16x96xf32>
    %292 = vector.extract_strided_slice %291 {offsets = [0, 0], sizes = [16, 8], strides = [1, 1]} : vector<16x96xf32> to vector<16x8xf32>
    %cst_153 = arith.constant 0.353553385 : f32
    %293 = vector.broadcast %cst_153 : f32 to vector<16x8xf32>
    %294 = arith.mulf %292, %293 : vector<16x8xf32>
    %295 = arith.truncf %294 : vector<16x8xf32> to vector<16x8xbf16>
    %296 = vector.extract_strided_slice %291 {offsets = [0, 32], sizes = [16, 8], strides = [1, 1]} : vector<16x96xf32> to vector<16x8xf32>
    %297 = arith.truncf %296 : vector<16x8xf32> to vector<16x8xbf16>
    %298 = vector.extract_strided_slice %291 {offsets = [0, 64], sizes = [16, 8], strides = [1, 1]} : vector<16x96xf32> to vector<16x8xf32>
    %299 = arith.truncf %298 : vector<16x8xf32> to vector<16x8xbf16>
    %cst_154 = arith.constant dense<0.000000e+00> : vector<16x16xf32>
    %300 = tpu.matmul %295, %297, %cst_154 {dimension_numbers = #tpu.dot_dimension_numbers<[1], [1], [0], [0], [0, 0, 1, 0], [], []>} : vector<16x8xbf16>, vector<16x8xbf16>, vector<16x16xf32> -> vector<16x16xf32>
    %cst_155 = arith.constant -1.000000e+09 : f32
    %301 = vector.broadcast %cst_155 : f32 to vector<16x16xf32>
    %302 = arith.select %65, %300, %301 : vector<16x16xi1>, vector<16x16xf32>
    %cst_156 = arith.constant dense<0xFF800000> : vector<16xf32>
    %303 = vector.multi_reduction <maximumf>, %302, %cst_156 [1] : vector<16x16xf32> to vector<16xf32>
    %304 = vector.shape_cast %303 : vector<16xf32> to vector<16x1xf32>
    %305 = vector.broadcast %304 : vector<16x1xf32> to vector<16x16xf32>
    %306 = arith.subf %302, %305 : vector<16x16xf32>
    %307 = math.exp %306 : vector<16x16xf32>
    %cst_157 = arith.constant dense<0.000000e+00> : vector<16xf32>
    %308 = vector.multi_reduction <add>, %307, %cst_157 [1] : vector<16x16xf32> to vector<16xf32>
    %309 = vector.shape_cast %308 : vector<16xf32> to vector<16x1xf32>
    %310 = tpu.reciprocal %309 {approx = true} : vector<16x1xf32> -> vector<16x1xf32>
    %311 = vector.broadcast %310 : vector<16x1xf32> to vector<16x16xf32>
    %312 = arith.mulf %307, %311 : vector<16x16xf32>
    %313 = arith.truncf %312 : vector<16x16xf32> to vector<16x16xbf16>
    %cst_158 = arith.constant dense<0.000000e+00> : vector<16x8xf32>
    %314 = tpu.matmul %313, %299, %cst_158 {dimension_numbers = #tpu.dot_dimension_numbers<[1], [0], [0], [1], [0, 0, 1, 1], [], []>} : vector<16x16xbf16>, vector<16x8xbf16>, vector<16x8xf32> -> vector<16x8xf32>
    %315 = vector.extract_strided_slice %291 {offsets = [0, 8], sizes = [16, 8], strides = [1, 1]} : vector<16x96xf32> to vector<16x8xf32>
    %cst_159 = arith.constant 0.353553385 : f32
    %316 = vector.broadcast %cst_159 : f32 to vector<16x8xf32>
    %317 = arith.mulf %315, %316 : vector<16x8xf32>
    %318 = arith.truncf %317 : vector<16x8xf32> to vector<16x8xbf16>
    %319 = vector.extract_strided_slice %291 {offsets = [0, 40], sizes = [16, 8], strides = [1, 1]} : vector<16x96xf32> to vector<16x8xf32>
    %320 = arith.truncf %319 : vector<16x8xf32> to vector<16x8xbf16>
    %321 = vector.extract_strided_slice %291 {offsets = [0, 72], sizes = [16, 8], strides = [1, 1]} : vector<16x96xf32> to vector<16x8xf32>
    %322 = arith.truncf %321 : vector<16x8xf32> to vector<16x8xbf16>
    %cst_160 = arith.constant dense<0.000000e+00> : vector<16x16xf32>
    %323 = tpu.matmul %318, %320, %cst_160 {dimension_numbers = #tpu.dot_dimension_numbers<[1], [1], [0], [0], [0, 0, 1, 0], [], []>} : vector<16x8xbf16>, vector<16x8xbf16>, vector<16x16xf32> -> vector<16x16xf32>
    %cst_161 = arith.constant -1.000000e+09 : f32
    %324 = vector.broadcast %cst_161 : f32 to vector<16x16xf32>
    %325 = arith.select %65, %323, %324 : vector<16x16xi1>, vector<16x16xf32>
    %cst_162 = arith.constant dense<0xFF800000> : vector<16xf32>
    %326 = vector.multi_reduction <maximumf>, %325, %cst_162 [1] : vector<16x16xf32> to vector<16xf32>
    %327 = vector.shape_cast %326 : vector<16xf32> to vector<16x1xf32>
    %328 = vector.broadcast %327 : vector<16x1xf32> to vector<16x16xf32>
    %329 = arith.subf %325, %328 : vector<16x16xf32>
    %330 = math.exp %329 : vector<16x16xf32>
    %cst_163 = arith.constant dense<0.000000e+00> : vector<16xf32>
    %331 = vector.multi_reduction <add>, %330, %cst_163 [1] : vector<16x16xf32> to vector<16xf32>
    %332 = vector.shape_cast %331 : vector<16xf32> to vector<16x1xf32>
    %333 = tpu.reciprocal %332 {approx = true} : vector<16x1xf32> -> vector<16x1xf32>
    %334 = vector.broadcast %333 : vector<16x1xf32> to vector<16x16xf32>
    %335 = arith.mulf %330, %334 : vector<16x16xf32>
    %336 = arith.truncf %335 : vector<16x16xf32> to vector<16x16xbf16>
    %cst_164 = arith.constant dense<0.000000e+00> : vector<16x8xf32>
    %337 = tpu.matmul %336, %322, %cst_164 {dimension_numbers = #tpu.dot_dimension_numbers<[1], [0], [0], [1], [0, 0, 1, 1], [], []>} : vector<16x16xbf16>, vector<16x8xbf16>, vector<16x8xf32> -> vector<16x8xf32>
    %338 = vector.extract_strided_slice %291 {offsets = [0, 16], sizes = [16, 8], strides = [1, 1]} : vector<16x96xf32> to vector<16x8xf32>
    %cst_165 = arith.constant 0.353553385 : f32
    %339 = vector.broadcast %cst_165 : f32 to vector<16x8xf32>
    %340 = arith.mulf %338, %339 : vector<16x8xf32>
    %341 = arith.truncf %340 : vector<16x8xf32> to vector<16x8xbf16>
    %342 = vector.extract_strided_slice %291 {offsets = [0, 48], sizes = [16, 8], strides = [1, 1]} : vector<16x96xf32> to vector<16x8xf32>
    %343 = arith.truncf %342 : vector<16x8xf32> to vector<16x8xbf16>
    %344 = vector.extract_strided_slice %291 {offsets = [0, 80], sizes = [16, 8], strides = [1, 1]} : vector<16x96xf32> to vector<16x8xf32>
    %345 = arith.truncf %344 : vector<16x8xf32> to vector<16x8xbf16>
    %cst_166 = arith.constant dense<0.000000e+00> : vector<16x16xf32>
    %346 = tpu.matmul %341, %343, %cst_166 {dimension_numbers = #tpu.dot_dimension_numbers<[1], [1], [0], [0], [0, 0, 1, 0], [], []>} : vector<16x8xbf16>, vector<16x8xbf16>, vector<16x16xf32> -> vector<16x16xf32>
    %cst_167 = arith.constant -1.000000e+09 : f32
    %347 = vector.broadcast %cst_167 : f32 to vector<16x16xf32>
    %348 = arith.select %65, %346, %347 : vector<16x16xi1>, vector<16x16xf32>
    %cst_168 = arith.constant dense<0xFF800000> : vector<16xf32>
    %349 = vector.multi_reduction <maximumf>, %348, %cst_168 [1] : vector<16x16xf32> to vector<16xf32>
    %350 = vector.shape_cast %349 : vector<16xf32> to vector<16x1xf32>
    %351 = vector.broadcast %350 : vector<16x1xf32> to vector<16x16xf32>
    %352 = arith.subf %348, %351 : vector<16x16xf32>
    %353 = math.exp %352 : vector<16x16xf32>
    %cst_169 = arith.constant dense<0.000000e+00> : vector<16xf32>
    %354 = vector.multi_reduction <add>, %353, %cst_169 [1] : vector<16x16xf32> to vector<16xf32>
    %355 = vector.shape_cast %354 : vector<16xf32> to vector<16x1xf32>
    %356 = tpu.reciprocal %355 {approx = true} : vector<16x1xf32> -> vector<16x1xf32>
    %357 = vector.broadcast %356 : vector<16x1xf32> to vector<16x16xf32>
    %358 = arith.mulf %353, %357 : vector<16x16xf32>
    %359 = arith.truncf %358 : vector<16x16xf32> to vector<16x16xbf16>
    %cst_170 = arith.constant dense<0.000000e+00> : vector<16x8xf32>
    %360 = tpu.matmul %359, %345, %cst_170 {dimension_numbers = #tpu.dot_dimension_numbers<[1], [0], [0], [1], [0, 0, 1, 1], [], []>} : vector<16x16xbf16>, vector<16x8xbf16>, vector<16x8xf32> -> vector<16x8xf32>
    %361 = vector.extract_strided_slice %291 {offsets = [0, 24], sizes = [16, 8], strides = [1, 1]} : vector<16x96xf32> to vector<16x8xf32>
    %cst_171 = arith.constant 0.353553385 : f32
    %362 = vector.broadcast %cst_171 : f32 to vector<16x8xf32>
    %363 = arith.mulf %361, %362 : vector<16x8xf32>
    %364 = arith.truncf %363 : vector<16x8xf32> to vector<16x8xbf16>
    %365 = vector.extract_strided_slice %291 {offsets = [0, 56], sizes = [16, 8], strides = [1, 1]} : vector<16x96xf32> to vector<16x8xf32>
    %366 = arith.truncf %365 : vector<16x8xf32> to vector<16x8xbf16>
    %367 = vector.extract_strided_slice %291 {offsets = [0, 88], sizes = [16, 8], strides = [1, 1]} : vector<16x96xf32> to vector<16x8xf32>
    %368 = arith.truncf %367 : vector<16x8xf32> to vector<16x8xbf16>
    %cst_172 = arith.constant dense<0.000000e+00> : vector<16x16xf32>
    %369 = tpu.matmul %364, %366, %cst_172 {dimension_numbers = #tpu.dot_dimension_numbers<[1], [1], [0], [0], [0, 0, 1, 0], [], []>} : vector<16x8xbf16>, vector<16x8xbf16>, vector<16x16xf32> -> vector<16x16xf32>
    %cst_173 = arith.constant -1.000000e+09 : f32
    %370 = vector.broadcast %cst_173 : f32 to vector<16x16xf32>
    %371 = arith.select %65, %369, %370 : vector<16x16xi1>, vector<16x16xf32>
    %cst_174 = arith.constant dense<0xFF800000> : vector<16xf32>
    %372 = vector.multi_reduction <maximumf>, %371, %cst_174 [1] : vector<16x16xf32> to vector<16xf32>
    %373 = vector.shape_cast %372 : vector<16xf32> to vector<16x1xf32>
    %374 = vector.broadcast %373 : vector<16x1xf32> to vector<16x16xf32>
    %375 = arith.subf %371, %374 : vector<16x16xf32>
    %376 = math.exp %375 : vector<16x16xf32>
    %cst_175 = arith.constant dense<0.000000e+00> : vector<16xf32>
    %377 = vector.multi_reduction <add>, %376, %cst_175 [1] : vector<16x16xf32> to vector<16xf32>
    %378 = vector.shape_cast %377 : vector<16xf32> to vector<16x1xf32>
    %379 = tpu.reciprocal %378 {approx = true} : vector<16x1xf32> -> vector<16x1xf32>
    %380 = vector.broadcast %379 : vector<16x1xf32> to vector<16x16xf32>
    %381 = arith.mulf %376, %380 : vector<16x16xf32>
    %382 = arith.truncf %381 : vector<16x16xf32> to vector<16x16xbf16>
    %cst_176 = arith.constant dense<0.000000e+00> : vector<16x8xf32>
    %383 = tpu.matmul %382, %368, %cst_176 {dimension_numbers = #tpu.dot_dimension_numbers<[1], [0], [0], [1], [0, 0, 1, 1], [], []>} : vector<16x16xbf16>, vector<16x8xbf16>, vector<16x8xf32> -> vector<16x8xf32>
    %384 = tpu.concatenate %314, %337, %360, %383 in 1 : vector<16x8xf32>, vector<16x8xf32>, vector<16x8xf32>, vector<16x8xf32> -> vector<16x32xf32>
    %385 = arith.truncf %384 : vector<16x32xf32> to vector<16x32xbf16>
    %c1_177 = arith.constant 1 : index
    %c0_178 = arith.constant 0 : index
    %c0_179 = arith.constant 0 : index
    %386 = vector.load %arg13[%c1_177, %c0_178, %c0_179] : memref<2x32x32xbf16, #tpu.memory_space<vmem>>, vector<1x32x32xbf16>
    %387 = vector.shape_cast %386 : vector<1x32x32xbf16> to vector<32x32xbf16>
    %cst_180 = arith.constant dense<0.000000e+00> : vector<16x32xf32>
    %388 = tpu.matmul %385, %387, %cst_180 {dimension_numbers = #tpu.dot_dimension_numbers<[1], [0], [0], [1], [0, 0, 1, 1], [], []>} : vector<16x32xbf16>, vector<32x32xbf16>, vector<16x32xf32> -> vector<16x32xf32>
    %389 = arith.addf %257, %388 : vector<16x32xf32>
    %c1_181 = arith.constant 1 : index
    %c0_182 = arith.constant 0 : index
    %c0_183 = arith.constant 0 : index
    %390 = vector.load %arg14[%c1_181, %c0_182, %c0_183] : memref<2x1x32xf32, #tpu.memory_space<vmem>>, vector<1x1x32xf32>
    %391 = vector.shape_cast %390 : vector<1x1x32xf32> to vector<1x32xf32>
    %392 = vector.broadcast %391 : vector<1x32xf32> to vector<16x32xf32>
    %393 = arith.addf %389, %392 : vector<16x32xf32>
    %c1_184 = arith.constant 1 : index
    %c0_185 = arith.constant 0 : index
    %c0_186 = arith.constant 0 : index
    %394 = vector.load %arg15[%c1_184, %c0_185, %c0_186] : memref<2x1x32xf32, #tpu.memory_space<vmem>>, vector<1x1x32xf32>
    %395 = vector.shape_cast %394 : vector<1x1x32xf32> to vector<1x32xf32>
    %c1_187 = arith.constant 1 : index
    %c0_188 = arith.constant 0 : index
    %c0_189 = arith.constant 0 : index
    %396 = vector.load %arg16[%c1_187, %c0_188, %c0_189] : memref<2x1x32xf32, #tpu.memory_space<vmem>>, vector<1x1x32xf32>
    %397 = vector.shape_cast %396 : vector<1x1x32xf32> to vector<1x32xf32>
    %cst_190 = arith.constant dense<0.000000e+00> : vector<16xf32>
    %398 = vector.multi_reduction <add>, %393, %cst_190 [1] : vector<16x32xf32> to vector<16xf32>
    %399 = vector.shape_cast %398 : vector<16xf32> to vector<16x1xf32>
    %cst_191 = arith.constant 3.200000e+01 : f32
    %400 = vector.broadcast %cst_191 : f32 to vector<16x1xf32>
    %401 = arith.divf %399, %400 : vector<16x1xf32>
    %402 = vector.broadcast %401 : vector<16x1xf32> to vector<16x32xf32>
    %403 = arith.subf %393, %402 : vector<16x32xf32>
    %404 = arith.mulf %403, %403 : vector<16x32xf32>
    %cst_192 = arith.constant dense<0.000000e+00> : vector<16xf32>
    %405 = vector.multi_reduction <add>, %404, %cst_192 [1] : vector<16x32xf32> to vector<16xf32>
    %406 = vector.shape_cast %405 : vector<16xf32> to vector<16x1xf32>
    %cst_193 = arith.constant 3.200000e+01 : f32
    %407 = vector.broadcast %cst_193 : f32 to vector<16x1xf32>
    %408 = arith.divf %406, %407 : vector<16x1xf32>
    %409 = vector.broadcast %401 : vector<16x1xf32> to vector<16x32xf32>
    %410 = arith.subf %393, %409 : vector<16x32xf32>
    %cst_194 = arith.constant 9.99999974E-6 : f32
    %411 = vector.broadcast %cst_194 : f32 to vector<16x1xf32>
    %412 = arith.addf %408, %411 : vector<16x1xf32>
    %413 = math.rsqrt %412 : vector<16x1xf32>
    %414 = vector.broadcast %413 : vector<16x1xf32> to vector<16x32xf32>
    %415 = arith.mulf %410, %414 : vector<16x32xf32>
    %416 = vector.broadcast %395 : vector<1x32xf32> to vector<16x32xf32>
    %417 = arith.mulf %415, %416 : vector<16x32xf32>
    %418 = vector.broadcast %397 : vector<1x32xf32> to vector<16x32xf32>
    %419 = arith.addf %417, %418 : vector<16x32xf32>
    %420 = arith.truncf %419 : vector<16x32xf32> to vector<16x32xbf16>
    %c1_195 = arith.constant 1 : index
    %c0_196 = arith.constant 0 : index
    %c0_197 = arith.constant 0 : index
    %421 = vector.load %arg17[%c1_195, %c0_196, %c0_197] : memref<2x32x128xbf16, #tpu.memory_space<vmem>>, vector<1x32x128xbf16>
    %422 = vector.shape_cast %421 : vector<1x32x128xbf16> to vector<32x128xbf16>
    %cst_198 = arith.constant dense<0.000000e+00> : vector<16x128xf32>
    %423 = tpu.matmul %420, %422, %cst_198 {dimension_numbers = #tpu.dot_dimension_numbers<[1], [0], [0], [1], [0, 0, 1, 1], [], []>} : vector<16x32xbf16>, vector<32x128xbf16>, vector<16x128xf32> -> vector<16x128xf32>
    %c1_199 = arith.constant 1 : index
    %c0_200 = arith.constant 0 : index
    %c0_201 = arith.constant 0 : index
    %424 = vector.load %arg18[%c1_199, %c0_200, %c0_201] : memref<2x1x128xf32, #tpu.memory_space<vmem>>, vector<1x1x128xf32>
    %425 = vector.shape_cast %424 : vector<1x1x128xf32> to vector<1x128xf32>
    %426 = vector.broadcast %425 : vector<1x128xf32> to vector<16x128xf32>
    %427 = arith.addf %423, %426 : vector<16x128xf32>
    %cst_202 = arith.constant 5.000000e-01 : f32
    %428 = vector.broadcast %cst_202 : f32 to vector<16x128xf32>
    %429 = arith.mulf %428, %427 : vector<16x128xf32>
    %cst_203 = arith.constant 4.471500e-02 : f32
    %430 = vector.broadcast %cst_203 : f32 to vector<16x128xf32>
    %431 = arith.mulf %430, %427 : vector<16x128xf32>
    %432 = arith.mulf %431, %427 : vector<16x128xf32>
    %433 = arith.mulf %432, %427 : vector<16x128xf32>
    %434 = arith.addf %427, %433 : vector<16x128xf32>
    %cst_204 = arith.constant 0.797884583 : f32
    %435 = vector.broadcast %cst_204 : f32 to vector<16x128xf32>
    %436 = arith.mulf %435, %434 : vector<16x128xf32>
    %437 = math.tanh %436 : vector<16x128xf32>
    %cst_205 = arith.constant 1.000000e+00 : f32
    %438 = vector.broadcast %cst_205 : f32 to vector<16x128xf32>
    %439 = arith.addf %438, %437 : vector<16x128xf32>
    %440 = arith.mulf %429, %439 : vector<16x128xf32>
    %441 = arith.truncf %440 : vector<16x128xf32> to vector<16x128xbf16>
    %c1_206 = arith.constant 1 : index
    %c0_207 = arith.constant 0 : index
    %c0_208 = arith.constant 0 : index
    %442 = vector.load %arg19[%c1_206, %c0_207, %c0_208] : memref<2x128x32xbf16, #tpu.memory_space<vmem>>, vector<1x128x32xbf16>
    %443 = vector.shape_cast %442 : vector<1x128x32xbf16> to vector<128x32xbf16>
    %cst_209 = arith.constant dense<0.000000e+00> : vector<16x32xf32>
    %444 = tpu.matmul %441, %443, %cst_209 {dimension_numbers = #tpu.dot_dimension_numbers<[1], [0], [0], [1], [0, 0, 1, 1], [], []>} : vector<16x128xbf16>, vector<128x32xbf16>, vector<16x32xf32> -> vector<16x32xf32>
    %445 = arith.addf %393, %444 : vector<16x32xf32>
    %c1_210 = arith.constant 1 : index
    %c0_211 = arith.constant 0 : index
    %c0_212 = arith.constant 0 : index
    %446 = vector.load %arg20[%c1_210, %c0_211, %c0_212] : memref<2x1x32xf32, #tpu.memory_space<vmem>>, vector<1x1x32xf32>
    %447 = vector.shape_cast %446 : vector<1x1x32xf32> to vector<1x32xf32>
    %448 = vector.broadcast %447 : vector<1x32xf32> to vector<16x32xf32>
    %449 = arith.addf %445, %448 : vector<16x32xf32>
    %c0_213 = arith.constant 0 : index
    %c0_214 = arith.constant 0 : index
    %450 = vector.load %arg21[%c0_213, %c0_214] : memref<1x32xf32, #tpu.memory_space<vmem>>, vector<1x32xf32>
    %c0_215 = arith.constant 0 : index
    %c0_216 = arith.constant 0 : index
    %451 = vector.load %arg22[%c0_215, %c0_216] : memref<1x32xf32, #tpu.memory_space<vmem>>, vector<1x32xf32>
    %cst_217 = arith.constant dense<0.000000e+00> : vector<16xf32>
    %452 = vector.multi_reduction <add>, %449, %cst_217 [1] : vector<16x32xf32> to vector<16xf32>
    %453 = vector.shape_cast %452 : vector<16xf32> to vector<16x1xf32>
    %cst_218 = arith.constant 3.200000e+01 : f32
    %454 = vector.broadcast %cst_218 : f32 to vector<16x1xf32>
    %455 = arith.divf %453, %454 : vector<16x1xf32>
    %456 = vector.broadcast %455 : vector<16x1xf32> to vector<16x32xf32>
    %457 = arith.subf %449, %456 : vector<16x32xf32>
    %458 = arith.mulf %457, %457 : vector<16x32xf32>
    %cst_219 = arith.constant dense<0.000000e+00> : vector<16xf32>
    %459 = vector.multi_reduction <add>, %458, %cst_219 [1] : vector<16x32xf32> to vector<16xf32>
    %460 = vector.shape_cast %459 : vector<16xf32> to vector<16x1xf32>
    %cst_220 = arith.constant 3.200000e+01 : f32
    %461 = vector.broadcast %cst_220 : f32 to vector<16x1xf32>
    %462 = arith.divf %460, %461 : vector<16x1xf32>
    %463 = vector.broadcast %455 : vector<16x1xf32> to vector<16x32xf32>
    %464 = arith.subf %449, %463 : vector<16x32xf32>
    %cst_221 = arith.constant 9.99999974E-6 : f32
    %465 = vector.broadcast %cst_221 : f32 to vector<16x1xf32>
    %466 = arith.addf %462, %465 : vector<16x1xf32>
    %467 = math.rsqrt %466 : vector<16x1xf32>
    %468 = vector.broadcast %467 : vector<16x1xf32> to vector<16x32xf32>
    %469 = arith.mulf %464, %468 : vector<16x32xf32>
    %470 = vector.broadcast %450 : vector<1x32xf32> to vector<16x32xf32>
    %471 = arith.mulf %469, %470 : vector<16x32xf32>
    %472 = vector.broadcast %451 : vector<1x32xf32> to vector<16x32xf32>
    %473 = arith.addf %471, %472 : vector<16x32xf32>
    %474 = arith.truncf %473 : vector<16x32xf32> to vector<16x32xbf16>
    %c0_222 = arith.constant 0 : index
    %c0_223 = arith.constant 0 : index
    %475 = vector.load %arg4[%c0_222, %c0_223] : memref<64x32xbf16, #tpu.memory_space<vmem>>, vector<64x32xbf16>
    %cst_224 = arith.constant dense<0.000000e+00> : vector<16x64xf32>
    %476 = tpu.matmul %474, %475, %cst_224 {dimension_numbers = #tpu.dot_dimension_numbers<[1], [1], [0], [0], [0, 0, 1, 0], [], []>} : vector<16x32xbf16>, vector<64x32xbf16>, vector<16x64xf32> -> vector<16x64xf32>
    %c0_225 = arith.constant 0 : index
    %c0_226 = arith.constant 0 : index
    %c0_227 = arith.constant 0 : index
    %477 = vector.load %arg23[%c0_225, %c0_226, %c0_227] : memref<1x16x64xf32, #tpu.memory_space<vmem>>, vector<1x16x64xf32>
    %478 = vector.shape_cast %477 : vector<1x16x64xf32> to vector<16x64xf32>
    %479 = vector.shape_cast %476 : vector<16x64xf32> to vector<1x16x64xf32>
    tpu.vector_store %arg23[%c0_225, %c0_226, %c0_227], %479 {strides = array<i32>} : memref<1x16x64xf32, #tpu.memory_space<vmem>>, vector<1x16x64xf32>,
    return
  }
  func.func @transform_0(%arg0: i32) -> (i32, i32) {
    %c0_i32 = arith.constant 0 : i32
    %c0_i32_0 = arith.constant 0 : i32
    %c0_i32_1 = arith.constant 0 : i32
    return %c0_i32, %c0_i32_0 : i32, i32
  }
  func.func @transform_1(%arg0: i32) -> (i32, i32, i32) {
    %c0_i32 = arith.constant 0 : i32
    %c0_i32_0 = arith.constant 0 : i32
    %c0_i32_1 = arith.constant 0 : i32
    %c0_i32_2 = arith.constant 0 : i32
    return %c0_i32, %c0_i32_0, %c0_i32_1 : i32, i32, i32
  }
  func.func @transform_2(%arg0: i32) -> (i32, i32) {
    %c0_i32 = arith.constant 0 : i32
    %c0_i32_0 = arith.constant 0 : i32
    %c0_i32_1 = arith.constant 0 : i32
    return %c0_i32, %c0_i32_0 : i32, i32
  }
  func.func @transform_3(%arg0: i32) -> (i32, i32) {
    %c0_i32 = arith.constant 0 : i32
    %c0_i32_0 = arith.constant 0 : i32
    %c0_i32_1 = arith.constant 0 : i32
    return %c0_i32, %c0_i32_0 : i32, i32
  }
  func.func @transform_4(%arg0: i32) -> (i32, i32) {
    %c0_i32 = arith.constant 0 : i32
    %c0_i32_0 = arith.constant 0 : i32
    %c0_i32_1 = arith.constant 0 : i32
    return %c0_i32, %c0_i32_0 : i32, i32
  }
  func.func @transform_5(%arg0: i32) -> (i32, i32) {
    %c0_i32 = arith.constant 0 : i32
    %c0_i32_0 = arith.constant 0 : i32
    %c0_i32_1 = arith.constant 0 : i32
    return %c0_i32, %c0_i32_0 : i32, i32
  }
  func.func @transform_6(%arg0: i32) -> (i32, i32, i32) {
    %c0_i32 = arith.constant 0 : i32
    %c0_i32_0 = arith.constant 0 : i32
    %c0_i32_1 = arith.constant 0 : i32
    %c0_i32_2 = arith.constant 0 : i32
    return %c0_i32, %c0_i32_0, %c0_i32_1 : i32, i32, i32
  }
  func.func @transform_7(%arg0: i32) -> (i32, i32, i32) {
    %c0_i32 = arith.constant 0 : i32
    %c0_i32_0 = arith.constant 0 : i32
    %c0_i32_1 = arith.constant 0 : i32
    %c0_i32_2 = arith.constant 0 : i32
    return %c0_i32, %c0_i32_0, %c0_i32_1 : i32, i32, i32
  }
  func.func @transform_8(%arg0: i32) -> (i32, i32, i32) {
    %c0_i32 = arith.constant 0 : i32
    %c0_i32_0 = arith.constant 0 : i32
    %c0_i32_1 = arith.constant 0 : i32
    %c0_i32_2 = arith.constant 0 : i32
    return %c0_i32, %c0_i32_0, %c0_i32_1 : i32, i32, i32
  }
  func.func @transform_9(%arg0: i32) -> (i32, i32, i32) {
    %c0_i32 = arith.constant 0 : i32
    %c0_i32_0 = arith.constant 0 : i32
    %c0_i32_1 = arith.constant 0 : i32
    %c0_i32_2 = arith.constant 0 : i32
    return %c0_i32, %c0_i32_0, %c0_i32_1 : i32, i32, i32
  }
  func.func @transform_10(%arg0: i32) -> (i32, i32, i32) {
    %c0_i32 = arith.constant 0 : i32
    %c0_i32_0 = arith.constant 0 : i32
    %c0_i32_1 = arith.constant 0 : i32
    %c0_i32_2 = arith.constant 0 : i32
    return %c0_i32, %c0_i32_0, %c0_i32_1 : i32, i32, i32
  }
  func.func @transform_11(%arg0: i32) -> (i32, i32, i32) {
    %c0_i32 = arith.constant 0 : i32
    %c0_i32_0 = arith.constant 0 : i32
    %c0_i32_1 = arith.constant 0 : i32
    %c0_i32_2 = arith.constant 0 : i32
    return %c0_i32, %c0_i32_0, %c0_i32_1 : i32, i32, i32
  }
  func.func @transform_12(%arg0: i32) -> (i32, i32, i32) {
    %c0_i32 = arith.constant 0 : i32
    %c0_i32_0 = arith.constant 0 : i32
    %c0_i32_1 = arith.constant 0 : i32
    %c0_i32_2 = arith.constant 0 : i32
    return %c0_i32, %c0_i32_0, %c0_i32_1 : i32, i32, i32
  }
  func.func @transform_13(%arg0: i32) -> (i32, i32, i32) {
    %c0_i32 = arith.constant 0 : i32
    %c0_i32_0 = arith.constant 0 : i32
    %c0_i32_1 = arith.constant 0 : i32
    %c0_i32_2 = arith.constant 0 : i32
    return %c0_i32, %c0_i32_0, %c0_i32_1 : i32, i32, i32
  }
  func.func @transform_14(%arg0: i32) -> (i32, i32, i32) {
    %c0_i32 = arith.constant 0 : i32
    %c0_i32_0 = arith.constant 0 : i32
    %c0_i32_1 = arith.constant 0 : i32
    %c0_i32_2 = arith.constant 0 : i32
    return %c0_i32, %c0_i32_0, %c0_i32_1 : i32, i32, i32
  }
  func.func @transform_15(%arg0: i32) -> (i32, i32, i32) {
    %c0_i32 = arith.constant 0 : i32
    %c0_i32_0 = arith.constant 0 : i32
    %c0_i32_1 = arith.constant 0 : i32
    %c0_i32_2 = arith.constant 0 : i32
    return %c0_i32, %c0_i32_0, %c0_i32_1 : i32, i32, i32
  }
  func.func @transform_16(%arg0: i32) -> (i32, i32, i32) {
    %c0_i32 = arith.constant 0 : i32
    %c0_i32_0 = arith.constant 0 : i32
    %c0_i32_1 = arith.constant 0 : i32
    %c0_i32_2 = arith.constant 0 : i32
    return %c0_i32, %c0_i32_0, %c0_i32_1 : i32, i32, i32
  }
  func.func @transform_17(%arg0: i32) -> (i32, i32, i32) {
    %c0_i32 = arith.constant 0 : i32
    %c0_i32_0 = arith.constant 0 : i32
    %c0_i32_1 = arith.constant 0 : i32
    %c0_i32_2 = arith.constant 0 : i32
    return %c0_i32, %c0_i32_0, %c0_i32_1 : i32, i32, i32
  }
  func.func @transform_18(%arg0: i32) -> (i32, i32, i32) {
    %c0_i32 = arith.constant 0 : i32
    %c0_i32_0 = arith.constant 0 : i32
    %c0_i32_1 = arith.constant 0 : i32
    %c0_i32_2 = arith.constant 0 : i32
    return %c0_i32, %c0_i32_0, %c0_i32_1 : i32, i32, i32
  }
  func.func @transform_19(%arg0: i32) -> (i32, i32, i32) {
    %c0_i32 = arith.constant 0 : i32
    %c0_i32_0 = arith.constant 0 : i32
    %c0_i32_1 = arith.constant 0 : i32
    %c0_i32_2 = arith.constant 0 : i32
    return %c0_i32, %c0_i32_0, %c0_i32_1 : i32, i32, i32
  }
  func.func @transform_20(%arg0: i32) -> (i32, i32) {
    %c0_i32 = arith.constant 0 : i32
    %c0_i32_0 = arith.constant 0 : i32
    %c0_i32_1 = arith.constant 0 : i32
    return %c0_i32, %c0_i32_0 : i32, i32
  }
  func.func @transform_21(%arg0: i32) -> (i32, i32) {
    %c0_i32 = arith.constant 0 : i32
    %c0_i32_0 = arith.constant 0 : i32
    %c0_i32_1 = arith.constant 0 : i32
    return %c0_i32, %c0_i32_0 : i32, i32
  }
  func.func @transform_22(%arg0: i32) -> (i32, i32, i32) {
    %c0_i32 = arith.constant 0 : i32
    %c0_i32_0 = arith.constant 0 : i32
    %c0_i32_1 = arith.constant 0 : i32
    return %arg0, %c0_i32, %c0_i32_0 : i32, i32, i32
  }
}

</mosaic_0001>

<llo_original>
// kernel: clip_caption_forward.1
$region0: #{clip_caption_forward.1}
  #allocation0 [shape = 'u32[]', space=smem, size = 0x4, offset = 0x4, fixed_abs, tag = 'smem constant byte address 0x4 - core index']
  #allocation1 [shape = 'u32[144,128]{1,0:T(1,128)}', space=vmem, size = 0x12000, scoped, tag = 'internal scratch']
  %s0 = inlined_call_operand.vmem [shape: f32[2,16], index: 0, kind: input, shape index: {}]
  %s1 = inlined_call_operand.vmem [shape: f32[2,8,32], index: 1, kind: input, shape index: {}]
  %s2 = inlined_call_operand.vmem [shape: f32[16,32], index: 2, kind: input, shape index: {}]
  %s3 = inlined_call_operand.vmem [shape: bf16[64,32], index: 3, kind: input, shape index: {}]
  %s4 = inlined_call_operand.vmem [shape: bf16[16,128], index: 4, kind: input, shape index: {}]
  %s5 = inlined_call_operand.vmem [shape: f32[1,128], index: 5, kind: input, shape index: {}]
  %s6 = inlined_call_operand.vmem [shape: bf16[8,128,32], index: 6, kind: input, shape index: {}]
  %s7 = inlined_call_operand.vmem [shape: f32[8,1,32], index: 7, kind: input, shape index: {}]
  %s8 = inlined_call_operand.vmem [shape: f32[2,1,32], index: 8, kind: input, shape index: {}]
  %s9 = inlined_call_operand.vmem [shape: f32[2,1,32], index: 9, kind: input, shape index: {}]
  %s10 = inlined_call_operand.vmem [shape: bf16[2,32,96], index: 10, kind: input, shape index: {}]
  %s11 = inlined_call_operand.vmem [shape: f32[2,1,96], index: 11, kind: input, shape index: {}]
  %s12 = inlined_call_operand.vmem [shape: bf16[2,32,32], index: 12, kind: input, shape index: {}]
  %s13 = inlined_call_operand.vmem [shape: f32[2,1,32], index: 13, kind: input, shape index: {}]
  %s14 = inlined_call_operand.vmem [shape: f32[2,1,32], index: 14, kind: input, shape index: {}]
  %s15 = inlined_call_operand.vmem [shape: f32[2,1,32], index: 15, kind: input, shape index: {}]
  %s16 = inlined_call_operand.vmem [shape: bf16[2,32,128], index: 16, kind: input, shape index: {}]
  %s17 = inlined_call_operand.vmem [shape: f32[2,1,128], index: 17, kind: input, shape index: {}]
  %s18 = inlined_call_operand.vmem [shape: bf16[2,128,32], index: 18, kind: input, shape index: {}]
  %s19 = inlined_call_operand.vmem [shape: f32[2,1,32], index: 19, kind: input, shape index: {}]
  %s20 = inlined_call_operand.vmem [shape: f32[1,32], index: 20, kind: input, shape index: {}]
  %s21 = inlined_call_operand.vmem [shape: f32[1,32], index: 21, kind: input, shape index: {}]
  %s22 = inlined_call_operand.vmem [shape: f32[2,16,64], index: 22, kind: output, shape index: {}]
  %s23 = sld [smem:[#allocation0]]
  $region121: #{clip_caption_forward.1} parent=0
    _
  %s25 = ssub.s32 1, %s23
  %s26 = scalar_select 0, %s25, %s23
  loop: start=0, step=1, limit=4
  $region2: #{clip_caption_forward.1} parent=0 // loop_pre_header
    _
  $region3: #{clip_caption_forward.1} parent=0 // loop_header
    %s28 = sphi 0, %s32
    %p29 = scmp.ge.s32.totalorder %s28, 4
    %s36 = sphi 0, %s36
    %s38 = sphi 0, %s36
    %s39 = sphi 0, %s38
    %s53 = sphi 0, %s39
    %s57 = sphi 0, %s57
    %s59 = sphi 0, %s57
    %s60 = sphi 0, %s59
    %s74 = sphi 0, %s60
    %s78 = sphi 0, %s78
    %s80 = sphi 0, %s78
    %s81 = sphi 0, %s80
    %s95 = sphi 0, %s81
    %s99 = sphi 0, %s99
    %s101 = sphi 0, %s99
    %s102 = sphi 0, %s101
    %s116 = sphi 0, %s102
    %s120 = sphi 0, %s120
    %s122 = sphi 0, %s120
    %s123 = sphi 0, %s122
    %s137 = sphi 0, %s123
    %s141 = sphi 0, %s141
    %s143 = sphi 0, %s141
    %s144 = sphi 0, %s143
    %s158 = sphi 0, %s144
    %s162 = sphi 0, %s162
    %s164 = sphi 0, %s162
    %s165 = sphi 0, %s164
    %s179 = sphi 0, %s165
    %s183 = sphi 0, %s183
    %s185 = sphi 0, %s183
    %s186 = sphi 0, %s185
    %s200 = sphi 0, %s186
    %s204 = sphi 0, %s204
    %s206 = sphi 0, %s204
    %s207 = sphi 0, %s206
    %s221 = sphi 0, %s207
    %s225 = sphi 0, %s225
    %s227 = sphi 0, %s225
    %s228 = sphi 0, %s227
    %s242 = sphi 0, %s228
    %s246 = sphi 0, %s246
    %s248 = sphi 0, %s246
    %s249 = sphi 0, %s248
    %s263 = sphi 0, %s249
    %s267 = sphi 0, %s267
    %s269 = sphi 0, %s267
    %s270 = sphi 0, %s269
    %s284 = sphi 0, %s270
    %s288 = sphi 0, %s288
    %s290 = sphi 0, %s288
    %s291 = sphi 0, %s290
    %s305 = sphi 0, %s291
    %s309 = sphi 0, %s309
    %s311 = sphi 0, %s309
    %s312 = sphi 0, %s311
    %s326 = sphi 0, %s312
    %s330 = sphi 0, %s330
    %s332 = sphi 0, %s330
    %s333 = sphi 0, %s332
    %s347 = sphi 0, %s333
    %s351 = sphi 0, %s351
    %s353 = sphi 0, %s351
    %s354 = sphi 0, %s353
    %s368 = sphi 0, %s354
    %s372 = sphi 0, %s372
    %s374 = sphi 0, %s372
    %s375 = sphi 0, %s374
    %s389 = sphi 0, %s375
    %s393 = sphi 0, %s393
    %s395 = sphi 0, %s393
    %s396 = sphi 0, %s395
    %s410 = sphi 0, %s396
    %s414 = sphi 0, %s414
    %s416 = sphi 0, %s414
    %s417 = sphi 0, %s416
    %s431 = sphi 0, %s417
    %s435 = sphi 0, %s435
    %s437 = sphi 0, %s435
    %s438 = sphi 0, %s437
    %s452 = sphi 0, %s438
    %s456 = sphi 0, %s456
    %s458 = sphi 0, %s456
    %s459 = sphi 0, %s458
    %s473 = sphi 0, %s459
    %s477 = sphi 0, %s477
    %s479 = sphi 0, %s477
    %s480 = sphi 0, %s479
    %s494 = sphi 0, %s480
    %s500 = sphi 0, %s502
    %s503 = sphi 0, %s500
    %s504 = sphi 0, %s503
    %s520 = sphi 0, %s504
  $region4: #{clip_caption_forward.1} parent=0 // loop_header_branch
    %31 = sbr.rel (%p29) target = $region8
  $region5: #{clip_caption_forward.1} parent=0 // loop_body
    %s33 = ssub.s32 %s28, 1
    %s34 = ssub.s32 %s28, 2
    %s35 = sadd.s32 %s28, 1
    %s37 = sadd.s32 %s36, 1
    %p40 = scmp.eq.s32.totalorder %s28, 1
    %p41 = scmp.ne.s32.totalorder %s36, %s38
    %p42 = scmp.eq.s32.totalorder %s28, 0
    %p43 = por %p41, %p42
    %p44 = scmp.ne.s32.totalorder %s36, %s38
    %p45 = scmp.eq.s32.totalorder %s33, 1
    %p46 = por %p44, %p45
    %p47 = scmp.ne.s32.totalorder %s38, %s39
    %p48 = scmp.eq.s32.totalorder %s33, 0
    %p49 = por %p47, %p48
    %p50 = scmp.ne.s32.totalorder %s38, %s39
    %p51 = scmp.eq.s32.totalorder %s34, 1
    %p52 = por %p50, %p51
    %p54 = scmp.ne.s32.totalorder %s39, %s53
    %p55 = scmp.eq.s32.totalorder %s34, 0
    %p56 = por %p54, %p55
    %s58 = sadd.s32 %s57, 1
    %p61 = scmp.eq.s32.totalorder %s28, 1
    %p62 = scmp.ne.s32.totalorder %s57, %s59
    %p63 = scmp.eq.s32.totalorder %s28, 0
    %p64 = por %p62, %p63
    %p65 = scmp.ne.s32.totalorder %s57, %s59
    %p66 = scmp.eq.s32.totalorder %s33, 1
    %p67 = por %p65, %p66
    %p68 = scmp.ne.s32.totalorder %s59, %s60
    %p69 = scmp.eq.s32.totalorder %s33, 0
    %p70 = por %p68, %p69
    %p71 = scmp.ne.s32.totalorder %s59, %s60
    %p72 = scmp.eq.s32.totalorder %s34, 1
    %p73 = por %p71, %p72
    %p75 = scmp.ne.s32.totalorder %s60, %s74
    %p76 = scmp.eq.s32.totalorder %s34, 0
    %p77 = por %p75, %p76
    %s79 = sadd.s32 %s78, 1
    %p82 = scmp.eq.s32.totalorder %s28, 1
    %p83 = scmp.ne.s32.totalorder %s78, %s80
    %p84 = scmp.eq.s32.totalorder %s28, 0
    %p85 = por %p83, %p84
    %p86 = scmp.ne.s32.totalorder %s78, %s80
    %p87 = scmp.eq.s32.totalorder %s33, 1
    %p88 = por %p86, %p87
    %p89 = scmp.ne.s32.totalorder %s80, %s81
    %p90 = scmp.eq.s32.totalorder %s33, 0
    %p91 = por %p89, %p90
    %p92 = scmp.ne.s32.totalorder %s80, %s81
    %p93 = scmp.eq.s32.totalorder %s34, 1
    %p94 = por %p92, %p93
    %p96 = scmp.ne.s32.totalorder %s81, %s95
    %p97 = scmp.eq.s32.totalorder %s34, 0
    %p98 = por %p96, %p97
    %s100 = sadd.s32 %s99, 1
    %p103 = scmp.eq.s32.totalorder %s28, 1
    %p104 = scmp.ne.s32.totalorder %s99, %s101
    %p105 = scmp.eq.s32.totalorder %s28, 0
    %p106 = por %p104, %p105
    %p107 = scmp.ne.s32.totalorder %s99, %s101
    %p108 = scmp.eq.s32.totalorder %s33, 1
    %p109 = por %p107, %p108
    %p110 = scmp.ne.s32.totalorder %s101, %s102
    %p111 = scmp.eq.s32.totalorder %s33, 0
    %p112 = por %p110, %p111
    %p113 = scmp.ne.s32.totalorder %s101, %s102
    %p114 = scmp.eq.s32.totalorder %s34, 1
    %p115 = por %p113, %p114
    %p117 = scmp.ne.s32.totalorder %s102, %s116
    %p118 = scmp.eq.s32.totalorder %s34, 0
    %p119 = por %p117, %p118
    %s121 = sadd.s32 %s120, 1
    %p124 = scmp.eq.s32.totalorder %s28, 1
    %p125 = scmp.ne.s32.totalorder %s120, %s122
    %p126 = scmp.eq.s32.totalorder %s28, 0
    %p127 = por %p125, %p126
    %p128 = scmp.ne.s32.totalorder %s120, %s122
    %p129 = scmp.eq.s32.totalorder %s33, 1
    %p130 = por %p128, %p129
    %p131 = scmp.ne.s32.totalorder %s122, %s123
    %p132 = scmp.eq.s32.totalorder %s33, 0
    %p133 = por %p131, %p132
    %p134 = scmp.ne.s32.totalorder %s122, %s123
    %p135 = scmp.eq.s32.totalorder %s34, 1
    %p136 = por %p134, %p135
    %p138 = scmp.ne.s32.totalorder %s123, %s137
    %p139 = scmp.eq.s32.totalorder %s34, 0
    %p140 = por %p138, %p139
    %s142 = sadd.s32 %s141, 1
    %p145 = scmp.eq.s32.totalorder %s28, 1
    %p146 = scmp.ne.s32.totalorder %s141, %s143
    %p147 = scmp.eq.s32.totalorder %s28, 0
    %p148 = por %p146, %p147
    %p149 = scmp.ne.s32.totalorder %s141, %s143
    %p150 = scmp.eq.s32.totalorder %s33, 1
    %p151 = por %p149, %p150
    %p152 = scmp.ne.s32.totalorder %s143, %s144
    %p153 = scmp.eq.s32.totalorder %s33, 0
    %p154 = por %p152, %p153
    %p155 = scmp.ne.s32.totalorder %s143, %s144
    %p156 = scmp.eq.s32.totalorder %s34, 1
    %p157 = por %p155, %p156
    %p159 = scmp.ne.s32.totalorder %s144, %s158
    %p160 = scmp.eq.s32.totalorder %s34, 0
    %p161 = por %p159, %p160
    %s163 = sadd.s32 %s162, 1
    %p166 = scmp.eq.s32.totalorder %s28, 1
    %p167 = scmp.ne.s32.totalorder %s162, %s164
    %p168 = scmp.eq.s32.totalorder %s28, 0
    %p169 = por %p167, %p168
    %p170 = scmp.ne.s32.totalorder %s162, %s164
    %p171 = scmp.eq.s32.totalorder %s33, 1
    %p172 = por %p170, %p171
    %p173 = scmp.ne.s32.totalorder %s164, %s165
    %p174 = scmp.eq.s32.totalorder %s33, 0
    %p175 = por %p173, %p174
    %p176 = scmp.ne.s32.totalorder %s164, %s165
    %p177 = scmp.eq.s32.totalorder %s34, 1
    %p178 = por %p176, %p177
    %p180 = scmp.ne.s32.totalorder %s165, %s179
    %p181 = scmp.eq.s32.totalorder %s34, 0
    %p182 = por %p180, %p181
    %s184 = sadd.s32 %s183, 1
    %p187 = scmp.eq.s32.totalorder %s28, 1
    %p188 = scmp.ne.s32.totalorder %s183, %s185
    %p189 = scmp.eq.s32.totalorder %s28, 0
    %p190 = por %p188, %p189
    %p191 = scmp.ne.s32.totalorder %s183, %s185
    %p192 = scmp.eq.s32.totalorder %s33, 1
    %p193 = por %p191, %p192
    %p194 = scmp.ne.s32.totalorder %s185, %s186
    %p195 = scmp.eq.s32.totalorder %s33, 0
    %p196 = por %p194, %p195
    %p197 = scmp.ne.s32.totalorder %s185, %s186
    %p198 = scmp.eq.s32.totalorder %s34, 1
    %p199 = por %p197, %p198
    %p201 = scmp.ne.s32.totalorder %s186, %s200
    %p202 = scmp.eq.s32.totalorder %s34, 0
    %p203 = por %p201, %p202
    %s205 = sadd.s32 %s204, 1
    %p208 = scmp.eq.s32.totalorder %s28, 1
    %p209 = scmp.ne.s32.totalorder %s204, %s206
    %p210 = scmp.eq.s32.totalorder %s28, 0
    %p211 = por %p209, %p210
    %p212 = scmp.ne.s32.totalorder %s204, %s206
    %p213 = scmp.eq.s32.totalorder %s33, 1
    %p214 = por %p212, %p213
    %p215 = scmp.ne.s32.totalorder %s206, %s207
    %p216 = scmp.eq.s32.totalorder %s33, 0
    %p217 = por %p215, %p216
    %p218 = scmp.ne.s32.totalorder %s206, %s207
    %p219 = scmp.eq.s32.totalorder %s34, 1
    %p220 = por %p218, %p219
    %p222 = scmp.ne.s32.totalorder %s207, %s221
    %p223 = scmp.eq.s32.totalorder %s34, 0
    %p224 = por %p222, %p223
    %s226 = sadd.s32 %s225, 1
    %p229 = scmp.eq.s32.totalorder %s28, 1
    %p230 = scmp.ne.s32.totalorder %s225, %s227
    %p231 = scmp.eq.s32.totalorder %s28, 0
    %p232 = por %p230, %p231
    %p233 = scmp.ne.s32.totalorder %s225, %s227
    %p234 = scmp.eq.s32.totalorder %s33, 1
    %p235 = por %p233, %p234
    %p236 = scmp.ne.s32.totalorder %s227, %s228
    %p237 = scmp.eq.s32.totalorder %s33, 0
    %p238 = por %p236, %p237
    %p239 = scmp.ne.s32.totalorder %s227, %s228
    %p240 = scmp.eq.s32.totalorder %s34, 1
    %p241 = por %p239, %p240
    %p243 = scmp.ne.s32.totalorder %s228, %s242
    %p244 = scmp.eq.s32.totalorder %s34, 0
    %p245 = por %p243, %p244
    %s247 = sadd.s32 %s246, 1
    %p250 = scmp.eq.s32.totalorder %s28, 1
    %p251 = scmp.ne.s32.totalorder %s246, %s248
    %p252 = scmp.eq.s32.totalorder %s28, 0
    %p253 = por %p251, %p252
    %p254 = scmp.ne.s32.totalorder %s246, %s248
    %p255 = scmp.eq.s32.totalorder %s33, 1
    %p256 = por %p254, %p255
    %p257 = scmp.ne.s32.totalorder %s248, %s249
    %p258 = scmp.eq.s32.totalorder %s33, 0
    %p259 = por %p257, %p258
    %p260 = scmp.ne.s32.totalorder %s248, %s249
    %p261 = scmp.eq.s32.totalorder %s34, 1
    %p262 = por %p260, %p261
    %p264 = scmp.ne.s32.totalorder %s249, %s263
    %p265 = scmp.eq.s32.totalorder %s34, 0
    %p266 = por %p264, %p265
    %s268 = sadd.s32 %s267, 1
    %p271 = scmp.eq.s32.totalorder %s28, 1
    %p272 = scmp.ne.s32.totalorder %s267, %s269
    %p273 = scmp.eq.s32.totalorder %s28, 0
    %p274 = por %p272, %p273
    %p275 = scmp.ne.s32.totalorder %s267, %s269
    %p276 = scmp.eq.s32.totalorder %s33, 1
    %p277 = por %p275, %p276
    %p278 = scmp.ne.s32.totalorder %s269, %s270
    %p279 = scmp.eq.s32.totalorder %s33, 0
    %p280 = por %p278, %p279
    %p281 = scmp.ne.s32.totalorder %s269, %s270
    %p282 = scmp.eq.s32.totalorder %s34, 1
    %p283 = por %p281, %p282
    %p285 = scmp.ne.s32.totalorder %s270, %s284
    %p286 = scmp.eq.s32.totalorder %s34, 0
    %p287 = por %p285, %p286
    %s289 = sadd.s32 %s288, 1
    %p292 = scmp.eq.s32.totalorder %s28, 1
    %p293 = scmp.ne.s32.totalorder %s288, %s290
    %p294 = scmp.eq.s32.totalorder %s28, 0
    %p295 = por %p293, %p294
    %p296 = scmp.ne.s32.totalorder %s288, %s290
    %p297 = scmp.eq.s32.totalorder %s33, 1
    %p298 = por %p296, %p297
    %p299 = scmp.ne.s32.totalorder %s290, %s291
    %p300 = scmp.eq.s32.totalorder %s33, 0
    %p301 = por %p299, %p300
    %p302 = scmp.ne.s32.totalorder %s290, %s291
    %p303 = scmp.eq.s32.totalorder %s34, 1
    %p304 = por %p302, %p303
    %p306 = scmp.ne.s32.totalorder %s291, %s305
    %p307 = scmp.eq.s32.totalorder %s34, 0
    %p308 = por %p306, %p307
    %s310 = sadd.s32 %s309, 1
    %p313 = scmp.eq.s32.totalorder %s28, 1
    %p314 = scmp.ne.s32.totalorder %s309, %s311
    %p315 = scmp.eq.s32.totalorder %s28, 0
    %p316 = por %p314, %p315
    %p317 = scmp.ne.s32.totalorder %s309, %s311
    %p318 = scmp.eq.s32.totalorder %s33, 1
    %p319 = por %p317, %p318
    %p320 = scmp.ne.s32.totalorder %s311, %s312
    %p321 = scmp.eq.s32.totalorder %s33, 0
    %p322 = por %p320, %p321
    %p323 = scmp.ne.s32.totalorder %s311, %s312
    %p324 = scmp.eq.s32.totalorder %s34, 1
    %p325 = por %p323, %p324
    %p327 = scmp.ne.s32.totalorder %s312, %s326
    %p328 = scmp.eq.s32.totalorder %s34, 0
    %p329 = por %p327, %p328
    %s331 = sadd.s32 %s330, 1
    %p334 = scmp.eq.s32.totalorder %s28, 1
    %p335 = scmp.ne.s32.totalorder %s330, %s332
    %p336 = scmp.eq.s32.totalorder %s28, 0
    %p337 = por %p335, %p336
    %p338 = scmp.ne.s32.totalorder %s330, %s332
    %p339 = scmp.eq.s32.totalorder %s33, 1
    %p340 = por %p338, %p339
    %p341 = scmp.ne.s32.totalorder %s332, %s333
    %p342 = scmp.eq.s32.totalorder %s33, 0
    %p343 = por %p341, %p342
    %p344 = scmp.ne.s32.totalorder %s332, %s333
    %p345 = scmp.eq.s32.totalorder %s34, 1
    %p346 = por %p344, %p345
    %p348 = scmp.ne.s32.totalorder %s333, %s347
    %p349 = scmp.eq.s32.totalorder %s34, 0
    %p350 = por %p348, %p349
    %s352 = sadd.s32 %s351, 1
    %p355 = scmp.eq.s32.totalorder %s28, 1
    %p356 = scmp.ne.s32.totalorder %s351, %s353
    %p357 = scmp.eq.s32.totalorder %s28, 0
    %p358 = por %p356, %p357
    %p359 = scmp.ne.s32.totalorder %s351, %s353
    %p360 = scmp.eq.s32.totalorder %s33, 1
    %p361 = por %p359, %p360
    %p362 = scmp.ne.s32.totalorder %s353, %s354
    %p363 = scmp.eq.s32.totalorder %s33, 0
    %p364 = por %p362, %p363
    %p365 = scmp.ne.s32.totalorder %s353, %s354
    %p366 = scmp.eq.s32.totalorder %s34, 1
    %p367 = por %p365, %p366
    %p369 = scmp.ne.s32.totalorder %s354, %s368
    %p370 = scmp.eq.s32.totalorder %s34, 0
    %p371 = por %p369, %p370
    %s373 = sadd.s32 %s372, 1
    %p376 = scmp.eq.s32.totalorder %s28, 1
    %p377 = scmp.ne.s32.totalorder %s372, %s374
    %p378 = scmp.eq.s32.totalorder %s28, 0
    %p379 = por %p377, %p378
    %p380 = scmp.ne.s32.totalorder %s372, %s374
    %p381 = scmp.eq.s32.totalorder %s33, 1
    %p382 = por %p380, %p381
    %p383 = scmp.ne.s32.totalorder %s374, %s375
    %p384 = scmp.eq.s32.totalorder %s33, 0
    %p385 = por %p383, %p384
    %p386 = scmp.ne.s32.totalorder %s374, %s375
    %p387 = scmp.eq.s32.totalorder %s34, 1
    %p388 = por %p386, %p387
    %p390 = scmp.ne.s32.totalorder %s375, %s389
    %p391 = scmp.eq.s32.totalorder %s34, 0
    %p392 = por %p390, %p391
    %s394 = sadd.s32 %s393, 1
    %p397 = scmp.eq.s32.totalorder %s28, 1
    %p398 = scmp.ne.s32.totalorder %s393, %s395
    %p399 = scmp.eq.s32.totalorder %s28, 0
    %p400 = por %p398, %p399
    %p401 = scmp.ne.s32.totalorder %s393, %s395
    %p402 = scmp.eq.s32.totalorder %s33, 1
    %p403 = por %p401, %p402
    %p404 = scmp.ne.s32.totalorder %s395, %s396
    %p405 = scmp.eq.s32.totalorder %s33, 0
    %p406 = por %p404, %p405
    %p407 = scmp.ne.s32.totalorder %s395, %s396
    %p408 = scmp.eq.s32.totalorder %s34, 1
    %p409 = por %p407, %p408
    %p411 = scmp.ne.s32.totalorder %s396, %s410
    %p412 = scmp.eq.s32.totalorder %s34, 0
    %p413 = por %p411, %p412
    %s415 = sadd.s32 %s414, 1
    %p418 = scmp.eq.s32.totalorder %s28, 1
    %p419 = scmp.ne.s32.totalorder %s414, %s416
    %p420 = scmp.eq.s32.totalorder %s28, 0
    %p421 = por %p419, %p420
    %p422 = scmp.ne.s32.totalorder %s414, %s416
    %p423 = scmp.eq.s32.totalorder %s33, 1
    %p424 = por %p422, %p423
    %p425 = scmp.ne.s32.totalorder %s416, %s417
    %p426 = scmp.eq.s32.totalorder %s33, 0
    %p427 = por %p425, %p426
    %p428 = scmp.ne.s32.totalorder %s416, %s417
    %p429 = scmp.eq.s32.totalorder %s34, 1
    %p430 = por %p428, %p429
    %p432 = scmp.ne.s32.totalorder %s417, %s431
    %p433 = scmp.eq.s32.totalorder %s34, 0
    %p434 = por %p432, %p433
    %s436 = sadd.s32 %s435, 1
    %p439 = scmp.eq.s32.totalorder %s28, 1
    %p440 = scmp.ne.s32.totalorder %s435, %s437
    %p441 = scmp.eq.s32.totalorder %s28, 0
    %p442 = por %p440, %p441
    %p443 = scmp.ne.s32.totalorder %s435, %s437
    %p444 = scmp.eq.s32.totalorder %s33, 1
    %p445 = por %p443, %p444
    %p446 = scmp.ne.s32.totalorder %s437, %s438
    %p447 = scmp.eq.s32.totalorder %s33, 0
    %p448 = por %p446, %p447
    %p449 = scmp.ne.s32.totalorder %s437, %s438
    %p450 = scmp.eq.s32.totalorder %s34, 1
    %p451 = por %p449, %p450
    %p453 = scmp.ne.s32.totalorder %s438, %s452
    %p454 = scmp.eq.s32.totalorder %s34, 0
    %p455 = por %p453, %p454
    %s457 = sadd.s32 %s456, 1
    %p460 = scmp.eq.s32.totalorder %s28, 1
    %p461 = scmp.ne.s32.totalorder %s456, %s458
    %p462 = scmp.eq.s32.totalorder %s28, 0
    %p463 = por %p461, %p462
    %p464 = scmp.ne.s32.totalorder %s456, %s458
    %p465 = scmp.eq.s32.totalorder %s33, 1
    %p466 = por %p464, %p465
    %p467 = scmp.ne.s32.totalorder %s458, %s459
    %p468 = scmp.eq.s32.totalorder %s33, 0
    %p469 = por %p467, %p468
    %p470 = scmp.ne.s32.totalorder %s458, %s459
    %p471 = scmp.eq.s32.totalorder %s34, 1
    %p472 = por %p470, %p471
    %p474 = scmp.ne.s32.totalorder %s459, %s473
    %p475 = scmp.eq.s32.totalorder %s34, 0
    %p476 = por %p474, %p475
    %s478 = sadd.s32 %s477, 1
    %p481 = scmp.eq.s32.totalorder %s28, 1
    %p482 = scmp.ne.s32.totalorder %s477, %s479
    %p483 = scmp.eq.s32.totalorder %s28, 0
    %p484 = por %p482, %p483
    %p485 = scmp.ne.s32.totalorder %s477, %s479
    %p486 = scmp.eq.s32.totalorder %s33, 1
    %p487 = por %p485, %p486
    %p488 = scmp.ne.s32.totalorder %s479, %s480
    %p489 = scmp.eq.s32.totalorder %s33, 0
    %p490 = por %p488, %p489
    %p491 = scmp.ne.s32.totalorder %s479, %s480
    %p492 = scmp.eq.s32.totalorder %s34, 1
    %p493 = por %p491, %p492
    %p495 = scmp.ne.s32.totalorder %s480, %s494
    %p496 = scmp.eq.s32.totalorder %s34, 0
    %p497 = por %p495, %p496
    %s498 = ssub.s32 %s28, %s35
    %p499 = scmp.eq.s32.totalorder %s498, 0
    %s501 = sadd.s32 %s500, 1
    %s502 = scalar_select %p499, %s500, %s501
    %p505 = pneg %p499
    %p506 = scmp.eq.s32.totalorder %s28, 1
    %p507 = por %p505, %p506
    %p508 = scmp.ne.s32.totalorder %s500, %s503
    %p509 = scmp.eq.s32.totalorder %s28, 0
    %p510 = por %p508, %p509
    %p511 = scmp.ne.s32.totalorder %s500, %s503
    %p512 = scmp.eq.s32.totalorder %s33, 1
    %p513 = por %p511, %p512
    %p514 = scmp.ne.s32.totalorder %s503, %s504
    %p515 = scmp.eq.s32.totalorder %s33, 0
    %p516 = por %p514, %p515
    %p517 = scmp.ne.s32.totalorder %s503, %s504
    %p518 = scmp.eq.s32.totalorder %s34, 1
    %p519 = por %p517, %p518
    %p521 = scmp.ne.s32.totalorder %s504, %s520
    %p522 = scmp.eq.s32.totalorder %s34, 0
    %p523 = por %p521, %p522
    %p524 = scmp.le.s32.totalorder 1, %s28
    %p525 = scmp.lt.s32.totalorder %s28, 3
    %p526 = pnand %p524, %p525
    %p527 = pneg %p526
    // Predicated region
    $region9: #{clip_caption_forward.1} parent=5 // pred_check
      _
    $region10: #{clip_caption_forward.1} parent=5 // pred_check_branch
      %529 = sbr.rel (%p526) target = $region12
    $region11: #{clip_caption_forward.1} parent=5 // pred_region
      %s530 = ssub.s32 %s28, 1
      // Predicated region
      $region13: #{clip_caption_forward.1} parent=11 // pred_check
        %p531 = pneg %p49
      $region14: #{clip_caption_forward.1} parent=11 // pred_check_branch
        %533 = sbr.rel (%p531) target = $region16
      $region15: #{clip_caption_forward.1} parent=11 // pred_region
        _
      $region16: #{clip_caption_forward.1} parent=11 // pred_fallthru
        _
      // Predicated region
      $region17: #{clip_caption_forward.1} parent=11 // pred_check
        %p534 = pneg %p70
      $region18: #{clip_caption_forward.1} parent=11 // pred_check_branch
        %536 = sbr.rel (%p534) target = $region20
      $region19: #{clip_caption_forward.1} parent=11 // pred_region
        _
      $region20: #{clip_caption_forward.1} parent=11 // pred_fallthru
        _
      // Predicated region
      $region21: #{clip_caption_forward.1} parent=11 // pred_check
        %p537 = pneg %p91
      $region22: #{clip_caption_forward.1} parent=11 // pred_check_branch
        %539 = sbr.rel (%p537) target = $region24
      $region23: #{clip_caption_forward.1} parent=11 // pred_region
        _
      $region24: #{clip_caption_forward.1} parent=11 // pred_fallthru
        _
      // Predicated region
      $region25: #{clip_caption_forward.1} parent=11 // pred_check
        %p540 = pneg %p112
      $region26: #{clip_caption_forward.1} parent=11 // pred_check_branch
        %542 = sbr.rel (%p540) target = $region28
      $region27: #{clip_caption_forward.1} parent=11 // pred_region
        _
      $region28: #{clip_caption_forward.1} parent=11 // pred_fallthru
        _
      // Predicated region
      $region29: #{clip_caption_forward.1} parent=11 // pred_check
        %p543 = pneg %p133
      $region30: #{clip_caption_forward.1} parent=11 // pred_check_branch
        %545 = sbr.rel (%p543) target = $region32
      $region31: #{clip_caption_forward.1} parent=11 // pred_region
        _
      $region32: #{clip_caption_forward.1} parent=11 // pred_fallthru
        _
      // Predicated region
      $region33: #{clip_caption_forward.1} parent=11 // pred_check
        %p546 = pneg %p154
      $region34: #{clip_caption_forward.1} parent=11 // pred_check_branch
        %548 = sbr.rel (%p546) target = $region36
      $region35: #{clip_caption_forward.1} parent=11 // pred_region
        _
      $region36: #{clip_caption_forward.1} parent=11 // pred_fallthru
        _
      // Predicated region
      $region37: #{clip_caption_forward.1} parent=11 // pred_check
        %p549 = pneg %p175
      $region38: #{clip_caption_forward.1} parent=11 // pred_check_branch
        %551 = sbr.rel (%p549) target = $region40
      $region39: #{clip_caption_forward.1} parent=11 // pred_region
        _
      $region40: #{clip_caption_forward.1} parent=11 // pred_fallthru
        _
      // Predicated region
      $region41: #{clip_caption_forward.1} parent=11 // pred_check
        %p552 = pneg %p196
      $region42: #{clip_caption_forward.1} parent=11 // pred_check_branch
        %554 = sbr.rel (%p552) target = $region44
      $region43: #{clip_caption_forward.1} parent=11 // pred_region
        _
      $region44: #{clip_caption_forward.1} parent=11 // pred_fallthru
        _
      // Predicated region
      $region45: #{clip_caption_forward.1} parent=11 // pred_check
        %p555 = pneg %p217
      $region46: #{clip_caption_forward.1} parent=11 // pred_check_branch
        %557 = sbr.rel (%p555) target = $region48
      $region47: #{clip_caption_forward.1} parent=11 // pred_region
        _
      $region48: #{clip_caption_forward.1} parent=11 // pred_fallthru
        _
      // Predicated region
      $region49: #{clip_caption_forward.1} parent=11 // pred_check
        %p558 = pneg %p238
      $region50: #{clip_caption_forward.1} parent=11 // pred_check_branch
        %560 = sbr.rel (%p558) target = $region52
      $region51: #{clip_caption_forward.1} parent=11 // pred_region
        _
      $region52: #{clip_caption_forward.1} parent=11 // pred_fallthru
        _
      // Predicated region
      $region53: #{clip_caption_forward.1} parent=11 // pred_check
        %p561 = pneg %p259
      $region54: #{clip_caption_forward.1} parent=11 // pred_check_branch
        %563 = sbr.rel (%p561) target = $region56
      $region55: #{clip_caption_forward.1} parent=11 // pred_region
        _
      $region56: #{clip_caption_forward.1} parent=11 // pred_fallthru
        _
      // Predicated region
      $region57: #{clip_caption_forward.1} parent=11 // pred_check
        %p564 = pneg %p280
      $region58: #{clip_caption_forward.1} parent=11 // pred_check_branch
        %566 = sbr.rel (%p564) target = $region60
      $region59: #{clip_caption_forward.1} parent=11 // pred_region
        _
      $region60: #{clip_caption_forward.1} parent=11 // pred_fallthru
        _
      // Predicated region
      $region61: #{clip_caption_forward.1} parent=11 // pred_check
        %p567 = pneg %p301
      $region62: #{clip_caption_forward.1} parent=11 // pred_check_branch
        %569 = sbr.rel (%p567) target = $region64
      $region63: #{clip_caption_forward.1} parent=11 // pred_region
        _
      $region64: #{clip_caption_forward.1} parent=11 // pred_fallthru
        _
      // Predicated region
      $region65: #{clip_caption_forward.1} parent=11 // pred_check
        %p570 = pneg %p322
      $region66: #{clip_caption_forward.1} parent=11 // pred_check_branch
        %572 = sbr.rel (%p570) target = $region68
      $region67: #{clip_caption_forward.1} parent=11 // pred_region
        _
      $region68: #{clip_caption_forward.1} parent=11 // pred_fallthru
        _
      // Predicated region
      $region69: #{clip_caption_forward.1} parent=11 // pred_check
        %p573 = pneg %p343
      $region70: #{clip_caption_forward.1} parent=11 // pred_check_branch
        %575 = sbr.rel (%p573) target = $region72
      $region71: #{clip_caption_forward.1} parent=11 // pred_region
        _
      $region72: #{clip_caption_forward.1} parent=11 // pred_fallthru
        _
      // Predicated region
      $region73: #{clip_caption_forward.1} parent=11 // pred_check
        %p576 = pneg %p364
      $region74: #{clip_caption_forward.1} parent=11 // pred_check_branch
        %578 = sbr.rel (%p576) target = $region76
      $region75: #{clip_caption_forward.1} parent=11 // pred_region
        _
      $region76: #{clip_caption_forward.1} parent=11 // pred_fallthru
        _
      // Predicated region
      $region77: #{clip_caption_forward.1} parent=11 // pred_check
        %p579 = pneg %p385
      $region78: #{clip_caption_forward.1} parent=11 // pred_check_branch
        %581 = sbr.rel (%p579) target = $region80
      $region79: #{clip_caption_forward.1} parent=11 // pred_region
        _
      $region80: #{clip_caption_forward.1} parent=11 // pred_fallthru
        _
      // Predicated region
      $region81: #{clip_caption_forward.1} parent=11 // pred_check
        %p582 = pneg %p406
      $region82: #{clip_caption_forward.1} parent=11 // pred_check_branch
        %584 = sbr.rel (%p582) target = $region84
      $region83: #{clip_caption_forward.1} parent=11 // pred_region
        _
      $region84: #{clip_caption_forward.1} parent=11 // pred_fallthru
        _
      // Predicated region
      $region85: #{clip_caption_forward.1} parent=11 // pred_check
        %p585 = pneg %p427
      $region86: #{clip_caption_forward.1} parent=11 // pred_check_branch
        %587 = sbr.rel (%p585) target = $region88
      $region87: #{clip_caption_forward.1} parent=11 // pred_region
        _
      $region88: #{clip_caption_forward.1} parent=11 // pred_fallthru
        _
      // Predicated region
      $region89: #{clip_caption_forward.1} parent=11 // pred_check
        %p588 = pneg %p448
      $region90: #{clip_caption_forward.1} parent=11 // pred_check_branch
        %590 = sbr.rel (%p588) target = $region92
      $region91: #{clip_caption_forward.1} parent=11 // pred_region
        _
      $region92: #{clip_caption_forward.1} parent=11 // pred_fallthru
        _
      // Predicated region
      $region93: #{clip_caption_forward.1} parent=11 // pred_check
        %p591 = pneg %p469
      $region94: #{clip_caption_forward.1} parent=11 // pred_check_branch
        %593 = sbr.rel (%p591) target = $region96
      $region95: #{clip_caption_forward.1} parent=11 // pred_region
        _
      $region96: #{clip_caption_forward.1} parent=11 // pred_fallthru
        _
      // Predicated region
      $region97: #{clip_caption_forward.1} parent=11 // pred_check
        %p594 = pneg %p490
      $region98: #{clip_caption_forward.1} parent=11 // pred_check_branch
        %596 = sbr.rel (%p594) target = $region100
      $region99: #{clip_caption_forward.1} parent=11 // pred_region
        _
      $region100: #{clip_caption_forward.1} parent=11 // pred_fallthru
        _
    $region12: #{clip_caption_forward.1} parent=5 // pred_fallthru
      _
    %p597 = scmp.lt.s32.totalorder %s28, 2
    // Predicated region
    $region101: #{clip_caption_forward.1} parent=5 // pred_check
      %p598 = pneg %p597
    $region102: #{clip_caption_forward.1} parent=5 // pred_check_branch
      %600 = sbr.rel (%p598) target = $region104
    $region103: #{clip_caption_forward.1} parent=5 // pred_region
      _
    $region104: #{clip_caption_forward.1} parent=5 // pred_fallthru
      _
    %p601 = scmp.le.s32.totalorder 1, %s28
    %p602 = scmp.lt.s32.totalorder %s28, 3
    %p603 = pnand %p601, %p602
    %p604 = pneg %p603
    // Predicated region
    $region105: #{clip_caption_forward.1} parent=5 // pred_check
      _
    $region106: #{clip_caption_forward.1} parent=5 // pred_check_branch
      %606 = sbr.rel (%p603) target = $region108
    $region107: #{clip_caption_forward.1} parent=5 // pred_region
      %s607 = ssub.s32 %s28, 1
      %p608 = pneg %p49
      %p609 = pneg %p46
      %p610 = pneg %p70
      %p611 = pneg %p67
      %p612 = pneg %p91
      %p613 = pneg %p88
      %p614 = pneg %p112
      %p615 = pneg %p109
      %p616 = pneg %p133
      %p617 = pneg %p130
      %p618 = pneg %p154
      %p619 = pneg %p151
      %p620 = pneg %p175
      %p621 = pneg %p172
      %p622 = pneg %p196
      %p623 = pneg %p193
      %p624 = pneg %p217
      %p625 = pneg %p214
      %p626 = pneg %p238
      %p627 = pneg %p235
      %p628 = pneg %p259
      %p629 = pneg %p256
      %p630 = pneg %p280
      %p631 = pneg %p277
      %p632 = pneg %p301
      %p633 = pneg %p298
      %p634 = pneg %p322
      %p635 = pneg %p319
      %p636 = pneg %p343
      %p637 = pneg %p340
      %p638 = pneg %p364
      %p639 = pneg %p361
      %p640 = pneg %p385
      %p641 = pneg %p382
      %p642 = pneg %p406
      %p643 = pneg %p403
      %p644 = pneg %p427
      %p645 = pneg %p424
      %p646 = pneg %p448
      %p647 = pneg %p445
      %p648 = pneg %p469
      %p649 = pneg %p466
      %p650 = pneg %p490
      %p651 = pneg %p487
      %p652 = pneg %p516
      %p653 = pneg %p513
      %p654 = scmp.lt.s32.totalorder %s33, 1
      %s655 = scalar_select %p654, %s33, 1
      %s656 = smul.addr %s655, 2
      %s657 = smul.addr %s656, 8
      %s658 = scalar_lea.vmem %s22, %s657
      %p659 = scmp.lt.s32.totalorder %s33, 1
      %s660 = scalar_select %p659, %s33, 1
      %s661 = smul.addr %s660, 2
      %s662 = smul.addr %s661, 8
      %s663 = scalar_lea.vmem %s22, %s662
      %s665 = scalar_lea.vmem %s0, %s33
      %v666 = vld [vmem:[%s665] sm:$0x1]
      %v667 = vpack.c.bf16 %v666, %v666
      %v668 = vld [vmem:[%s4] sm:$0xf]
      %v669 = vld [vmem:[%s4 + $0x4] sm:$0xf]
      %v670 = vld [vmem:[%s5] sm:$0x1]
      %v673 = vunpack.c.l.b16 %v668
      %v674 = vunpack.c.l.b16 %v669
      %v675 = vpack.c.b16 %v674, %v673
      %vm677 = vcmask 130048
      %v679 = vsel %vm677, %v667, 0
      %681 = vmatprep.subr.bf16.mxu0 0
      %682 = vmatpush1.bf16.msra.mxu0 %v675
      %683 = vmatprep.subr.bf16.mxu0 0
      %684 = vmatpush1.bf16.msra.mxu0 0
      %685 = vmatprep.subr.bf16.mxu0 0
      %686 = vmatpush1.bf16.msra.mxu0 0
      %687 = vmatprep.subr.bf16.mxu0 0
      %688 = vmatpush1.bf16.msra.mxu0 0
      %689 = vmatprep.subr.bf16.mxu0 0
      %690 = vmatpush1.bf16.msra.mxu0 0
      %691 = vmatprep.subr.bf16.mxu0 0
      %692 = vmatpush1.bf16.msra.mxu0 0
      %693 = vmatprep.subr.bf16.mxu0 0
      %694 = vmatpush1.bf16.msra.mxu0 0
      %695 = vmatprep.subr.bf16.mxu0 0
      %696 = vmatpush1.bf16.msra.mxu0 0
      %697 = vmatprep.subr.bf16.mxu0 0
      %698 = vmatpush1.bf16.msra.mxu0 0
      %699 = vmatprep.subr.bf16.mxu0 0
      %700 = vmatpush1.bf16.msra.mxu0 0
      %701 = vmatprep.subr.bf16.mxu0 0
      %702 = vmatpush1.bf16.msra.mxu0 0
      %703 = vmatprep.subr.bf16.mxu0 0
      %704 = vmatpush1.bf16.msra.mxu0 0
      %705 = vmatprep.subr.bf16.mxu0 0
      %706 = vmatpush1.bf16.msra.mxu0 0
      %707 = vmatprep.subr.bf16.mxu0 0
      %708 = vmatpush1.bf16.msra.mxu0 0
      %709 = vmatprep.subr.bf16.mxu0 0
      %710 = vmatpush1.bf16.msra.mxu0 0
      %711 = vmatprep.subr.bf16.mxu0 0
      %712 = vmatpush1.bf16.msra.mxu0 0
      %713 = vmatprep.mubr.bf16.mxu0 0
      %714 = vmatmul.mubr.bf16.gmra.mrb[0].mxu0 %v679
      %v715 = vpop.f32.mrb[0].mxu0
      %v716 = vadd.f32 %v670, %v715
      %v717 = vpop.f32.mrb[0].mxu0
      %v718 = vpop.f32.mrb[0].mxu0
      %v719 = vpop.f32.mrb[0].mxu0
      %720 = vdwg.mxu0
      %v721 = vtanh.pop %v716
      %v722 = vpack.c.bf16 %v721, %v721
      %v723 = vld [vmem:[%s6] sm:$0xf]
      %v724 = vld [vmem:[%s6 + $0x4] sm:$0xf]
      %v725 = vld [vmem:[%s6 + $0x8] sm:$0xf]
      %v726 = vld [vmem:[%s6 + $0xc] sm:$0xf]
      %v727 = vld [vmem:[%s6 + $0x10] sm:$0xf]
      %v728 = vld [vmem:[%s6 + $0x14] sm:$0xf]
      %v729 = vld [vmem:[%s6 + $0x18] sm:$0xf]
      %v730 = vld [vmem:[%s6 + $0x1c] sm:$0xf]
      %v731 = vld [vmem:[%s6 + $0x20] sm:$0xf]
      %v732 = vld [vmem:[%s6 + $0x24] sm:$0xf]
      %v733 = vld [vmem:[%s6 + $0x28] sm:$0xf]
      %v734 = vld [vmem:[%s6 + $0x2c] sm:$0xf]
      %v735 = vld [vmem:[%s6 + $0x30] sm:$0xf]
      %v736 = vld [vmem:[%s6 + $0x34] sm:$0xf]
      %v737 = vld [vmem:[%s6 + $0x38] sm:$0xf]
      %v738 = vld [vmem:[%s6 + $0x3c] sm:$0xf]
      %v739 = vld [vmem:[%s7] sm:$0x1]
      %v756 = vunpack.c.l.b16 %v723
      %v757 = vunpack.c.l.b16 %v724
      %v758 = vunpack.c.l.b16 %v725
      %v759 = vunpack.c.l.b16 %v726
      %v760 = vunpack.c.l.b16 %v727
      %v761 = vunpack.c.l.b16 %v728
      %v762 = vunpack.c.l.b16 %v729
      %v763 = vunpack.c.l.b16 %v730
      %v764 = vunpack.c.l.b16 %v731
      %v765 = vunpack.c.l.b16 %v732
      %v766 = vunpack.c.l.b16 %v733
      %v767 = vunpack.c.l.b16 %v734
      %v768 = vunpack.c.l.b16 %v735
      %v769 = vunpack.c.l.b16 %v736
      %v770 = vunpack.c.l.b16 %v737
      %v771 = vunpack.c.l.b16 %v738
      %v772 = vpack.c.b16 %v757, %v756
      %v773 = vpack.c.b16 %v759, %v758
      %v774 = vpack.c.b16 %v761, %v760
      %v775 = vpack.c.b16 %v763, %v762
      %v776 = vpack.c.b16 %v765, %v764
      %v777 = vpack.c.b16 %v767, %v766
      %v778 = vpack.c.b16 %v769, %v768
      %v779 = vpack.c.b16 %v771, %v770
      %788 = vmatprep.subr.bf16.mxu0 0
      %789 = vmatpush1.bf16.msra.mxu0 %v772
      %790 = vmatprep.subr.bf16.mxu0 0
      %791 = vmatpush1.bf16.msra.mxu0 %v773
      %792 = vmatprep.subr.bf16.mxu0 0
      %793 = vmatpush1.bf16.msra.mxu0 %v774
      %794 = vmatprep.subr.bf16.mxu0 0
      %795 = vmatpush1.bf16.msra.mxu0 %v775
      %796 = vmatprep.subr.bf16.mxu0 0
      %797 = vmatpush1.bf16.msra.mxu0 %v776
      %798 = vmatprep.subr.bf16.mxu0 0
      %799 = vmatpush1.bf16.msra.mxu0 %v777
      %800 = vmatprep.subr.bf16.mxu0 0
      %801 = vmatpush1.bf16.msra.mxu0 %v778
      %802 = vmatprep.subr.bf16.mxu0 0
      %803 = vmatpush1.bf16.msra.mxu0 %v779
      %804 = vmatprep.subr.bf16.mxu0 0
      %805 = vmatpush1.bf16.msra.mxu0 0
      %806 = vmatprep.subr.bf16.mxu0 0
      %807 = vmatpush1.bf16.msra.mxu0 0
      %808 = vmatprep.subr.bf16.mxu0 0
      %809 = vmatpush1.bf16.msra.mxu0 0
      %810 = vmatprep.subr.bf16.mxu0 0
      %811 = vmatpush1.bf16.msra.mxu0 0
      %812 = vmatprep.subr.bf16.mxu0 0
      %813 = vmatpush1.bf16.msra.mxu0 0
      %814 = vmatprep.subr.bf16.mxu0 0
      %815 = vmatpush1.bf16.msra.mxu0 0
      %816 = vmatprep.subr.bf16.mxu0 0
      %817 = vmatpush1.bf16.msra.mxu0 0
      %818 = vmatprep.subr.bf16.mxu0 0
      %819 = vmatpush1.bf16.msra.mxu0 0
      %820 = vmatprep.mubr.bf16.mxu0 0
      %821 = vmatmul.mubr.bf16.gmra.mrb[0].mxu0 %v722
      %v822 = vpop.f32.mrb[0].mxu0
      %v823 = vadd.f32 %v739, %v822
      %v824 = vpop.f32.mrb[0].mxu0
      %v825 = vpop.f32.mrb[0].mxu0
      %v826 = vpop.f32.mrb[0].mxu0
      %827 = vdwg.mxu0
      %s828 = scalar_lea.vmem %s6, 64
      %v829 = vld [vmem:[%s828] sm:$0xf]
      %v830 = vld [vmem:[%s828 + $0x4] sm:$0xf]
      %v831 = vld [vmem:[%s828 + $0x8] sm:$0xf]
      %v832 = vld [vmem:[%s828 + $0xc] sm:$0xf]
      %v833 = vld [vmem:[%s828 + $0x10] sm:$0xf]
      %v834 = vld [vmem:[%s828 + $0x14] sm:$0xf]
      %v835 = vld [vmem:[%s828 + $0x18] sm:$0xf]
      %v836 = vld [vmem:[%s828 + $0x1c] sm:$0xf]
      %v837 = vld [vmem:[%s828 + $0x20] sm:$0xf]
      %v838 = vld [vmem:[%s828 + $0x24] sm:$0xf]
      %v839 = vld [vmem:[%s828 + $0x28] sm:$0xf]
      %v840 = vld [vmem:[%s828 + $0x2c] sm:$0xf]
      %v841 = vld [vmem:[%s828 + $0x30] sm:$0xf]
      %v842 = vld [vmem:[%s828 + $0x34] sm:$0xf]
      %v843 = vld [vmem:[%s828 + $0x38] sm:$0xf]
      %v844 = vld [vmem:[%s828 + $0x3c] sm:$0xf]
      %s845 = scalar_lea.vmem %s7, 1
      %v846 = vld [vmem:[%s845] sm:$0x1]
      %v863 = vunpack.c.l.b16 %v829
      %v864 = vunpack.c.l.b16 %v830
      %v865 = vunpack.c.l.b16 %v831
      %v866 = vunpack.c.l.b16 %v832
      %v867 = vunpack.c.l.b16 %v833
      %v868 = vunpack.c.l.b16 %v834
      %v869 = vunpack.c.l.b16 %v835
      %v870 = vunpack.c.l.b16 %v836
      %v871 = vunpack.c.l.b16 %v837
      %v872 = vunpack.c.l.b16 %v838
      %v873 = vunpack.c.l.b16 %v839
      %v874 = vunpack.c.l.b16 %v840
      %v875 = vunpack.c.l.b16 %v841
      %v876 = vunpack.c.l.b16 %v842
      %v877 = vunpack.c.l.b16 %v843
      %v878 = vunpack.c.l.b16 %v844
      %v879 = vpack.c.b16 %v864, %v863
      %v880 = vpack.c.b16 %v866, %v865
      %v881 = vpack.c.b16 %v868, %v867
      %v882 = vpack.c.b16 %v870, %v869
      %v883 = vpack.c.b16 %v872, %v871
      %v884 = vpack.c.b16 %v874, %v873
      %v885 = vpack.c.b16 %v876, %v875
      %v886 = vpack.c.b16 %v878, %v877
      %895 = vmatprep.subr.bf16.mxu0 0
      %896 = vmatpush1.bf16.msra.mxu0 %v879
      %897 = vmatprep.subr.bf16.mxu0 0
      %898 = vmatpush1.bf16.msra.mxu0 %v880
      %899 = vmatprep.subr.bf16.mxu0 0
      %900 = vmatpush1.bf16.msra.mxu0 %v881
      %901 = vmatprep.subr.bf16.mxu0 0
      %902 = vmatpush1.bf16.msra.mxu0 %v882
      %903 = vmatprep.subr.bf16.mxu0 0
      %904 = vmatpush1.bf16.msra.mxu0 %v883
      %905 = vmatprep.subr.bf16.mxu0 0
      %906 = vmatpush1.bf16.msra.mxu0 %v884
      %907 = vmatprep.subr.bf16.mxu0 0
      %908 = vmatpush1.bf16.msra.mxu0 %v885
      %909 = vmatprep.subr.bf16.mxu0 0
      %910 = vmatpush1.bf16.msra.mxu0 %v886
      %911 = vmatprep.subr.bf16.mxu0 0
      %912 = vmatpush1.bf16.msra.mxu0 0
      %913 = vmatprep.subr.bf16.mxu0 0
      %914 = vmatpush1.bf16.msra.mxu0 0
      %915 = vmatprep.subr.bf16.mxu0 0
      %916 = vmatpush1.bf16.msra.mxu0 0
      %917 = vmatprep.subr.bf16.mxu0 0
      %918 = vmatpush1.bf16.msra.mxu0 0
      %919 = vmatprep.subr.bf16.mxu0 0
      %920 = vmatpush1.bf16.msra.mxu0 0
      %921 = vmatprep.subr.bf16.mxu0 0
      %922 = vmatpush1.bf16.msra.mxu0 0
      %923 = vmatprep.subr.bf16.mxu0 0
      %924 = vmatpush1.bf16.msra.mxu0 0
      %925 = vmatprep.subr.bf16.mxu0 0
      %926 = vmatpush1.bf16.msra.mxu0 0
      %927 = vmatprep.mubr.bf16.mxu0 0
      %928 = vmatmul.mubr.bf16.gmra.mrb[0].mxu0 %v722
      %v929 = vpop.f32.mrb[0].mxu0
      %v930 = vadd.f32 %v846, %v929
      %v931 = vpop.f32.mrb[0].mxu0
      %v932 = vpop.f32.mrb[0].mxu0
      %v933 = vpop.f32.mrb[0].mxu0
      %934 = vdwg.mxu0
      %s935 = scalar_lea.vmem %s6, 128
      %v936 = vld [vmem:[%s935] sm:$0xf]
      %v937 = vld [vmem:[%s935 + $0x4] sm:$0xf]
      %v938 = vld [vmem:[%s935 + $0x8] sm:$0xf]
      %v939 = vld [vmem:[%s935 + $0xc] sm:$0xf]
      %v940 = vld [vmem:[%s935 + $0x10] sm:$0xf]
      %v941 = vld [vmem:[%s935 + $0x14] sm:$0xf]
      %v942 = vld [vmem:[%s935 + $0x18] sm:$0xf]
      %v943 = vld [vmem:[%s935 + $0x1c] sm:$0xf]
      %v944 = vld [vmem:[%s935 + $0x20] sm:$0xf]
      %v945 = vld [vmem:[%s935 + $0x24] sm:$0xf]
      %v946 = vld [vmem:[%s935 + $0x28] sm:$0xf]
      %v947 = vld [vmem:[%s935 + $0x2c] sm:$0xf]
      %v948 = vld [vmem:[%s935 + $0x30] sm:$0xf]
      %v949 = vld [vmem:[%s935 + $0x34] sm:$0xf]
      %v950 = vld [vmem:[%s935 + $0x38] sm:$0xf]
      %v951 = vld [vmem:[%s935 + $0x3c] sm:$0xf]
      %s952 = scalar_lea.vmem %s7, 2
      %v953 = vld [vmem:[%s952] sm:$0x1]
      %v970 = vunpack.c.l.b16 %v936
      %v971 = vunpack.c.l.b16 %v937
      %v972 = vunpack.c.l.b16 %v938
      %v973 = vunpack.c.l.b16 %v939
      %v974 = vunpack.c.l.b16 %v940
      %v975 = vunpack.c.l.b16 %v941
      %v976 = vunpack.c.l.b16 %v942
      %v977 = vunpack.c.l.b16 %v943
      %v978 = vunpack.c.l.b16 %v944
      %v979 = vunpack.c.l.b16 %v945
      %v980 = vunpack.c.l.b16 %v946
      %v981 = vunpack.c.l.b16 %v947
      %v982 = vunpack.c.l.b16 %v948
      %v983 = vunpack.c.l.b16 %v949
      %v984 = vunpack.c.l.b16 %v950
      %v985 = vunpack.c.l.b16 %v951
      %v986 = vpack.c.b16 %v971, %v970
      %v987 = vpack.c.b16 %v973, %v972
      %v988 = vpack.c.b16 %v975, %v974
      %v989 = vpack.c.b16 %v977, %v976
      %v990 = vpack.c.b16 %v979, %v978
      %v991 = vpack.c.b16 %v981, %v980
      %v992 = vpack.c.b16 %v983, %v982
      %v993 = vpack.c.b16 %v985, %v984
      %1002 = vmatprep.subr.bf16.mxu0 0
      %1003 = vmatpush1.bf16.msra.mxu0 %v986
      %1004 = vmatprep.subr.bf16.mxu0 0
      %1005 = vmatpush1.bf16.msra.mxu0 %v987
      %1006 = vmatprep.subr.bf16.mxu0 0
      %1007 = vmatpush1.bf16.msra.mxu0 %v988
      %1008 = vmatprep.subr.bf16.mxu0 0
      %1009 = vmatpush1.bf16.msra.mxu0 %v989
      %1010 = vmatprep.subr.bf16.mxu0 0
      %1011 = vmatpush1.bf16.msra.mxu0 %v990
      %1012 = vmatprep.subr.bf16.mxu0 0
      %1013 = vmatpush1.bf16.msra.mxu0 %v991
      %1014 = vmatprep.subr.bf16.mxu0 0
      %1015 = vmatpush1.bf16.msra.mxu0 %v992
      %1016 = vmatprep.subr.bf16.mxu0 0
      %1017 = vmatpush1.bf16.msra.mxu0 %v993
      %1018 = vmatprep.subr.bf16.mxu0 0
      %1019 = vmatpush1.bf16.msra.mxu0 0
      %1020 = vmatprep.subr.bf16.mxu0 0
      %1021 = vmatpush1.bf16.msra.mxu0 0
      %1022 = vmatprep.subr.bf16.mxu0 0
      %1023 = vmatpush1.bf16.msra.mxu0 0
      %1024 = vmatprep.subr.bf16.mxu0 0
      %1025 = vmatpush1.bf16.msra.mxu0 0
      %1026 = vmatprep.subr.bf16.mxu0 0
      %1027 = vmatpush1.bf16.msra.mxu0 0
      %1028 = vmatprep.subr.bf16.mxu0 0
      %1029 = vmatpush1.bf16.msra.mxu0 0
      %1030 = vmatprep.subr.bf16.mxu0 0
      %1031 = vmatpush1.bf16.msra.mxu0 0
      %1032 = vmatprep.subr.bf16.mxu0 0
      %1033 = vmatpush1.bf16.msra.mxu0 0
      %1034 = vmatprep.mubr.bf16.mxu0 0
      %1035 = vmatmul.mubr.bf16.gmra.mrb[0].mxu0 %v722
      %v1036 = vpop.f32.mrb[0].mxu0
      %v1037 = vadd.f32 %v953, %v1036
      %v1038 = vpop.f32.mrb[0].mxu0
      %v1039 = vpop.f32.mrb[0].mxu0
      %v1040 = vpop.f32.mrb[0].mxu0
      %1041 = vdwg.mxu0
      %s1042 = scalar_lea.vmem %s6, 192
      %v1043 = vld [vmem:[%s1042] sm:$0xf]
      %v1044 = vld [vmem:[%s1042 + $0x4] sm:$0xf]
      %v1045 = vld [vmem:[%s1042 + $0x8] sm:$0xf]
      %v1046 = vld [vmem:[%s1042 + $0xc] sm:$0xf]
      %v1047 = vld [vmem:[%s1042 + $0x10] sm:$0xf]
      %v1048 = vld [vmem:[%s1042 + $0x14] sm:$0xf]
      %v1049 = vld [vmem:[%s1042 + $0x18] sm:$0xf]
      %v1050 = vld [vmem:[%s1042 + $0x1c] sm:$0xf]
      %v1051 = vld [vmem:[%s1042 + $0x20] sm:$0xf]
      %v1052 = vld [vmem:[%s1042 + $0x24] sm:$0xf]
      %v1053 = vld [vmem:[%s1042 + $0x28] sm:$0xf]
      %v1054 = vld [vmem:[%s1042 + $0x2c] sm:$0xf]
      %v1055 = vld [vmem:[%s1042 + $0x30] sm:$0xf]
      %v1056 = vld [vmem:[%s1042 + $0x34] sm:$0xf]
      %v1057 = vld [vmem:[%s1042 + $0x38] sm:$0xf]
      %v1058 = vld [vmem:[%s1042 + $0x3c] sm:$0xf]
      %s1059 = scalar_lea.vmem %s7, 3
      %v1060 = vld [vmem:[%s1059] sm:$0x1]
      %v1077 = vunpack.c.l.b16 %v1043
      %v1078 = vunpack.c.l.b16 %v1044
      %v1079 = vunpack.c.l.b16 %v1045
      %v1080 = vunpack.c.l.b16 %v1046
      %v1081 = vunpack.c.l.b16 %v1047
      %v1082 = vunpack.c.l.b16 %v1048
      %v1083 = vunpack.c.l.b16 %v1049
      %v1084 = vunpack.c.l.b16 %v1050
      %v1085 = vunpack.c.l.b16 %v1051
      %v1086 = vunpack.c.l.b16 %v1052
      %v1087 = vunpack.c.l.b16 %v1053
      %v1088 = vunpack.c.l.b16 %v1054
      %v1089 = vunpack.c.l.b16 %v1055
      %v1090 = vunpack.c.l.b16 %v1056
      %v1091 = vunpack.c.l.b16 %v1057
      %v1092 = vunpack.c.l.b16 %v1058
      %v1093 = vpack.c.b16 %v1078, %v1077
      %v1094 = vpack.c.b16 %v1080, %v1079
      %v1095 = vpack.c.b16 %v1082, %v1081
      %v1096 = vpack.c.b16 %v1084, %v1083
      %v1097 = vpack.c.b16 %v1086, %v1085
      %v1098 = vpack.c.b16 %v1088, %v1087
      %v1099 = vpack.c.b16 %v1090, %v1089
      %v1100 = vpack.c.b16 %v1092, %v1091
      %1109 = vmatprep.subr.bf16.mxu0 0
      %1110 = vmatpush1.bf16.msra.mxu0 %v1093
      %1111 = vmatprep.subr.bf16.mxu0 0
      %1112 = vmatpush1.bf16.msra.mxu0 %v1094
      %1113 = vmatprep.subr.bf16.mxu0 0
      %1114 = vmatpush1.bf16.msra.mxu0 %v1095
      %1115 = vmatprep.subr.bf16.mxu0 0
      %1116 = vmatpush1.bf16.msra.mxu0 %v1096
      %1117 = vmatprep.subr.bf16.mxu0 0
      %1118 = vmatpush1.bf16.msra.mxu0 %v1097
      %1119 = vmatprep.subr.bf16.mxu0 0
      %1120 = vmatpush1.bf16.msra.mxu0 %v1098
      %1121 = vmatprep.subr.bf16.mxu0 0
      %1122 = vmatpush1.bf16.msra.mxu0 %v1099
      %1123 = vmatprep.subr.bf16.mxu0 0
      %1124 = vmatpush1.bf16.msra.mxu0 %v1100
      %1125 = vmatprep.subr.bf16.mxu0 0
      %1126 = vmatpush1.bf16.msra.mxu0 0
      %1127 = vmatprep.subr.bf16.mxu0 0
      %1128 = vmatpush1.bf16.msra.mxu0 0
      %1129 = vmatprep.subr.bf16.mxu0 0
      %1130 = vmatpush1.bf16.msra.mxu0 0
      %1131 = vmatprep.subr.bf16.mxu0 0
      %1132 = vmatpush1.bf16.msra.mxu0 0
      %1133 = vmatprep.subr.bf16.mxu0 0
      %1134 = vmatpush1.bf16.msra.mxu0 0
      %1135 = vmatprep.subr.bf16.mxu0 0
      %1136 = vmatpush1.bf16.msra.mxu0 0
      %1137 = vmatprep.subr.bf16.mxu0 0
      %1138 = vmatpush1.bf16.msra.mxu0 0
      %1139 = vmatprep.subr.bf16.mxu0 0
      %1140 = vmatpush1.bf16.msra.mxu0 0
      %1141 = vmatprep.mubr.bf16.mxu0 0
      %1142 = vmatmul.mubr.bf16.gmra.mrb[0].mxu0 %v722
      %v1143 = vpop.f32.mrb[0].mxu0
      %v1144 = vadd.f32 %v1060, %v1143
      %v1145 = vpop.f32.mrb[0].mxu0
      %v1146 = vpop.f32.mrb[0].mxu0
      %v1147 = vpop.f32.mrb[0].mxu0
      %1148 = vdwg.mxu0
      %s1149 = scalar_lea.vmem %s6, 256
      %v1150 = vld [vmem:[%s1149] sm:$0xf]
      %v1151 = vld [vmem:[%s1149 + $0x4] sm:$0xf]
      %v1152 = vld [vmem:[%s1149 + $0x8] sm:$0xf]
      %v1153 = vld [vmem:[%s1149 + $0xc] sm:$0xf]
      %v1154 = vld [vmem:[%s1149 + $0x10] sm:$0xf]
      %v1155 = vld [vmem:[%s1149 + $0x14] sm:$0xf]
      %v1156 = vld [vmem:[%s1149 + $0x18] sm:$0xf]
      %v1157 = vld [vmem:[%s1149 + $0x1c] sm:$0xf]
      %v1158 = vld [vmem:[%s1149 + $0x20] sm:$0xf]
      %v1159 = vld [vmem:[%s1149 + $0x24] sm:$0xf]
      %v1160 = vld [vmem:[%s1149 + $0x28] sm:$0xf]
      %v1161 = vld [vmem:[%s1149 + $0x2c] sm:$0xf]
      %v1162 = vld [vmem:[%s1149 + $0x30] sm:$0xf]
      %v1163 = vld [vmem:[%s1149 + $0x34] sm:$0xf]
      %v1164 = vld [vmem:[%s1149 + $0x38] sm:$0xf]
      %v1165 = vld [vmem:[%s1149 + $0x3c] sm:$0xf]
      %s1166 = scalar_lea.vmem %s7, 4
      %v1167 = vld [vmem:[%s1166] sm:$0x1]
      %v1184 = vunpack.c.l.b16 %v1150
      %v1185 = vunpack.c.l.b16 %v1151
      %v1186 = vunpack.c.l.b16 %v1152
      %v1187 = vunpack.c.l.b16 %v1153
      %v1188 = vunpack.c.l.b16 %v1154
      %v1189 = vunpack.c.l.b16 %v1155
      %v1190 = vunpack.c.l.b16 %v1156
      %v1191 = vunpack.c.l.b16 %v1157
      %v1192 = vunpack.c.l.b16 %v1158
      %v1193 = vunpack.c.l.b16 %v1159
      %v1194 = vunpack.c.l.b16 %v1160
      %v1195 = vunpack.c.l.b16 %v1161
      %v1196 = vunpack.c.l.b16 %v1162
      %v1197 = vunpack.c.l.b16 %v1163
      %v1198 = vunpack.c.l.b16 %v1164
      %v1199 = vunpack.c.l.b16 %v1165
      %v1200 = vpack.c.b16 %v1185, %v1184
      %v1201 = vpack.c.b16 %v1187, %v1186
      %v1202 = vpack.c.b16 %v1189, %v1188
      %v1203 = vpack.c.b16 %v1191, %v1190
      %v1204 = vpack.c.b16 %v1193, %v1192
      %v1205 = vpack.c.b16 %v1195, %v1194
      %v1206 = vpack.c.b16 %v1197, %v1196
      %v1207 = vpack.c.b16 %v1199, %v1198
      %1216 = vmatprep.subr.bf16.mxu0 0
      %1217 = vmatpush1.bf16.msra.mxu0 %v1200
      %1218 = vmatprep.subr.bf16.mxu0 0
      %1219 = vmatpush1.bf16.msra.mxu0 %v1201
      %1220 = vmatprep.subr.bf16.mxu0 0
      %1221 = vmatpush1.bf16.msra.mxu0 %v1202
      %1222 = vmatprep.subr.bf16.mxu0 0
      %1223 = vmatpush1.bf16.msra.mxu0 %v1203
      %1224 = vmatprep.subr.bf16.mxu0 0
      %1225 = vmatpush1.bf16.msra.mxu0 %v1204
      %1226 = vmatprep.subr.bf16.mxu0 0
      %1227 = vmatpush1.bf16.msra.mxu0 %v1205
      %1228 = vmatprep.subr.bf16.mxu0 0
      %1229 = vmatpush1.bf16.msra.mxu0 %v1206
      %1230 = vmatprep.subr.bf16.mxu0 0
      %1231 = vmatpush1.bf16.msra.mxu0 %v1207
      %1232 = vmatprep.subr.bf16.mxu0 0
      %1233 = vmatpush1.bf16.msra.mxu0 0
      %1234 = vmatprep.subr.bf16.mxu0 0
      %1235 = vmatpush1.bf16.msra.mxu0 0
      %1236 = vmatprep.subr.bf16.mxu0 0
      %1237 = vmatpush1.bf16.msra.mxu0 0
      %1238 = vmatprep.subr.bf16.mxu0 0
      %1239 = vmatpush1.bf16.msra.mxu0 0
      %1240 = vmatprep.subr.bf16.mxu0 0
      %1241 = vmatpush1.bf16.msra.mxu0 0
      %1242 = vmatprep.subr.bf16.mxu0 0
      %1243 = vmatpush1.bf16.msra.mxu0 0
      %1244 = vmatprep.subr.bf16.mxu0 0
      %1245 = vmatpush1.bf16.msra.mxu0 0
      %1246 = vmatprep.subr.bf16.mxu0 0
      %1247 = vmatpush1.bf16.msra.mxu0 0
      %1248 = vmatprep.mubr.bf16.mxu0 0
      %1249 = vmatmul.mubr.bf16.gmra.mrb[0].mxu0 %v722
      %v1250 = vpop.f32.mrb[0].mxu0
      %v1251 = vadd.f32 %v1167, %v1250
      %v1252 = vpop.f32.mrb[0].mxu0
      %v1253 = vpop.f32.mrb[0].mxu0
      %v1254 = vpop.f32.mrb[0].mxu0
      %1255 = vdwg.mxu0
      %s1256 = scalar_lea.vmem %s6, 320
      %v1257 = vld [vmem:[%s1256] sm:$0xf]
      %v1258 = vld [vmem:[%s1256 + $0x4] sm:$0xf]
      %v1259 = vld [vmem:[%s1256 + $0x8] sm:$0xf]
      %v1260 = vld [vmem:[%s1256 + $0xc] sm:$0xf]
      %v1261 = vld [vmem:[%s1256 + $0x10] sm:$0xf]
      %v1262 = vld [vmem:[%s1256 + $0x14] sm:$0xf]
      %v1263 = vld [vmem:[%s1256 + $0x18] sm:$0xf]
      %v1264 = vld [vmem:[%s1256 + $0x1c] sm:$0xf]
      %v1265 = vld [vmem:[%s1256 + $0x20] sm:$0xf]
      %v1266 = vld [vmem:[%s1256 + $0x24] sm:$0xf]
      %v1267 = vld [vmem:[%s1256 + $0x28] sm:$0xf]
      %v1268 = vld [vmem:[%s1256 + $0x2c] sm:$0xf]
      %v1269 = vld [vmem:[%s1256 + $0x30] sm:$0xf]
      %v1270 = vld [vmem:[%s1256 + $0x34] sm:$0xf]
      %v1271 = vld [vmem:[%s1256 + $0x38] sm:$0xf]
      %v1272 = vld [vmem:[%s1256 + $0x3c] sm:$0xf]
      %s1273 = scalar_lea.vmem %s7, 5
      %v1274 = vld [vmem:[%s1273] sm:$0x1]
      %v1291 = vunpack.c.l.b16 %v1257
      %v1292 = vunpack.c.l.b16 %v1258
      %v1293 = vunpack.c.l.b16 %v1259
      %v1294 = vunpack.c.l.b16 %v1260
      %v1295 = vunpack.c.l.b16 %v1261
      %v1296 = vunpack.c.l.b16 %v1262
      %v1297 = vunpack.c.l.b16 %v1263
      %v1298 = vunpack.c.l.b16 %v1264
      %v1299 = vunpack.c.l.b16 %v1265
      %v1300 = vunpack.c.l.b16 %v1266
      %v1301 = vunpack.c.l.b16 %v1267
      %v1302 = vunpack.c.l.b16 %v1268
      %v1303 = vunpack.c.l.b16 %v1269
      %v1304 = vunpack.c.l.b16 %v1270
      %v1305 = vunpack.c.l.b16 %v1271
      %v1306 = vunpack.c.l.b16 %v1272
      %v1307 = vpack.c.b16 %v1292, %v1291
      %v1308 = vpack.c.b16 %v1294, %v1293
      %v1309 = vpack.c.b16 %v1296, %v1295
      %v1310 = vpack.c.b16 %v1298, %v1297
      %v1311 = vpack.c.b16 %v1300, %v1299
      %v1312 = vpack.c.b16 %v1302, %v1301
      %v1313 = vpack.c.b16 %v1304, %v1303
      %v1314 = vpack.c.b16 %v1306, %v1305
      %1323 = vmatprep.subr.bf16.mxu0 0
      %1324 = vmatpush1.bf16.msra.mxu0 %v1307
      %1325 = vmatprep.subr.bf16.mxu0 0
      %1326 = vmatpush1.bf16.msra.mxu0 %v1308
      %1327 = vmatprep.subr.bf16.mxu0 0
      %1328 = vmatpush1.bf16.msra.mxu0 %v1309
      %1329 = vmatprep.subr.bf16.mxu0 0
      %1330 = vmatpush1.bf16.msra.mxu0 %v1310
      %1331 = vmatprep.subr.bf16.mxu0 0
      %1332 = vmatpush1.bf16.msra.mxu0 %v1311
      %1333 = vmatprep.subr.bf16.mxu0 0
      %1334 = vmatpush1.bf16.msra.mxu0 %v1312
      %1335 = vmatprep.subr.bf16.mxu0 0
      %1336 = vmatpush1.bf16.msra.mxu0 %v1313
      %1337 = vmatprep.subr.bf16.mxu0 0
      %1338 = vmatpush1.bf16.msra.mxu0 %v1314
      %1339 = vmatprep.subr.bf16.mxu0 0
      %1340 = vmatpush1.bf16.msra.mxu0 0
      %1341 = vmatprep.subr.bf16.mxu0 0
      %1342 = vmatpush1.bf16.msra.mxu0 0
      %1343 = vmatprep.subr.bf16.mxu0 0
      %1344 = vmatpush1.bf16.msra.mxu0 0
      %1345 = vmatprep.subr.bf16.mxu0 0
      %1346 = vmatpush1.bf16.msra.mxu0 0
      %1347 = vmatprep.subr.bf16.mxu0 0
      %1348 = vmatpush1.bf16.msra.mxu0 0
      %1349 = vmatprep.subr.bf16.mxu0 0
      %1350 = vmatpush1.bf16.msra.mxu0 0
      %1351 = vmatprep.subr.bf16.mxu0 0
      %1352 = vmatpush1.bf16.msra.mxu0 0
      %1353 = vmatprep.subr.bf16.mxu0 0
      %1354 = vmatpush1.bf16.msra.mxu0 0
      %1355 = vmatprep.mubr.bf16.mxu0 0
      %1356 = vmatmul.mubr.bf16.gmra.mrb[0].mxu0 %v722
      %v1357 = vpop.f32.mrb[0].mxu0
      %v1358 = vadd.f32 %v1274, %v1357
      %v1359 = vpop.f32.mrb[0].mxu0
      %v1360 = vpop.f32.mrb[0].mxu0
      %v1361 = vpop.f32.mrb[0].mxu0
      %1362 = vdwg.mxu0
      %s1363 = scalar_lea.vmem %s6, 384
      %v1364 = vld [vmem:[%s1363] sm:$0xf]
      %v1365 = vld [vmem:[%s1363 + $0x4] sm:$0xf]
      %v1366 = vld [vmem:[%s1363 + $0x8] sm:$0xf]
      %v1367 = vld [vmem:[%s1363 + $0xc] sm:$0xf]
      %v1368 = vld [vmem:[%s1363 + $0x10] sm:$0xf]
      %v1369 = vld [vmem:[%s1363 + $0x14] sm:$0xf]
      %v1370 = vld [vmem:[%s1363 + $0x18] sm:$0xf]
      %v1371 = vld [vmem:[%s1363 + $0x1c] sm:$0xf]
      %v1372 = vld [vmem:[%s1363 + $0x20] sm:$0xf]
      %v1373 = vld [vmem:[%s1363 + $0x24] sm:$0xf]
      %v1374 = vld [vmem:[%s1363 + $0x28] sm:$0xf]
      %v1375 = vld [vmem:[%s1363 + $0x2c] sm:$0xf]
      %v1376 = vld [vmem:[%s1363 + $0x30] sm:$0xf]
      %v1377 = vld [vmem:[%s1363 + $0x34] sm:$0xf]
      %v1378 = vld [vmem:[%s1363 + $0x38] sm:$0xf]
      %v1379 = vld [vmem:[%s1363 + $0x3c] sm:$0xf]
      %s1380 = scalar_lea.vmem %s7, 6
      %v1381 = vld [vmem:[%s1380] sm:$0x1]
      %v1398 = vunpack.c.l.b16 %v1364
      %v1399 = vunpack.c.l.b16 %v1365
      %v1400 = vunpack.c.l.b16 %v1366
      %v1401 = vunpack.c.l.b16 %v1367
      %v1402 = vunpack.c.l.b16 %v1368
      %v1403 = vunpack.c.l.b16 %v1369
      %v1404 = vunpack.c.l.b16 %v1370
      %v1405 = vunpack.c.l.b16 %v1371
      %v1406 = vunpack.c.l.b16 %v1372
      %v1407 = vunpack.c.l.b16 %v1373
      %v1408 = vunpack.c.l.b16 %v1374
      %v1409 = vunpack.c.l.b16 %v1375
      %v1410 = vunpack.c.l.b16 %v1376
      %v1411 = vunpack.c.l.b16 %v1377
      %v1412 = vunpack.c.l.b16 %v1378
      %v1413 = vunpack.c.l.b16 %v1379
      %v1414 = vpack.c.b16 %v1399, %v1398
      %v1415 = vpack.c.b16 %v1401, %v1400
      %v1416 = vpack.c.b16 %v1403, %v1402
      %v1417 = vpack.c.b16 %v1405, %v1404
      %v1418 = vpack.c.b16 %v1407, %v1406
      %v1419 = vpack.c.b16 %v1409, %v1408
      %v1420 = vpack.c.b16 %v1411, %v1410
      %v1421 = vpack.c.b16 %v1413, %v1412
      %1430 = vmatprep.subr.bf16.mxu0 0
      %1431 = vmatpush1.bf16.msra.mxu0 %v1414
      %1432 = vmatprep.subr.bf16.mxu0 0
      %1433 = vmatpush1.bf16.msra.mxu0 %v1415
      %1434 = vmatprep.subr.bf16.mxu0 0
      %1435 = vmatpush1.bf16.msra.mxu0 %v1416
      %1436 = vmatprep.subr.bf16.mxu0 0
      %1437 = vmatpush1.bf16.msra.mxu0 %v1417
      %1438 = vmatprep.subr.bf16.mxu0 0
      %1439 = vmatpush1.bf16.msra.mxu0 %v1418
      %1440 = vmatprep.subr.bf16.mxu0 0
      %1441 = vmatpush1.bf16.msra.mxu0 %v1419
      %1442 = vmatprep.subr.bf16.mxu0 0
      %1443 = vmatpush1.bf16.msra.mxu0 %v1420
      %1444 = vmatprep.subr.bf16.mxu0 0
      %1445 = vmatpush1.bf16.msra.mxu0 %v1421
      %1446 = vmatprep.subr.bf16.mxu0 0
      %1447 = vmatpush1.bf16.msra.mxu0 0
      %1448 = vmatprep.subr.bf16.mxu0 0
      %1449 = vmatpush1.bf16.msra.mxu0 0
      %1450 = vmatprep.subr.bf16.mxu0 0
      %1451 = vmatpush1.bf16.msra.mxu0 0
      %1452 = vmatprep.subr.bf16.mxu0 0
      %1453 = vmatpush1.bf16.msra.mxu0 0
      %1454 = vmatprep.subr.bf16.mxu0 0
      %1455 = vmatpush1.bf16.msra.mxu0 0
      %1456 = vmatprep.subr.bf16.mxu0 0
      %1457 = vmatpush1.bf16.msra.mxu0 0
      %1458 = vmatprep.subr.bf16.mxu0 0
      %1459 = vmatpush1.bf16.msra.mxu0 0
      %1460 = vmatprep.subr.bf16.mxu0 0
      %1461 = vmatpush1.bf16.msra.mxu0 0
      %1462 = vmatprep.mubr.bf16.mxu0 0
      %1463 = vmatmul.mubr.bf16.gmra.mrb[0].mxu0 %v722
      %v1464 = vpop.f32.mrb[0].mxu0
      %v1465 = vadd.f32 %v1381, %v1464
      %v1466 = vpop.f32.mrb[0].mxu0
      %v1467 = vpop.f32.mrb[0].mxu0
      %v1468 = vpop.f32.mrb[0].mxu0
      %1469 = vdwg.mxu0
      %s1470 = scalar_lea.vmem %s6, 448
      %v1471 = vld [vmem:[%s1470] sm:$0xf]
      %v1472 = vld [vmem:[%s1470 + $0x4] sm:$0xf]
      %v1473 = vld [vmem:[%s1470 + $0x8] sm:$0xf]
      %v1474 = vld [vmem:[%s1470 + $0xc] sm:$0xf]
      %v1475 = vld [vmem:[%s1470 + $0x10] sm:$0xf]
      %v1476 = vld [vmem:[%s1470 + $0x14] sm:$0xf]
      %v1477 = vld [vmem:[%s1470 + $0x18] sm:$0xf]
      %v1478 = vld [vmem:[%s1470 + $0x1c] sm:$0xf]
      %v1479 = vld [vmem:[%s1470 + $0x20] sm:$0xf]
      %v1480 = vld [vmem:[%s1470 + $0x24] sm:$0xf]
      %v1481 = vld [vmem:[%s1470 + $0x28] sm:$0xf]
      %v1482 = vld [vmem:[%s1470 + $0x2c] sm:$0xf]
      %v1483 = vld [vmem:[%s1470 + $0x30] sm:$0xf]
      %v1484 = vld [vmem:[%s1470 + $0x34] sm:$0xf]
      %v1485 = vld [vmem:[%s1470 + $0x38] sm:$0xf]
      %v1486 = vld [vmem:[%s1470 + $0x3c] sm:$0xf]
      %s1487 = scalar_lea.vmem %s7, 7
      %v1488 = vld [vmem:[%s1487] sm:$0x1]
      %v1505 = vunpack.c.l.b16 %v1471
      %v1506 = vunpack.c.l.b16 %v1472
      %v1507 = vunpack.c.l.b16 %v1473
      %v1508 = vunpack.c.l.b16 %v1474
      %v1509 = vunpack.c.l.b16 %v1475
      %v1510 = vunpack.c.l.b16 %v1476
      %v1511 = vunpack.c.l.b16 %v1477
      %v1512 = vunpack.c.l.b16 %v1478
      %v1513 = vunpack.c.l.b16 %v1479
      %v1514 = vunpack.c.l.b16 %v1480
      %v1515 = vunpack.c.l.b16 %v1481
      %v1516 = vunpack.c.l.b16 %v1482
      %v1517 = vunpack.c.l.b16 %v1483
      %v1518 = vunpack.c.l.b16 %v1484
      %v1519 = vunpack.c.l.b16 %v1485
      %v1520 = vunpack.c.l.b16 %v1486
      %v1521 = vpack.c.b16 %v1506, %v1505
      %v1522 = vpack.c.b16 %v1508, %v1507
      %v1523 = vpack.c.b16 %v1510, %v1509
      %v1524 = vpack.c.b16 %v1512, %v1511
      %v1525 = vpack.c.b16 %v1514, %v1513
      %v1526 = vpack.c.b16 %v1516, %v1515
      %v1527 = vpack.c.b16 %v1518, %v1517
      %v1528 = vpack.c.b16 %v1520, %v1519
      %1537 = vmatprep.subr.bf16.mxu0 0
      %1538 = vmatpush1.bf16.msra.mxu0 %v1521
      %1539 = vmatprep.subr.bf16.mxu0 0
      %1540 = vmatpush1.bf16.msra.mxu0 %v1522
      %1541 = vmatprep.subr.bf16.mxu0 0
      %1542 = vmatpush1.bf16.msra.mxu0 %v1523
      %1543 = vmatprep.subr.bf16.mxu0 0
      %1544 = vmatpush1.bf16.msra.mxu0 %v1524
      %1545 = vmatprep.subr.bf16.mxu0 0
      %1546 = vmatpush1.bf16.msra.mxu0 %v1525
      %1547 = vmatprep.subr.bf16.mxu0 0
      %1548 = vmatpush1.bf16.msra.mxu0 %v1526
      %1549 = vmatprep.subr.bf16.mxu0 0
      %1550 = vmatpush1.bf16.msra.mxu0 %v1527
      %1551 = vmatprep.subr.bf16.mxu0 0
      %1552 = vmatpush1.bf16.msra.mxu0 %v1528
      %1553 = vmatprep.subr.bf16.mxu0 0
      %1554 = vmatpush1.bf16.msra.mxu0 0
      %1555 = vmatprep.subr.bf16.mxu0 0
      %1556 = vmatpush1.bf16.msra.mxu0 0
      %1557 = vmatprep.subr.bf16.mxu0 0
      %1558 = vmatpush1.bf16.msra.mxu0 0
      %1559 = vmatprep.subr.bf16.mxu0 0
      %1560 = vmatpush1.bf16.msra.mxu0 0
      %1561 = vmatprep.subr.bf16.mxu0 0
      %1562 = vmatpush1.bf16.msra.mxu0 0
      %1563 = vmatprep.subr.bf16.mxu0 0
      %1564 = vmatpush1.bf16.msra.mxu0 0
      %1565 = vmatprep.subr.bf16.mxu0 0
      %1566 = vmatpush1.bf16.msra.mxu0 0
      %1567 = vmatprep.subr.bf16.mxu0 0
      %1568 = vmatpush1.bf16.msra.mxu0 0
      %1569 = vmatprep.mubr.bf16.mxu0 0
      %1570 = vmatmul.mubr.bf16.gmra.mrb[0].mxu0 %v722
      %v1571 = vpop.f32.mrb[0].mxu0
      %v1572 = vadd.f32 %v1488, %v1571
      %v1573 = vpop.f32.mrb[0].mxu0
      %v1574 = vpop.f32.mrb[0].mxu0
      %v1575 = vpop.f32.mrb[0].mxu0
      %1576 = vdwg.mxu0
      %s1577 = smul.u32 %s33, 8
      %s1578 = scalar_lea.vmem %s1, %s1577
      %v1579 = vld [vmem:[%s1578] sm:$0xff]
      %v1581 = vrot.slane %v930, 7
      %v1584 = vrot.slane %v1037, 6
      %v1587 = vrot.slane %v1144, 5
      %v1590 = vrot.slane %v1251, 4
      %v1593 = vrot.slane %v1358, 3
      %v1596 = vrot.slane %v1465, 2
      %v1599 = vrot.slane %v1572, 1
      %vm1601 = vcmask 1040384
      %v1602 = vsel %vm1601, %v823, %v1581
      %vm1603 = vcmask 1041408
      %v1604 = vsel %vm1603, %v1602, %v1584
      %vm1605 = vcmask 1042432
      %v1606 = vsel %vm1605, %v1604, %v1587
      %vm1607 = vcmask 1043456
      %v1608 = vsel %vm1607, %v1606, %v1590
      %vm1609 = vcmask 1044480
      %v1610 = vsel %vm1609, %v1608, %v1593
      %vm1611 = vcmask 1045504
      %v1612 = vsel %vm1611, %v1610, %v1596
      %vm1613 = vcmask 1046528
      %v1614 = vsel %vm1613, %v1612, %v1599
      %v1615 = vld [vmem:[%s2] sm:$0xff]
      %v1616 = vld [vmem:[%s2 + $0x8] sm:$0xff]
      %v1617 = vadd.f32 %v1614, %v1615
      %v1618 = vadd.f32 %v1579, %v1616
      %v1619 = vlaneseq
      %v1620 = vshrl.u32 %v1619, 7
      %v1621 = vadd.s32 %v1620, 8
      %v1622 = vlaneseq
      %v1623 = vand.u32 %v1622, 127
      %vm1624 = vcmp.le.s32.totalorder %v1623, %v1620
      %vm1625 = vcmp.le.s32.totalorder %v1623, %v1621
      %v1626 = vld [vmem:[%s8] sm:$0x1]
      %v1627 = vld [vmem:[%s9] sm:$0x1]
      %vm1628 = vcmask 261120
      %v1629 = vsel %vm1628, %v1617, 0.0
      %1630 = vadd.xlane.f32.xlu0 %v1629
      %v1631 = vpop.xlane.xlu0 %1630
      %v1632 = vsel %vm1628, %v1618, 0.0
      %1633 = vadd.xlane.f32.xlu0 %v1632
      %v1634 = vpop.xlane.xlu0 %1633
      %v1635 = vrcp.pop 32.0
      %v1636 = vmul.f32 %v1631, %v1635
      %v1637 = vmul.f32 %v1634, %v1635
      %v1638 = vsub.f32 %v1617, %v1636
      %v1639 = vsub.f32 %v1618, %v1637
      %v1640 = vmul.f32 %v1638, %v1638
      %v1641 = vmul.f32 %v1639, %v1639
      %v1642 = vsel %vm1628, %v1640, 0.0
      %1643 = vadd.xlane.f32.xlu0 %v1642
      %v1644 = vpop.xlane.xlu0 %1643
      %v1645 = vsel %vm1628, %v1641, 0.0
      %1646 = vadd.xlane.f32.xlu0 %v1645
      %v1647 = vpop.xlane.xlu0 %1646
      %v1648 = vmul.f32 %v1644, %v1635
      %v1649 = vmul.f32 %v1647, %v1635
      %v1650 = vadd.f32 %v1648, 1e-05
      %v1651 = vadd.f32 %v1649, 1e-05
      %v1652 = vrsqrt.pop %v1650
      %v1653 = vrsqrt.pop %v1651
      %v1654 = vmul.f32 %v1638, %v1652
      %v1655 = vmul.f32 %v1639, %v1653
      %v1657 = vlaneseq
      %v1658 = vshrl.u32 %v1657, 7
      %v1659 = vsub.s32 0, %v1658
      %v1660 = vrot.slane %v1626, %v1659
      %v1662 = vmul.f32 %v1654, %v1660
      %v1663 = vmul.f32 %v1655, %v1660
      %v1665 = vlaneseq
      %v1666 = vshrl.u32 %v1665, 7
      %v1667 = vsub.s32 0, %v1666
      %v1668 = vrot.slane %v1627, %v1667
      %v1670 = vadd.f32 %v1662, %v1668
      %v1671 = vadd.f32 %v1663, %v1668
      %v1672 = vpack.c.bf16 %v1671, %v1670
      %v1673 = vld [vmem:[%s10] sm:$0xf]
      %v1674 = vld [vmem:[%s10 + $0x4] sm:$0xf]
      %v1675 = vld [vmem:[%s10 + $0x8] sm:$0xf]
      %v1676 = vld [vmem:[%s10 + $0xc] sm:$0xf]
      %v1677 = vld [vmem:[%s11] sm:$0x1]
      %v1679 = vlaneseq
      %v1680 = vshrl.u32 %v1679, 7
      %v1681 = vsub.s32 0, %v1680
      %v1682 = vrot.slane %v1677, %v1681
      %v1688 = vunpack.c.l.b16 %v1673
      %v1689 = vunpack.c.l.b16 %v1674
      %v1690 = vunpack.c.l.b16 %v1675
      %v1691 = vunpack.c.l.b16 %v1676
      %v1692 = vpack.c.b16 %v1689, %v1688
      %v1693 = vpack.c.b16 %v1691, %v1690
      %v1697 = vsel %vm1628, %v1672, 0
      %1699 = vmatprep.subr.bf16.mxu0 0
      %1700 = vmatpush1.bf16.msra.mxu0 %v1692
      %1701 = vmatprep.subr.bf16.mxu0 0
      %1702 = vmatpush1.bf16.msra.mxu0 %v1693
      %1703 = vmatprep.subr.bf16.mxu0 0
      %1704 = vmatpush1.bf16.msra.mxu0 0
      %1705 = vmatprep.subr.bf16.mxu0 0
      %1706 = vmatpush1.bf16.msra.mxu0 0
      %1707 = vmatprep.subr.bf16.mxu0 0
      %1708 = vmatpush1.bf16.msra.mxu0 0
      %1709 = vmatprep.subr.bf16.mxu0 0
      %1710 = vmatpush1.bf16.msra.mxu0 0
      %1711 = vmatprep.subr.bf16.mxu0 0
      %1712 = vmatpush1.bf16.msra.mxu0 0
      %1713 = vmatprep.subr.bf16.mxu0 0
      %1714 = vmatpush1.bf16.msra.mxu0 0
      %1715 = vmatprep.subr.bf16.mxu0 0
      %1716 = vmatpush1.bf16.msra.mxu0 0
      %1717 = vmatprep.subr.bf16.mxu0 0
      %1718 = vmatpush1.bf16.msra.mxu0 0
      %1719 = vmatprep.subr.bf16.mxu0 0
      %1720 = vmatpush1.bf16.msra.mxu0 0
      %1721 = vmatprep.subr.bf16.mxu0 0
      %1722 = vmatpush1.bf16.msra.mxu0 0
      %1723 = vmatprep.subr.bf16.mxu0 0
      %1724 = vmatpush1.bf16.msra.mxu0 0
      %1725 = vmatprep.subr.bf16.mxu0 0
      %1726 = vmatpush1.bf16.msra.mxu0 0
      %1727 = vmatprep.subr.bf16.mxu0 0
      %1728 = vmatpush1.bf16.msra.mxu0 0
      %1729 = vmatprep.subr.bf16.mxu0 0
      %1730 = vmatpush1.bf16.msra.mxu0 0
      %1731 = vmatprep.mubr.bf16.mxu0 0
      %1732 = vmatmul.mubr.bf16.gmra.mrb[0].mxu0 %v1697
      %v1733 = vpop.f32.mrb[0].mxu0
      %v1734 = vadd.f32 %v1682, %v1733
      %v1735 = vpop.f32.mrb[0].mxu0
      %v1736 = vpop.f32.mrb[0].mxu0
      %v1737 = vadd.f32 %v1682, %v1736
      %v1738 = vpop.f32.mrb[0].mxu0
      %1739 = vdwg.mxu0
      %v1740 = vmul.f32 %v1734, 0.35355338
      %v1741 = vmul.f32 %v1737, 0.35355338
      %v1742 = vpack.c.bf16 %v1741, %v1740
      %v1743 = vpack.c.bf16 %v1737, %v1734
      %1745 = vrot.lane.b32.xlu0 %v1743, 96
      %v1746 = vpop.permute.xlu0 %1745
      %vm1747 = vcmask 64512
      %v1749 = vsel %vm1747, %v1742, 0
      %v1752 = vsel %vm1747, %v1746, 0
      %1754 = vmatprep.subr.bf16.mxu0 0
      %1755 = vmatpush1.bf16.xpose.msra.mxu0 %v1752
      %1756 = vmatprep.subr.bf16.mxu0 0
      %1757 = vmatpush1.bf16.xpose.msra.mxu0 0
      %1758 = vmatprep.subr.bf16.mxu0 0
      %1759 = vmatpush1.bf16.xpose.msra.mxu0 0
      %1760 = vmatprep.subr.bf16.mxu0 0
      %1761 = vmatpush1.bf16.xpose.msra.mxu0 0
      %1762 = vmatprep.subr.bf16.mxu0 0
      %1763 = vmatpush1.bf16.xpose.msra.mxu0 0
      %1764 = vmatprep.subr.bf16.mxu0 0
      %1765 = vmatpush1.bf16.xpose.msra.mxu0 0
      %1766 = vmatprep.subr.bf16.mxu0 0
      %1767 = vmatpush1.bf16.xpose.msra.mxu0 0
      %1768 = vmatprep.subr.bf16.mxu0 0
      %1769 = vmatpush1.bf16.xpose.msra.mxu0 0
      %1770 = vmatprep.subr.bf16.mxu0 0
      %1771 = vmatpush1.bf16.xpose.msra.mxu0 0
      %1772 = vmatprep.subr.bf16.mxu0 0
      %1773 = vmatpush1.bf16.xpose.msra.mxu0 0
      %1774 = vmatprep.subr.bf16.mxu0 0
      %1775 = vmatpush1.bf16.xpose.msra.mxu0 0
      %1776 = vmatprep.subr.bf16.mxu0 0
      %1777 = vmatpush1.bf16.xpose.msra.mxu0 0
      %1778 = vmatprep.subr.bf16.mxu0 0
      %1779 = vmatpush1.bf16.xpose.msra.mxu0 0
      %1780 = vmatprep.subr.bf16.mxu0 0
      %1781 = vmatpush1.bf16.xpose.msra.mxu0 0
      %1782 = vmatprep.subr.bf16.mxu0 0
      %1783 = vmatpush1.bf16.xpose.msra.mxu0 0
      %1784 = vmatprep.subr.bf16.mxu0 0
      %1785 = vmatpush1.bf16.xpose.msra.mxu0 0
      %1786 = vmatprep.mubr.bf16.mxu0 0
      %1787 = vmatmul.mubr.bf16.gmra.mrb[0].mxu0 %v1749
      %v1788 = vpop.f32.mrb[0].mxu0
      %v1789 = vadd.f32 0.0, %v1788
      %v1790 = vpop.f32.mrb[0].mxu0
      %v1791 = vpop.f32.mrb[0].mxu0
      %v1792 = vadd.f32 0.0, %v1791
      %v1793 = vpop.f32.mrb[0].mxu0
      %1794 = vdwg.mxu0
      %v1795 = vsel %vm1624, %v1789, -1e+09
      %v1796 = vsel %vm1625, %v1792, -1e+09
      %v1797 = vsel %vm677, %v1795, -inf
      %1798 = vmax.xlane.f32.xlu0 %v1797
      %v1799 = vpop.xlane.xlu0 %1798
      %v1800 = vsel %vm677, %v1796, -inf
      %1801 = vmax.xlane.f32.xlu0 %v1800
      %v1802 = vpop.xlane.xlu0 %1801
      %v1803 = vsub.f32 %v1795, %v1799
      %v1804 = vsub.f32 %v1796, %v1802
      %v1805 = vmul.f32 %v1803, 1.442695
      %v1806 = vpow.pop %v1805
      %v1807 = vmul.f32 %v1804, 1.442695
      %v1808 = vpow.pop %v1807
      %v1809 = vsel %vm677, %v1806, 0.0
      %1810 = vadd.xlane.f32.xlu0 %v1809
      %v1811 = vpop.xlane.xlu0 %1810
      %v1812 = vsel %vm677, %v1808, 0.0
      %1813 = vadd.xlane.f32.xlu0 %v1812
      %v1814 = vpop.xlane.xlu0 %1813
      %v1815 = vrcp.pop %v1811
      %v1816 = vrcp.pop %v1814
      %v1817 = vmul.f32 %v1806, %v1815
      %v1818 = vmul.f32 %v1808, %v1816
      %v1819 = vpack.c.bf16 %v1818, %v1817
      %1820 = vrot.lane.b32.xlu0 %v1743, 64
      %v1821 = vpop.permute.xlu0 %1820
      %v1824 = vsel %vm677, %v1819, 0
      %1826 = vmatprep.subr.bf16.mxu0 0
      %1827 = vmatpush1.bf16.msra.mxu0 %v1821
      %1828 = vmatprep.subr.bf16.mxu0 0
      %1829 = vmatpush1.bf16.msra.mxu0 0
      %1830 = vmatprep.subr.bf16.mxu0 0
      %1831 = vmatpush1.bf16.msra.mxu0 0
      %1832 = vmatprep.subr.bf16.mxu0 0
      %1833 = vmatpush1.bf16.msra.mxu0 0
      %1834 = vmatprep.subr.bf16.mxu0 0
      %1835 = vmatpush1.bf16.msra.mxu0 0
      %1836 = vmatprep.subr.bf16.mxu0 0
      %1837 = vmatpush1.bf16.msra.mxu0 0
      %1838 = vmatprep.subr.bf16.mxu0 0
      %1839 = vmatpush1.bf16.msra.mxu0 0
      %1840 = vmatprep.subr.bf16.mxu0 0
      %1841 = vmatpush1.bf16.msra.mxu0 0
      %1842 = vmatprep.subr.bf16.mxu0 0
      %1843 = vmatpush1.bf16.msra.mxu0 0
      %1844 = vmatprep.subr.bf16.mxu0 0
      %1845 = vmatpush1.bf16.msra.mxu0 0
      %1846 = vmatprep.subr.bf16.mxu0 0
      %1847 = vmatpush1.bf16.msra.mxu0 0
      %1848 = vmatprep.subr.bf16.mxu0 0
      %1849 = vmatpush1.bf16.msra.mxu0 0
      %1850 = vmatprep.subr.bf16.mxu0 0
      %1851 = vmatpush1.bf16.msra.mxu0 0
      %1852 = vmatprep.subr.bf16.mxu0 0
      %1853 = vmatpush1.bf16.msra.mxu0 0
      %1854 = vmatprep.subr.bf16.mxu0 0
      %1855 = vmatpush1.bf16.msra.mxu0 0
      %1856 = vmatprep.subr.bf16.mxu0 0
      %1857 = vmatpush1.bf16.msra.mxu0 0
      %1858 = vmatprep.mubr.bf16.mxu0 0
      %1859 = vmatmul.mubr.bf16.gmra.mrb[0].mxu0 %v1824
      %v1860 = vpop.f32.mrb[0].mxu0
      %v1861 = vadd.f32 0.0, %v1860
      %v1862 = vpop.f32.mrb[0].mxu0
      %v1863 = vpop.f32.mrb[0].mxu0
      %v1864 = vadd.f32 0.0, %v1863
      %v1865 = vpop.f32.mrb[0].mxu0
      %1866 = vdwg.mxu0
      %1868 = vrot.lane.b32.xlu0 %v1742, 120
      %v1869 = vpop.permute.xlu0 %1868
      %1870 = vrot.lane.b32.xlu0 %v1743, 88
      %v1871 = vpop.permute.xlu0 %1870
      %v1873 = vsel %vm1747, %v1869, 0
      %v1876 = vsel %vm1747, %v1871, 0
      %1878 = vmatprep.subr.bf16.mxu0 0
      %1879 = vmatpush1.bf16.xpose.msra.mxu0 %v1876
      %1880 = vmatprep.subr.bf16.mxu0 0
      %1881 = vmatpush1.bf16.xpose.msra.mxu0 0
      %1882 = vmatprep.subr.bf16.mxu0 0
      %1883 = vmatpush1.bf16.xpose.msra.mxu0 0
      %1884 = vmatprep.subr.bf16.mxu0 0
      %1885 = vmatpush1.bf16.xpose.msra.mxu0 0
      %1886 = vmatprep.subr.bf16.mxu0 0
      %1887 = vmatpush1.bf16.xpose.msra.mxu0 0
      %1888 = vmatprep.subr.bf16.mxu0 0
      %1889 = vmatpush1.bf16.xpose.msra.mxu0 0
      %1890 = vmatprep.subr.bf16.mxu0 0
      %1891 = vmatpush1.bf16.xpose.msra.mxu0 0
      %1892 = vmatprep.subr.bf16.mxu0 0
      %1893 = vmatpush1.bf16.xpose.msra.mxu0 0
      %1894 = vmatprep.subr.bf16.mxu0 0
      %1895 = vmatpush1.bf16.xpose.msra.mxu0 0
      %1896 = vmatprep.subr.bf16.mxu0 0
      %1897 = vmatpush1.bf16.xpose.msra.mxu0 0
      %1898 = vmatprep.subr.bf16.mxu0 0
      %1899 = vmatpush1.bf16.xpose.msra.mxu0 0
      %1900 = vmatprep.subr.bf16.mxu0 0
      %1901 = vmatpush1.bf16.xpose.msra.mxu0 0
      %1902 = vmatprep.subr.bf16.mxu0 0
      %1903 = vmatpush1.bf16.xpose.msra.mxu0 0
      %1904 = vmatprep.subr.bf16.mxu0 0
      %1905 = vmatpush1.bf16.xpose.msra.mxu0 0
      %1906 = vmatprep.subr.bf16.mxu0 0
      %1907 = vmatpush1.bf16.xpose.msra.mxu0 0
      %1908 = vmatprep.subr.bf16.mxu0 0
      %1909 = vmatpush1.bf16.xpose.msra.mxu0 0
      %1910 = vmatprep.mubr.bf16.mxu0 0
      %1911 = vmatmul.mubr.bf16.gmra.mrb[0].mxu0 %v1873
      %v1912 = vpop.f32.mrb[0].mxu0
      %v1913 = vadd.f32 0.0, %v1912
      %v1914 = vpop.f32.mrb[0].mxu0
      %v1915 = vpop.f32.mrb[0].mxu0
      %v1916 = vadd.f32 0.0, %v1915
      %v1917 = vpop.f32.mrb[0].mxu0
      %1918 = vdwg.mxu0
      %v1919 = vsel %vm1624, %v1913, -1e+09
      %v1920 = vsel %vm1625, %v1916, -1e+09
      %v1921 = vsel %vm677, %v1919, -inf
      %1922 = vmax.xlane.f32.xlu0 %v1921
      %v1923 = vpop.xlane.xlu0 %1922
      %v1924 = vsel %vm677, %v1920, -inf
      %1925 = vmax.xlane.f32.xlu0 %v1924
      %v1926 = vpop.xlane.xlu0 %1925
      %v1927 = vsub.f32 %v1919, %v1923
      %v1928 = vsub.f32 %v1920, %v1926
      %v1929 = vmul.f32 %v1927, 1.442695
      %v1930 = vpow.pop %v1929
      %v1931 = vmul.f32 %v1928, 1.442695
      %v1932 = vpow.pop %v1931
      %v1933 = vsel %vm677, %v1930, 0.0
      %1934 = vadd.xlane.f32.xlu0 %v1933
      %v1935 = vpop.xlane.xlu0 %1934
      %v1936 = vsel %vm677, %v1932, 0.0
      %1937 = vadd.xlane.f32.xlu0 %v1936
      %v1938 = vpop.xlane.xlu0 %1937
      %v1939 = vrcp.pop %v1935
      %v1940 = vrcp.pop %v1938
      %v1941 = vmul.f32 %v1930, %v1939
      %v1942 = vmul.f32 %v1932, %v1940
      %v1943 = vpack.c.bf16 %v1942, %v1941
      %1944 = vrot.lane.b32.xlu0 %v1743, 56
      %v1945 = vpop.permute.xlu0 %1944
      %v1948 = vsel %vm677, %v1943, 0
      %1950 = vmatprep.subr.bf16.mxu0 0
      %1951 = vmatpush1.bf16.msra.mxu0 %v1945
      %1952 = vmatprep.subr.bf16.mxu0 0
      %1953 = vmatpush1.bf16.msra.mxu0 0
      %1954 = vmatprep.subr.bf16.mxu0 0
      %1955 = vmatpush1.bf16.msra.mxu0 0
      %1956 = vmatprep.subr.bf16.mxu0 0
      %1957 = vmatpush1.bf16.msra.mxu0 0
      %1958 = vmatprep.subr.bf16.mxu0 0
      %1959 = vmatpush1.bf16.msra.mxu0 0
      %1960 = vmatprep.subr.bf16.mxu0 0
      %1961 = vmatpush1.bf16.msra.mxu0 0
      %1962 = vmatprep.subr.bf16.mxu0 0
      %1963 = vmatpush1.bf16.msra.mxu0 0
      %1964 = vmatprep.subr.bf16.mxu0 0
      %1965 = vmatpush1.bf16.msra.mxu0 0
      %1966 = vmatprep.subr.bf16.mxu0 0
      %1967 = vmatpush1.bf16.msra.mxu0 0
      %1968 = vmatprep.subr.bf16.mxu0 0
      %1969 = vmatpush1.bf16.msra.mxu0 0
      %1970 = vmatprep.subr.bf16.mxu0 0
      %1971 = vmatpush1.bf16.msra.mxu0 0
      %1972 = vmatprep.subr.bf16.mxu0 0
      %1973 = vmatpush1.bf16.msra.mxu0 0
      %1974 = vmatprep.subr.bf16.mxu0 0
      %1975 = vmatpush1.bf16.msra.mxu0 0
      %1976 = vmatprep.subr.bf16.mxu0 0
      %1977 = vmatpush1.bf16.msra.mxu0 0
      %1978 = vmatprep.subr.bf16.mxu0 0
      %1979 = vmatpush1.bf16.msra.mxu0 0
      %1980 = vmatprep.subr.bf16.mxu0 0
      %1981 = vmatpush1.bf16.msra.mxu0 0
      %1982 = vmatprep.mubr.bf16.mxu0 0
      %1983 = vmatmul.mubr.bf16.gmra.mrb[0].mxu0 %v1948
      %v1984 = vpop.f32.mrb[0].mxu0
      %v1985 = vadd.f32 0.0, %v1984
      %v1986 = vpop.f32.mrb[0].mxu0
      %v1987 = vpop.f32.mrb[0].mxu0
      %v1988 = vadd.f32 0.0, %v1987
      %v1989 = vpop.f32.mrb[0].mxu0
      %1990 = vdwg.mxu0
      %1991 = vrot.lane.b32.xlu0 %v1742, 112
      %v1992 = vpop.permute.xlu0 %1991
      %1993 = vrot.lane.b32.xlu0 %v1743, 80
      %v1994 = vpop.permute.xlu0 %1993
      %v1996 = vsel %vm1747, %v1992, 0
      %v1999 = vsel %vm1747, %v1994, 0
      %2001 = vmatprep.subr.bf16.mxu0 0
      %2002 = vmatpush1.bf16.xpose.msra.mxu0 %v1999
      %2003 = vmatprep.subr.bf16.mxu0 0
      %2004 = vmatpush1.bf16.xpose.msra.mxu0 0
      %2005 = vmatprep.subr.bf16.mxu0 0
      %2006 = vmatpush1.bf16.xpose.msra.mxu0 0
      %2007 = vmatprep.subr.bf16.mxu0 0
      %2008 = vmatpush1.bf16.xpose.msra.mxu0 0
      %2009 = vmatprep.subr.bf16.mxu0 0
      %2010 = vmatpush1.bf16.xpose.msra.mxu0 0
      %2011 = vmatprep.subr.bf16.mxu0 0
      %2012 = vmatpush1.bf16.xpose.msra.mxu0 0
      %2013 = vmatprep.subr.bf16.mxu0 0
      %2014 = vmatpush1.bf16.xpose.msra.mxu0 0
      %2015 = vmatprep.subr.bf16.mxu0 0
      %2016 = vmatpush1.bf16.xpose.msra.mxu0 0
      %2017 = vmatprep.subr.bf16.mxu0 0
      %2018 = vmatpush1.bf16.xpose.msra.mxu0 0
      %2019 = vmatprep.subr.bf16.mxu0 0
      %2020 = vmatpush1.bf16.xpose.msra.mxu0 0
      %2021 = vmatprep.subr.bf16.mxu0 0
      %2022 = vmatpush1.bf16.xpose.msra.mxu0 0
      %2023 = vmatprep.subr.bf16.mxu0 0
      %2024 = vmatpush1.bf16.xpose.msra.mxu0 0
      %2025 = vmatprep.subr.bf16.mxu0 0
      %2026 = vmatpush1.bf16.xpose.msra.mxu0 0
      %2027 = vmatprep.subr.bf16.mxu0 0
      %2028 = vmatpush1.bf16.xpose.msra.mxu0 0
      %2029 = vmatprep.subr.bf16.mxu0 0
      %2030 = vmatpush1.bf16.xpose.msra.mxu0 0
      %2031 = vmatprep.subr.bf16.mxu0 0
      %2032 = vmatpush1.bf16.xpose.msra.mxu0 0
      %2033 = vmatprep.mubr.bf16.mxu0 0
      %2034 = vmatmul.mubr.bf16.gmra.mrb[0].mxu0 %v1996
      %v2035 = vpop.f32.mrb[0].mxu0
      %v2036 = vadd.f32 0.0, %v2035
      %v2037 = vpop.f32.mrb[0].mxu0
      %v2038 = vpop.f32.mrb[0].mxu0
      %v2039 = vadd.f32 0.0, %v2038
      %v2040 = vpop.f32.mrb[0].mxu0
      %2041 = vdwg.mxu0
      %v2042 = vsel %vm1624, %v2036, -1e+09
      %v2043 = vsel %vm1625, %v2039, -1e+09
      %v2044 = vsel %vm677, %v2042, -inf
      %2045 = vmax.xlane.f32.xlu0 %v2044
      %v2046 = vpop.xlane.xlu0 %2045
      %v2047 = vsel %vm677, %v2043, -inf
      %2048 = vmax.xlane.f32.xlu0 %v2047
      %v2049 = vpop.xlane.xlu0 %2048
      %v2050 = vsub.f32 %v2042, %v2046
      %v2051 = vsub.f32 %v2043, %v2049
      %v2052 = vmul.f32 %v2050, 1.442695
      %v2053 = vpow.pop %v2052
      %v2054 = vmul.f32 %v2051, 1.442695
      %v2055 = vpow.pop %v2054
      %v2056 = vsel %vm677, %v2053, 0.0
      %2057 = vadd.xlane.f32.xlu0 %v2056
      %v2058 = vpop.xlane.xlu0 %2057
      %v2059 = vsel %vm677, %v2055, 0.0
      %2060 = vadd.xlane.f32.xlu0 %v2059
      %v2061 = vpop.xlane.xlu0 %2060
      %v2062 = vrcp.pop %v2058
      %v2063 = vrcp.pop %v2061
      %v2064 = vmul.f32 %v2053, %v2062
      %v2065 = vmul.f32 %v2055, %v2063
      %v2066 = vpack.c.bf16 %v2065, %v2064
      %2067 = vrot.lane.b32.xlu0 %v1743, 48
      %v2068 = vpop.permute.xlu0 %2067
      %v2071 = vsel %vm677, %v2066, 0
      %2073 = vmatprep.subr.bf16.mxu0 0
      %2074 = vmatpush1.bf16.msra.mxu0 %v2068
      %2075 = vmatprep.subr.bf16.mxu0 0
      %2076 = vmatpush1.bf16.msra.mxu0 0
      %2077 = vmatprep.subr.bf16.mxu0 0
      %2078 = vmatpush1.bf16.msra.mxu0 0
      %2079 = vmatprep.subr.bf16.mxu0 0
      %2080 = vmatpush1.bf16.msra.mxu0 0
      %2081 = vmatprep.subr.bf16.mxu0 0
      %2082 = vmatpush1.bf16.msra.mxu0 0
      %2083 = vmatprep.subr.bf16.mxu0 0
      %2084 = vmatpush1.bf16.msra.mxu0 0
      %2085 = vmatprep.subr.bf16.mxu0 0
      %2086 = vmatpush1.bf16.msra.mxu0 0
      %2087 = vmatprep.subr.bf16.mxu0 0
      %2088 = vmatpush1.bf16.msra.mxu0 0
      %2089 = vmatprep.subr.bf16.mxu0 0
      %2090 = vmatpush1.bf16.msra.mxu0 0
      %2091 = vmatprep.subr.bf16.mxu0 0
      %2092 = vmatpush1.bf16.msra.mxu0 0
      %2093 = vmatprep.subr.bf16.mxu0 0
      %2094 = vmatpush1.bf16.msra.mxu0 0
      %2095 = vmatprep.subr.bf16.mxu0 0
      %2096 = vmatpush1.bf16.msra.mxu0 0
      %2097 = vmatprep.subr.bf16.mxu0 0
      %2098 = vmatpush1.bf16.msra.mxu0 0
      %2099 = vmatprep.subr.bf16.mxu0 0
      %2100 = vmatpush1.bf16.msra.mxu0 0
      %2101 = vmatprep.subr.bf16.mxu0 0
      %2102 = vmatpush1.bf16.msra.mxu0 0
      %2103 = vmatprep.subr.bf16.mxu0 0
      %2104 = vmatpush1.bf16.msra.mxu0 0
      %2105 = vmatprep.mubr.bf16.mxu0 0
      %2106 = vmatmul.mubr.bf16.gmra.mrb[0].mxu0 %v2071
      %v2107 = vpop.f32.mrb[0].mxu0
      %v2108 = vadd.f32 0.0, %v2107
      %v2109 = vpop.f32.mrb[0].mxu0
      %v2110 = vpop.f32.mrb[0].mxu0
      %v2111 = vadd.f32 0.0, %v2110
      %v2112 = vpop.f32.mrb[0].mxu0
      %2113 = vdwg.mxu0
      %2114 = vrot.lane.b32.xlu0 %v1742, 104
      %v2115 = vpop.permute.xlu0 %2114
      %2116 = vrot.lane.b32.xlu0 %v1743, 72
      %v2117 = vpop.permute.xlu0 %2116
      %v2119 = vsel %vm1747, %v2115, 0
      %v2122 = vsel %vm1747, %v2117, 0
      %2124 = vmatprep.subr.bf16.mxu0 0
      %2125 = vmatpush1.bf16.xpose.msra.mxu0 %v2122
      %2126 = vmatprep.subr.bf16.mxu0 0
      %2127 = vmatpush1.bf16.xpose.msra.mxu0 0
      %2128 = vmatprep.subr.bf16.mxu0 0
      %2129 = vmatpush1.bf16.xpose.msra.mxu0 0
      %2130 = vmatprep.subr.bf16.mxu0 0
      %2131 = vmatpush1.bf16.xpose.msra.mxu0 0
      %2132 = vmatprep.subr.bf16.mxu0 0
      %2133 = vmatpush1.bf16.xpose.msra.mxu0 0
      %2134 = vmatprep.subr.bf16.mxu0 0
      %2135 = vmatpush1.bf16.xpose.msra.mxu0 0
      %2136 = vmatprep.subr.bf16.mxu0 0
      %2137 = vmatpush1.bf16.xpose.msra.mxu0 0
      %2138 = vmatprep.subr.bf16.mxu0 0
      %2139 = vmatpush1.bf16.xpose.msra.mxu0 0
      %2140 = vmatprep.subr.bf16.mxu0 0
      %2141 = vmatpush1.bf16.xpose.msra.mxu0 0
      %2142 = vmatprep.subr.bf16.mxu0 0
      %2143 = vmatpush1.bf16.xpose.msra.mxu0 0
      %2144 = vmatprep.subr.bf16.mxu0 0
      %2145 = vmatpush1.bf16.xpose.msra.mxu0 0
      %2146 = vmatprep.subr.bf16.mxu0 0
      %2147 = vmatpush1.bf16.xpose.msra.mxu0 0
      %2148 = vmatprep.subr.bf16.mxu0 0
      %2149 = vmatpush1.bf16.xpose.msra.mxu0 0
      %2150 = vmatprep.subr.bf16.mxu0 0
      %2151 = vmatpush1.bf16.xpose.msra.mxu0 0
      %2152 = vmatprep.subr.bf16.mxu0 0
      %2153 = vmatpush1.bf16.xpose.msra.mxu0 0
      %2154 = vmatprep.subr.bf16.mxu0 0
      %2155 = vmatpush1.bf16.xpose.msra.mxu0 0
      %2156 = vmatprep.mubr.bf16.mxu0 0
      %2157 = vmatmul.mubr.bf16.gmra.mrb[0].mxu0 %v2119
      %v2158 = vpop.f32.mrb[0].mxu0
      %v2159 = vadd.f32 0.0, %v2158
      %v2160 = vpop.f32.mrb[0].mxu0
      %v2161 = vpop.f32.mrb[0].mxu0
      %v2162 = vadd.f32 0.0, %v2161
      %v2163 = vpop.f32.mrb[0].mxu0
      %2164 = vdwg.mxu0
      %v2165 = vsel %vm1624, %v2159, -1e+09
      %v2166 = vsel %vm1625, %v2162, -1e+09
      %v2167 = vsel %vm677, %v2165, -inf
      %2168 = vmax.xlane.f32.xlu0 %v2167
      %v2169 = vpop.xlane.xlu0 %2168
      %v2170 = vsel %vm677, %v2166, -inf
      %2171 = vmax.xlane.f32.xlu0 %v2170
      %v2172 = vpop.xlane.xlu0 %2171
      %v2173 = vsub.f32 %v2165, %v2169
      %v2174 = vsub.f32 %v2166, %v2172
      %v2175 = vmul.f32 %v2173, 1.442695
      %v2176 = vpow.pop %v2175
      %v2177 = vmul.f32 %v2174, 1.442695
      %v2178 = vpow.pop %v2177
      %v2179 = vsel %vm677, %v2176, 0.0
      %2180 = vadd.xlane.f32.xlu0 %v2179
      %v2181 = vpop.xlane.xlu0 %2180
      %v2182 = vsel %vm677, %v2178, 0.0
      %2183 = vadd.xlane.f32.xlu0 %v2182
      %v2184 = vpop.xlane.xlu0 %2183
      %v2185 = vrcp.pop %v2181
      %v2186 = vrcp.pop %v2184
      %v2187 = vmul.f32 %v2176, %v2185
      %v2188 = vmul.f32 %v2178, %v2186
      %v2189 = vpack.c.bf16 %v2188, %v2187
      %2190 = vrot.lane.b32.xlu0 %v1743, 40
      %v2191 = vpop.permute.xlu0 %2190
      %v2194 = vsel %vm677, %v2189, 0
      %2196 = vmatprep.subr.bf16.mxu0 0
      %2197 = vmatpush1.bf16.msra.mxu0 %v2191
      %2198 = vmatprep.subr.bf16.mxu0 0
      %2199 = vmatpush1.bf16.msra.mxu0 0
      %2200 = vmatprep.subr.bf16.mxu0 0
      %2201 = vmatpush1.bf16.msra.mxu0 0
      %2202 = vmatprep.subr.bf16.mxu0 0
      %2203 = vmatpush1.bf16.msra.mxu0 0
      %2204 = vmatprep.subr.bf16.mxu0 0
      %2205 = vmatpush1.bf16.msra.mxu0 0
      %2206 = vmatprep.subr.bf16.mxu0 0
      %2207 = vmatpush1.bf16.msra.mxu0 0
      %2208 = vmatprep.subr.bf16.mxu0 0
      %2209 = vmatpush1.bf16.msra.mxu0 0
      %2210 = vmatprep.subr.bf16.mxu0 0
      %2211 = vmatpush1.bf16.msra.mxu0 0
      %2212 = vmatprep.subr.bf16.mxu0 0
      %2213 = vmatpush1.bf16.msra.mxu0 0
      %2214 = vmatprep.subr.bf16.mxu0 0
      %2215 = vmatpush1.bf16.msra.mxu0 0
      %2216 = vmatprep.subr.bf16.mxu0 0
      %2217 = vmatpush1.bf16.msra.mxu0 0
      %2218 = vmatprep.subr.bf16.mxu0 0
      %2219 = vmatpush1.bf16.msra.mxu0 0
      %2220 = vmatprep.subr.bf16.mxu0 0
      %2221 = vmatpush1.bf16.msra.mxu0 0
      %2222 = vmatprep.subr.bf16.mxu0 0
      %2223 = vmatpush1.bf16.msra.mxu0 0
      %2224 = vmatprep.subr.bf16.mxu0 0
      %2225 = vmatpush1.bf16.msra.mxu0 0
      %2226 = vmatprep.subr.bf16.mxu0 0
      %2227 = vmatpush1.bf16.msra.mxu0 0
      %2228 = vmatprep.mubr.bf16.mxu0 0
      %2229 = vmatmul.mubr.bf16.gmra.mrb[0].mxu0 %v2194
      %v2230 = vpop.f32.mrb[0].mxu0
      %v2231 = vadd.f32 0.0, %v2230
      %v2232 = vpop.f32.mrb[0].mxu0
      %v2233 = vpop.f32.mrb[0].mxu0
      %v2234 = vadd.f32 0.0, %v2233
      %v2235 = vpop.f32.mrb[0].mxu0
      %2236 = vdwg.mxu0
      %2239 = vrot.lane.b32.xlu0 %v1985, 8
      %v2240 = vpop.permute.xlu0 %2239
      %2241 = vrot.lane.b32.xlu0 %v1988, 8
      %v2242 = vpop.permute.xlu0 %2241
      %2247 = vrot.lane.b32.xlu0 %v2108, 16
      %v2248 = vpop.permute.xlu0 %2247
      %2249 = vrot.lane.b32.xlu0 %v2111, 16
      %v2250 = vpop.permute.xlu0 %2249
      %2255 = vrot.lane.b32.xlu0 %v2231, 24
      %v2256 = vpop.permute.xlu0 %2255
      %2257 = vrot.lane.b32.xlu0 %v2234, 24
      %v2258 = vpop.permute.xlu0 %2257
      %v2261 = vsel %vm1747, %v1861, %v2240
      %v2262 = vsel %vm1747, %v1864, %v2242
      %v2263 = vsel %vm677, %v2261, %v2248
      %v2264 = vsel %vm677, %v2262, %v2250
      %vm2265 = vcmask 195584
      %v2266 = vsel %vm2265, %v2263, %v2256
      %v2267 = vsel %vm2265, %v2264, %v2258
      %v2268 = vpack.c.bf16 %v2267, %v2266
      %v2269 = vld [vmem:[%s12] sm:$0xf]
      %v2270 = vld [vmem:[%s12 + $0x4] sm:$0xf]
      %v2271 = vld [vmem:[%s12 + $0x8] sm:$0xf]
      %v2272 = vld [vmem:[%s12 + $0xc] sm:$0xf]
      %v2277 = vunpack.c.l.b16 %v2269
      %v2278 = vunpack.c.l.b16 %v2270
      %v2279 = vunpack.c.l.b16 %v2271
      %v2280 = vunpack.c.l.b16 %v2272
      %v2281 = vpack.c.b16 %v2278, %v2277
      %v2282 = vpack.c.b16 %v2280, %v2279
      %v2286 = vsel %vm1628, %v2268, 0
      %2288 = vmatprep.subr.bf16.mxu0 0
      %2289 = vmatpush1.bf16.msra.mxu0 %v2281
      %2290 = vmatprep.subr.bf16.mxu0 0
      %2291 = vmatpush1.bf16.msra.mxu0 %v2282
      %2292 = vmatprep.subr.bf16.mxu0 0
      %2293 = vmatpush1.bf16.msra.mxu0 0
      %2294 = vmatprep.subr.bf16.mxu0 0
      %2295 = vmatpush1.bf16.msra.mxu0 0
      %2296 = vmatprep.subr.bf16.mxu0 0
      %2297 = vmatpush1.bf16.msra.mxu0 0
      %2298 = vmatprep.subr.bf16.mxu0 0
      %2299 = vmatpush1.bf16.msra.mxu0 0
      %2300 = vmatprep.subr.bf16.mxu0 0
      %2301 = vmatpush1.bf16.msra.mxu0 0
      %2302 = vmatprep.subr.bf16.mxu0 0
      %2303 = vmatpush1.bf16.msra.mxu0 0
      %2304 = vmatprep.subr.bf16.mxu0 0
      %2305 = vmatpush1.bf16.msra.mxu0 0
      %2306 = vmatprep.subr.bf16.mxu0 0
      %2307 = vmatpush1.bf16.msra.mxu0 0
      %2308 = vmatprep.subr.bf16.mxu0 0
      %2309 = vmatpush1.bf16.msra.mxu0 0
      %2310 = vmatprep.subr.bf16.mxu0 0
      %2311 = vmatpush1.bf16.msra.mxu0 0
      %2312 = vmatprep.subr.bf16.mxu0 0
      %2313 = vmatpush1.bf16.msra.mxu0 0
      %2314 = vmatprep.subr.bf16.mxu0 0
      %2315 = vmatpush1.bf16.msra.mxu0 0
      %2316 = vmatprep.subr.bf16.mxu0 0
      %2317 = vmatpush1.bf16.msra.mxu0 0
      %2318 = vmatprep.subr.bf16.mxu0 0
      %2319 = vmatpush1.bf16.msra.mxu0 0
      %2320 = vmatprep.mubr.bf16.mxu0 0
      %2321 = vmatmul.mubr.bf16.gmra.mrb[0].mxu0 %v2286
      %v2322 = vpop.f32.mrb[0].mxu0
      %v2323 = vadd.f32 0.0, %v2322
      %v2324 = vpop.f32.mrb[0].mxu0
      %v2325 = vpop.f32.mrb[0].mxu0
      %v2326 = vadd.f32 0.0, %v2325
      %v2327 = vpop.f32.mrb[0].mxu0
      %2328 = vdwg.mxu0
      %v2329 = vadd.f32 %v1617, %v2323
      %v2330 = vadd.f32 %v1618, %v2326
      %v2331 = vld [vmem:[%s13] sm:$0x1]
      %v2333 = vlaneseq
      %v2334 = vshrl.u32 %v2333, 7
      %v2335 = vsub.s32 0, %v2334
      %v2336 = vrot.slane %v2331, %v2335
      %v2338 = vadd.f32 %v2329, %v2336
      %v2339 = vadd.f32 %v2330, %v2336
      %v2340 = vld [vmem:[%s14] sm:$0x1]
      %v2341 = vld [vmem:[%s15] sm:$0x1]
      %v2342 = vsel %vm1628, %v2338, 0.0
      %2343 = vadd.xlane.f32.xlu0 %v2342
      %v2344 = vpop.xlane.xlu0 %2343
      %v2345 = vsel %vm1628, %v2339, 0.0
      %2346 = vadd.xlane.f32.xlu0 %v2345
      %v2347 = vpop.xlane.xlu0 %2346
      %v2348 = vmul.f32 %v2344, %v1635
      %v2349 = vmul.f32 %v2347, %v1635
      %v2350 = vsub.f32 %v2338, %v2348
      %v2351 = vsub.f32 %v2339, %v2349
      %v2352 = vmul.f32 %v2350, %v2350
      %v2353 = vmul.f32 %v2351, %v2351
      %v2354 = vsel %vm1628, %v2352, 0.0
      %2355 = vadd.xlane.f32.xlu0 %v2354
      %v2356 = vpop.xlane.xlu0 %2355
      %v2357 = vsel %vm1628, %v2353, 0.0
      %2358 = vadd.xlane.f32.xlu0 %v2357
      %v2359 = vpop.xlane.xlu0 %2358
      %v2360 = vmul.f32 %v2356, %v1635
      %v2361 = vmul.f32 %v2359, %v1635
      %v2362 = vadd.f32 %v2360, 1e-05
      %v2363 = vadd.f32 %v2361, 1e-05
      %v2364 = vrsqrt.pop %v2362
      %v2365 = vrsqrt.pop %v2363
      %v2366 = vmul.f32 %v2350, %v2364
      %v2367 = vmul.f32 %v2351, %v2365
      %v2369 = vlaneseq
      %v2370 = vshrl.u32 %v2369, 7
      %v2371 = vsub.s32 0, %v2370
      %v2372 = vrot.slane %v2340, %v2371
      %v2374 = vmul.f32 %v2366, %v2372
      %v2375 = vmul.f32 %v2367, %v2372
      %v2377 = vlaneseq
      %v2378 = vshrl.u32 %v2377, 7
      %v2379 = vsub.s32 0, %v2378
      %v2380 = vrot.slane %v2341, %v2379
      %v2382 = vadd.f32 %v2374, %v2380
      %v2383 = vadd.f32 %v2375, %v2380
      %v2384 = vpack.c.bf16 %v2383, %v2382
      %v2385 = vld [vmem:[%s16] sm:$0xf]
      %v2386 = vld [vmem:[%s16 + $0x4] sm:$0xf]
      %v2387 = vld [vmem:[%s16 + $0x8] sm:$0xf]
      %v2388 = vld [vmem:[%s16 + $0xc] sm:$0xf]
      %v2389 = vld [vmem:[%s17] sm:$0x1]
      %v2391 = vlaneseq
      %v2392 = vshrl.u32 %v2391, 7
      %v2393 = vsub.s32 0, %v2392
      %v2394 = vrot.slane %v2389, %v2393
      %v2400 = vunpack.c.l.b16 %v2385
      %v2401 = vunpack.c.l.b16 %v2386
      %v2402 = vunpack.c.l.b16 %v2387
      %v2403 = vunpack.c.l.b16 %v2388
      %v2404 = vpack.c.b16 %v2401, %v2400
      %v2405 = vpack.c.b16 %v2403, %v2402
      %v2409 = vsel %vm1628, %v2384, 0
      %2411 = vmatprep.subr.bf16.mxu0 0
      %2412 = vmatpush1.bf16.msra.mxu0 %v2404
      %2413 = vmatprep.subr.bf16.mxu0 0
      %2414 = vmatpush1.bf16.msra.mxu0 %v2405
      %2415 = vmatprep.subr.bf16.mxu0 0
      %2416 = vmatpush1.bf16.msra.mxu0 0
      %2417 = vmatprep.subr.bf16.mxu0 0
      %2418 = vmatpush1.bf16.msra.mxu0 0
      %2419 = vmatprep.subr.bf16.mxu0 0
      %2420 = vmatpush1.bf16.msra.mxu0 0
      %2421 = vmatprep.subr.bf16.mxu0 0
      %2422 = vmatpush1.bf16.msra.mxu0 0
      %2423 = vmatprep.subr.bf16.mxu0 0
      %2424 = vmatpush1.bf16.msra.mxu0 0
      %2425 = vmatprep.subr.bf16.mxu0 0
      %2426 = vmatpush1.bf16.msra.mxu0 0
      %2427 = vmatprep.subr.bf16.mxu0 0
      %2428 = vmatpush1.bf16.msra.mxu0 0
      %2429 = vmatprep.subr.bf16.mxu0 0
      %2430 = vmatpush1.bf16.msra.mxu0 0
      %2431 = vmatprep.subr.bf16.mxu0 0
      %2432 = vmatpush1.bf16.msra.mxu0 0
      %2433 = vmatprep.subr.bf16.mxu0 0
      %2434 = vmatpush1.bf16.msra.mxu0 0
      %2435 = vmatprep.subr.bf16.mxu0 0
      %2436 = vmatpush1.bf16.msra.mxu0 0
      %2437 = vmatprep.subr.bf16.mxu0 0
      %2438 = vmatpush1.bf16.msra.mxu0 0
      %2439 = vmatprep.subr.bf16.mxu0 0
      %2440 = vmatpush1.bf16.msra.mxu0 0
      %2441 = vmatprep.subr.bf16.mxu0 0
      %2442 = vmatpush1.bf16.msra.mxu0 0
      %2443 = vmatprep.mubr.bf16.mxu0 0
      %2444 = vmatmul.mubr.bf16.gmra.mrb[0].mxu0 %v2409
      %v2445 = vpop.f32.mrb[0].mxu0
      %v2446 = vadd.f32 %v2394, %v2445
      %v2447 = vpop.f32.mrb[0].mxu0
      %v2448 = vpop.f32.mrb[0].mxu0
      %v2449 = vadd.f32 %v2394, %v2448
      %v2450 = vpop.f32.mrb[0].mxu0
      %2451 = vdwg.mxu0
      %v2452 = vmul.f32 %v2446, 0.5
      %v2453 = vmul.f32 %v2449, 0.5
      %v2454 = vmul.f32 %v2446, 0.044715
      %v2455 = vmul.f32 %v2449, 0.044715
      %v2456 = vmul.f32 %v2454, %v2446
      %v2457 = vmul.f32 %v2455, %v2449
      %v2458 = vmul.f32 %v2456, %v2446
      %v2459 = vmul.f32 %v2457, %v2449
      %v2460 = vadd.f32 %v2446, %v2458
      %v2461 = vadd.f32 %v2449, %v2459
      %v2462 = vmul.f32 %v2460, 0.7978846
      %v2463 = vmul.f32 %v2461, 0.7978846
      %v2464 = vtanh.pop %v2462
      %v2465 = vtanh.pop %v2463
      %v2466 = vadd.f32 %v2464, 1.0
      %v2467 = vadd.f32 %v2465, 1.0
      %v2468 = vmul.f32 %v2452, %v2466
      %v2469 = vmul.f32 %v2453, %v2467
      %v2470 = vpack.c.bf16 %v2469, %v2468
      %v2471 = vld [vmem:[%s18] sm:$0xf]
      %v2472 = vld [vmem:[%s18 + $0x4] sm:$0xf]
      %v2473 = vld [vmem:[%s18 + $0x8] sm:$0xf]
      %v2474 = vld [vmem:[%s18 + $0xc] sm:$0xf]
      %v2475 = vld [vmem:[%s18 + $0x10] sm:$0xf]
      %v2476 = vld [vmem:[%s18 + $0x14] sm:$0xf]
      %v2477 = vld [vmem:[%s18 + $0x18] sm:$0xf]
      %v2478 = vld [vmem:[%s18 + $0x1c] sm:$0xf]
      %v2479 = vld [vmem:[%s18 + $0x20] sm:$0xf]
      %v2480 = vld [vmem:[%s18 + $0x24] sm:$0xf]
      %v2481 = vld [vmem:[%s18 + $0x28] sm:$0xf]
      %v2482 = vld [vmem:[%s18 + $0x2c] sm:$0xf]
      %v2483 = vld [vmem:[%s18 + $0x30] sm:$0xf]
      %v2484 = vld [vmem:[%s18 + $0x34] sm:$0xf]
      %v2485 = vld [vmem:[%s18 + $0x38] sm:$0xf]
      %v2486 = vld [vmem:[%s18 + $0x3c] sm:$0xf]
      %v2503 = vunpack.c.l.b16 %v2471
      %v2504 = vunpack.c.l.b16 %v2472
      %v2505 = vunpack.c.l.b16 %v2473
      %v2506 = vunpack.c.l.b16 %v2474
      %v2507 = vunpack.c.l.b16 %v2475
      %v2508 = vunpack.c.l.b16 %v2476
      %v2509 = vunpack.c.l.b16 %v2477
      %v2510 = vunpack.c.l.b16 %v2478
      %v2511 = vunpack.c.l.b16 %v2479
      %v2512 = vunpack.c.l.b16 %v2480
      %v2513 = vunpack.c.l.b16 %v2481
      %v2514 = vunpack.c.l.b16 %v2482
      %v2515 = vunpack.c.l.b16 %v2483
      %v2516 = vunpack.c.l.b16 %v2484
      %v2517 = vunpack.c.l.b16 %v2485
      %v2518 = vunpack.c.l.b16 %v2486
      %v2519 = vpack.c.b16 %v2504, %v2503
      %v2520 = vpack.c.b16 %v2506, %v2505
      %v2521 = vpack.c.b16 %v2508, %v2507
      %v2522 = vpack.c.b16 %v2510, %v2509
      %v2523 = vpack.c.b16 %v2512, %v2511
      %v2524 = vpack.c.b16 %v2514, %v2513
      %v2525 = vpack.c.b16 %v2516, %v2515
      %v2526 = vpack.c.b16 %v2518, %v2517
      %2535 = vmatprep.subr.bf16.mxu0 0
      %2536 = vmatpush1.bf16.msra.mxu0 %v2519
      %2537 = vmatprep.subr.bf16.mxu0 0
      %2538 = vmatpush1.bf16.msra.mxu0 %v2520
      %2539 = vmatprep.subr.bf16.mxu0 0
      %2540 = vmatpush1.bf16.msra.mxu0 %v2521
      %2541 = vmatprep.subr.bf16.mxu0 0
      %2542 = vmatpush1.bf16.msra.mxu0 %v2522
      %2543 = vmatprep.subr.bf16.mxu0 0
      %2544 = vmatpush1.bf16.msra.mxu0 %v2523
      %2545 = vmatprep.subr.bf16.mxu0 0
      %2546 = vmatpush1.bf16.msra.mxu0 %v2524
      %2547 = vmatprep.subr.bf16.mxu0 0
      %2548 = vmatpush1.bf16.msra.mxu0 %v2525
      %2549 = vmatprep.subr.bf16.mxu0 0
      %2550 = vmatpush1.bf16.msra.mxu0 %v2526
      %2551 = vmatprep.subr.bf16.mxu0 0
      %2552 = vmatpush1.bf16.msra.mxu0 0
      %2553 = vmatprep.subr.bf16.mxu0 0
      %2554 = vmatpush1.bf16.msra.mxu0 0
      %2555 = vmatprep.subr.bf16.mxu0 0
      %2556 = vmatpush1.bf16.msra.mxu0 0
      %2557 = vmatprep.subr.bf16.mxu0 0
      %2558 = vmatpush1.bf16.msra.mxu0 0
      %2559 = vmatprep.subr.bf16.mxu0 0
      %2560 = vmatpush1.bf16.msra.mxu0 0
      %2561 = vmatprep.subr.bf16.mxu0 0
      %2562 = vmatpush1.bf16.msra.mxu0 0
      %2563 = vmatprep.subr.bf16.mxu0 0
      %2564 = vmatpush1.bf16.msra.mxu0 0
      %2565 = vmatprep.subr.bf16.mxu0 0
      %2566 = vmatpush1.bf16.msra.mxu0 0
      %2567 = vmatprep.mubr.bf16.mxu0 0
      %2568 = vmatmul.mubr.bf16.gmra.mrb[0].mxu0 %v2470
      %v2569 = vpop.f32.mrb[0].mxu0
      %v2570 = vadd.f32 0.0, %v2569
      %v2571 = vpop.f32.mrb[0].mxu0
      %v2572 = vpop.f32.mrb[0].mxu0
      %v2573 = vadd.f32 0.0, %v2572
      %v2574 = vpop.f32.mrb[0].mxu0
      %2575 = vdwg.mxu0
      %v2576 = vadd.f32 %v2338, %v2570
      %v2577 = vadd.f32 %v2339, %v2573
      %v2578 = vld [vmem:[%s19] sm:$0x1]
      %v2580 = vlaneseq
      %v2581 = vshrl.u32 %v2580, 7
      %v2582 = vsub.s32 0, %v2581
      %v2583 = vrot.slane %v2578, %v2582
      %v2585 = vadd.f32 %v2576, %v2583
      %v2586 = vadd.f32 %v2577, %v2583
      %s2587 = scalar_lea.vmem %s8, 1
      %v2588 = vld [vmem:[%s2587] sm:$0x1]
      %s2589 = scalar_lea.vmem %s9, 1
      %v2590 = vld [vmem:[%s2589] sm:$0x1]
      %v2591 = vsel %vm1628, %v2585, 0.0
      %2592 = vadd.xlane.f32.xlu0 %v2591
      %v2593 = vpop.xlane.xlu0 %2592
      %v2594 = vsel %vm1628, %v2586, 0.0
      %2595 = vadd.xlane.f32.xlu0 %v2594
      %v2596 = vpop.xlane.xlu0 %2595
      %v2597 = vmul.f32 %v2593, %v1635
      %v2598 = vmul.f32 %v2596, %v1635
      %v2599 = vsub.f32 %v2585, %v2597
      %v2600 = vsub.f32 %v2586, %v2598
      %v2601 = vmul.f32 %v2599, %v2599
      %v2602 = vmul.f32 %v2600, %v2600
      %v2603 = vsel %vm1628, %v2601, 0.0
      %2604 = vadd.xlane.f32.xlu0 %v2603
      %v2605 = vpop.xlane.xlu0 %2604
      %v2606 = vsel %vm1628, %v2602, 0.0
      %2607 = vadd.xlane.f32.xlu0 %v2606
      %v2608 = vpop.xlane.xlu0 %2607
      %v2609 = vmul.f32 %v2605, %v1635
      %v2610 = vmul.f32 %v2608, %v1635
      %v2611 = vadd.f32 %v2609, 1e-05
      %v2612 = vadd.f32 %v2610, 1e-05
      %v2613 = vrsqrt.pop %v2611
      %v2614 = vrsqrt.pop %v2612
      %v2615 = vmul.f32 %v2599, %v2613
      %v2616 = vmul.f32 %v2600, %v2614
      %v2618 = vlaneseq
      %v2619 = vshrl.u32 %v2618, 7
      %v2620 = vsub.s32 0, %v2619
      %v2621 = vrot.slane %v2588, %v2620
      %v2623 = vmul.f32 %v2615, %v2621
      %v2624 = vmul.f32 %v2616, %v2621
      %v2626 = vlaneseq
      %v2627 = vshrl.u32 %v2626, 7
      %v2628 = vsub.s32 0, %v2627
      %v2629 = vrot.slane %v2590, %v2628
      %v2631 = vadd.f32 %v2623, %v2629
      %v2632 = vadd.f32 %v2624, %v2629
      %v2633 = vpack.c.bf16 %v2632, %v2631
      %s2634 = scalar_lea.vmem %s10, 16
      %v2635 = vld [vmem:[%s2634] sm:$0xf]
      %v2636 = vld [vmem:[%s2634 + $0x4] sm:$0xf]
      %v2637 = vld [vmem:[%s2634 + $0x8] sm:$0xf]
      %v2638 = vld [vmem:[%s2634 + $0xc] sm:$0xf]
      %s2639 = scalar_lea.vmem %s11, 1
      %v2640 = vld [vmem:[%s2639] sm:$0x1]
      %v2642 = vlaneseq
      %v2643 = vshrl.u32 %v2642, 7
      %v2644 = vsub.s32 0, %v2643
      %v2645 = vrot.slane %v2640, %v2644
      %v2651 = vunpack.c.l.b16 %v2635
      %v2652 = vunpack.c.l.b16 %v2636
      %v2653 = vunpack.c.l.b16 %v2637
      %v2654 = vunpack.c.l.b16 %v2638
      %v2655 = vpack.c.b16 %v2652, %v2651
      %v2656 = vpack.c.b16 %v2654, %v2653
      %v2660 = vsel %vm1628, %v2633, 0
      %2662 = vmatprep.subr.bf16.mxu0 0
      %2663 = vmatpush1.bf16.msra.mxu0 %v2655
      %2664 = vmatprep.subr.bf16.mxu0 0
      %2665 = vmatpush1.bf16.msra.mxu0 %v2656
      %2666 = vmatprep.subr.bf16.mxu0 0
      %2667 = vmatpush1.bf16.msra.mxu0 0
      %2668 = vmatprep.subr.bf16.mxu0 0
      %2669 = vmatpush1.bf16.msra.mxu0 0
      %2670 = vmatprep.subr.bf16.mxu0 0
      %2671 = vmatpush1.bf16.msra.mxu0 0
      %2672 = vmatprep.subr.bf16.mxu0 0
      %2673 = vmatpush1.bf16.msra.mxu0 0
      %2674 = vmatprep.subr.bf16.mxu0 0
      %2675 = vmatpush1.bf16.msra.mxu0 0
      %2676 = vmatprep.subr.bf16.mxu0 0
      %2677 = vmatpush1.bf16.msra.mxu0 0
      %2678 = vmatprep.subr.bf16.mxu0 0
      %2679 = vmatpush1.bf16.msra.mxu0 0
      %2680 = vmatprep.subr.bf16.mxu0 0
      %2681 = vmatpush1.bf16.msra.mxu0 0
      %2682 = vmatprep.subr.bf16.mxu0 0
      %2683 = vmatpush1.bf16.msra.mxu0 0
      %2684 = vmatprep.subr.bf16.mxu0 0
      %2685 = vmatpush1.bf16.msra.mxu0 0
      %2686 = vmatprep.subr.bf16.mxu0 0
      %2687 = vmatpush1.bf16.msra.mxu0 0
      %2688 = vmatprep.subr.bf16.mxu0 0
      %2689 = vmatpush1.bf16.msra.mxu0 0
      %2690 = vmatprep.subr.bf16.mxu0 0
      %2691 = vmatpush1.bf16.msra.mxu0 0
      %2692 = vmatprep.subr.bf16.mxu0 0
      %2693 = vmatpush1.bf16.msra.mxu0 0
      %2694 = vmatprep.mubr.bf16.mxu0 0
      %2695 = vmatmul.mubr.bf16.gmra.mrb[0].mxu0 %v2660
      %v2696 = vpop.f32.mrb[0].mxu0
      %v2697 = vadd.f32 %v2645, %v2696
      %v2698 = vpop.f32.mrb[0].mxu0
      %v2699 = vpop.f32.mrb[0].mxu0
      %v2700 = vadd.f32 %v2645, %v2699
      %v2701 = vpop.f32.mrb[0].mxu0
      %2702 = vdwg.mxu0
      %v2703 = vmul.f32 %v2697, 0.35355338
      %v2704 = vmul.f32 %v2700, 0.35355338
      %v2705 = vpack.c.bf16 %v2704, %v2703
      %v2706 = vpack.c.bf16 %v2700, %v2697
      %2708 = vrot.lane.b32.xlu0 %v2706, 96
      %v2709 = vpop.permute.xlu0 %2708
      %v2711 = vsel %vm1747, %v2705, 0
      %v2714 = vsel %vm1747, %v2709, 0
      %2716 = vmatprep.subr.bf16.mxu0 0
      %2717 = vmatpush1.bf16.xpose.msra.mxu0 %v2714
      %2718 = vmatprep.subr.bf16.mxu0 0
      %2719 = vmatpush1.bf16.xpose.msra.mxu0 0
      %2720 = vmatprep.subr.bf16.mxu0 0
      %2721 = vmatpush1.bf16.xpose.msra.mxu0 0
      %2722 = vmatprep.subr.bf16.mxu0 0
      %2723 = vmatpush1.bf16.xpose.msra.mxu0 0
      %2724 = vmatprep.subr.bf16.mxu0 0
      %2725 = vmatpush1.bf16.xpose.msra.mxu0 0
      %2726 = vmatprep.subr.bf16.mxu0 0
      %2727 = vmatpush1.bf16.xpose.msra.mxu0 0
      %2728 = vmatprep.subr.bf16.mxu0 0
      %2729 = vmatpush1.bf16.xpose.msra.mxu0 0
      %2730 = vmatprep.subr.bf16.mxu0 0
      %2731 = vmatpush1.bf16.xpose.msra.mxu0 0
      %2732 = vmatprep.subr.bf16.mxu0 0
      %2733 = vmatpush1.bf16.xpose.msra.mxu0 0
      %2734 = vmatprep.subr.bf16.mxu0 0
      %2735 = vmatpush1.bf16.xpose.msra.mxu0 0
      %2736 = vmatprep.subr.bf16.mxu0 0
      %2737 = vmatpush1.bf16.xpose.msra.mxu0 0
      %2738 = vmatprep.subr.bf16.mxu0 0
      %2739 = vmatpush1.bf16.xpose.msra.mxu0 0
      %2740 = vmatprep.subr.bf16.mxu0 0
      %2741 = vmatpush1.bf16.xpose.msra.mxu0 0
      %2742 = vmatprep.subr.bf16.mxu0 0
      %2743 = vmatpush1.bf16.xpose.msra.mxu0 0
      %2744 = vmatprep.subr.bf16.mxu0 0
      %2745 = vmatpush1.bf16.xpose.msra.mxu0 0
      %2746 = vmatprep.subr.bf16.mxu0 0
      %2747 = vmatpush1.bf16.xpose.msra.mxu0 0
      %2748 = vmatprep.mubr.bf16.mxu0 0
      %2749 = vmatmul.mubr.bf16.gmra.mrb[0].mxu0 %v2711
      %v2750 = vpop.f32.mrb[0].mxu0
      %v2751 = vadd.f32 0.0, %v2750
      %v2752 = vpop.f32.mrb[0].mxu0
      %v2753 = vpop.f32.mrb[0].mxu0
      %v2754 = vadd.f32 0.0, %v2753
      %v2755 = vpop.f32.mrb[0].mxu0
      %2756 = vdwg.mxu0
      %v2757 = vsel %vm1624, %v2751, -1e+09
      %v2758 = vsel %vm1625, %v2754, -1e+09
      %v2759 = vsel %vm677, %v2757, -inf
      %2760 = vmax.xlane.f32.xlu0 %v2759
      %v2761 = vpop.xlane.xlu0 %2760
      %v2762 = vsel %vm677, %v2758, -inf
      %2763 = vmax.xlane.f32.xlu0 %v2762
      %v2764 = vpop.xlane.xlu0 %2763
      %v2765 = vsub.f32 %v2757, %v2761
      %v2766 = vsub.f32 %v2758, %v2764
      %v2767 = vmul.f32 %v2765, 1.442695
      %v2768 = vpow.pop %v2767
      %v2769 = vmul.f32 %v2766, 1.442695
      %v2770 = vpow.pop %v2769
      %v2771 = vsel %vm677, %v2768, 0.0
      %2772 = vadd.xlane.f32.xlu0 %v2771
      %v2773 = vpop.xlane.xlu0 %2772
      %v2774 = vsel %vm677, %v2770, 0.0
      %2775 = vadd.xlane.f32.xlu0 %v2774
      %v2776 = vpop.xlane.xlu0 %2775
      %v2777 = vrcp.pop %v2773
      %v2778 = vrcp.pop %v2776
      %v2779 = vmul.f32 %v2768, %v2777
      %v2780 = vmul.f32 %v2770, %v2778
      %v2781 = vpack.c.bf16 %v2780, %v2779
      %2782 = vrot.lane.b32.xlu0 %v2706, 64
      %v2783 = vpop.permute.xlu0 %2782
      %v2786 = vsel %vm677, %v2781, 0
      %2788 = vmatprep.subr.bf16.mxu0 0
      %2789 = vmatpush1.bf16.msra.mxu0 %v2783
      %2790 = vmatprep.subr.bf16.mxu0 0
      %2791 = vmatpush1.bf16.msra.mxu0 0
      %2792 = vmatprep.subr.bf16.mxu0 0
      %2793 = vmatpush1.bf16.msra.mxu0 0
      %2794 = vmatprep.subr.bf16.mxu0 0
      %2795 = vmatpush1.bf16.msra.mxu0 0
      %2796 = vmatprep.subr.bf16.mxu0 0
      %2797 = vmatpush1.bf16.msra.mxu0 0
      %2798 = vmatprep.subr.bf16.mxu0 0
      %2799 = vmatpush1.bf16.msra.mxu0 0
      %2800 = vmatprep.subr.bf16.mxu0 0
      %2801 = vmatpush1.bf16.msra.mxu0 0
      %2802 = vmatprep.subr.bf16.mxu0 0
      %2803 = vmatpush1.bf16.msra.mxu0 0
      %2804 = vmatprep.subr.bf16.mxu0 0
      %2805 = vmatpush1.bf16.msra.mxu0 0
      %2806 = vmatprep.subr.bf16.mxu0 0
      %2807 = vmatpush1.bf16.msra.mxu0 0
      %2808 = vmatprep.subr.bf16.mxu0 0
      %2809 = vmatpush1.bf16.msra.mxu0 0
      %2810 = vmatprep.subr.bf16.mxu0 0
      %2811 = vmatpush1.bf16.msra.mxu0 0
      %2812 = vmatprep.subr.bf16.mxu0 0
      %2813 = vmatpush1.bf16.msra.mxu0 0
      %2814 = vmatprep.subr.bf16.mxu0 0
      %2815 = vmatpush1.bf16.msra.mxu0 0
      %2816 = vmatprep.subr.bf16.mxu0 0
      %2817 = vmatpush1.bf16.msra.mxu0 0
      %2818 = vmatprep.subr.bf16.mxu0 0
      %2819 = vmatpush1.bf16.msra.mxu0 0
      %2820 = vmatprep.mubr.bf16.mxu0 0
      %2821 = vmatmul.mubr.bf16.gmra.mrb[0].mxu0 %v2786
      %v2822 = vpop.f32.mrb[0].mxu0
      %v2823 = vadd.f32 0.0, %v2822
      %v2824 = vpop.f32.mrb[0].mxu0
      %v2825 = vpop.f32.mrb[0].mxu0
      %v2826 = vadd.f32 0.0, %v2825
      %v2827 = vpop.f32.mrb[0].mxu0
      %2828 = vdwg.mxu0
      %2830 = vrot.lane.b32.xlu0 %v2705, 120
      %v2831 = vpop.permute.xlu0 %2830
      %2832 = vrot.lane.b32.xlu0 %v2706, 88
      %v2833 = vpop.permute.xlu0 %2832
      %v2835 = vsel %vm1747, %v2831, 0
      %v2838 = vsel %vm1747, %v2833, 0
      %2840 = vmatprep.subr.bf16.mxu0 0
      %2841 = vmatpush1.bf16.xpose.msra.mxu0 %v2838
      %2842 = vmatprep.subr.bf16.mxu0 0
      %2843 = vmatpush1.bf16.xpose.msra.mxu0 0
      %2844 = vmatprep.subr.bf16.mxu0 0
      %2845 = vmatpush1.bf16.xpose.msra.mxu0 0
      %2846 = vmatprep.subr.bf16.mxu0 0
      %2847 = vmatpush1.bf16.xpose.msra.mxu0 0
      %2848 = vmatprep.subr.bf16.mxu0 0
      %2849 = vmatpush1.bf16.xpose.msra.mxu0 0
      %2850 = vmatprep.subr.bf16.mxu0 0
      %2851 = vmatpush1.bf16.xpose.msra.mxu0 0
      %2852 = vmatprep.subr.bf16.mxu0 0
      %2853 = vmatpush1.bf16.xpose.msra.mxu0 0
      %2854 = vmatprep.subr.bf16.mxu0 0
      %2855 = vmatpush1.bf16.xpose.msra.mxu0 0
      %2856 = vmatprep.subr.bf16.mxu0 0
      %2857 = vmatpush1.bf16.xpose.msra.mxu0 0
      %2858 = vmatprep.subr.bf16.mxu0 0
      %2859 = vmatpush1.bf16.xpose.msra.mxu0 0
      %2860 = vmatprep.subr.bf16.mxu0 0
      %2861 = vmatpush1.bf16.xpose.msra.mxu0 0
      %2862 = vmatprep.subr.bf16.mxu0 0
      %2863 = vmatpush1.bf16.xpose.msra.mxu0 0
      %2864 = vmatprep.subr.bf16.mxu0 0
      %2865 = vmatpush1.bf16.xpose.msra.mxu0 0
      %2866 = vmatprep.subr.bf16.mxu0 0
      %2867 = vmatpush1.bf16.xpose.msra.mxu0 0
      %2868 = vmatprep.subr.bf16.mxu0 0
      %2869 = vmatpush1.bf16.xpose.msra.mxu0 0
      %2870 = vmatprep.subr.bf16.mxu0 0
      %2871 = vmatpush1.bf16.xpose.msra.mxu0 0
      %2872 = vmatprep.mubr.bf16.mxu0 0
      %2873 = vmatmul.mubr.bf16.gmra.mrb[0].mxu0 %v2835
      %v2874 = vpop.f32.mrb[0].mxu0
      %v2875 = vadd.f32 0.0, %v2874
      %v2876 = vpop.f32.mrb[0].mxu0
      %v2877 = vpop.f32.mrb[0].mxu0
      %v2878 = vadd.f32 0.0, %v2877
      %v2879 = vpop.f32.mrb[0].mxu0
      %2880 = vdwg.mxu0
      %v2881 = vsel %vm1624, %v2875, -1e+09
      %v2882 = vsel %vm1625, %v2878, -1e+09
      %v2883 = vsel %vm677, %v2881, -inf
      %2884 = vmax.xlane.f32.xlu0 %v2883
      %v2885 = vpop.xlane.xlu0 %2884
      %v2886 = vsel %vm677, %v2882, -inf
      %2887 = vmax.xlane.f32.xlu0 %v2886
      %v2888 = vpop.xlane.xlu0 %2887
      %v2889 = vsub.f32 %v2881, %v2885
      %v2890 = vsub.f32 %v2882, %v2888
      %v2891 = vmul.f32 %v2889, 1.442695
      %v2892 = vpow.pop %v2891
      %v2893 = vmul.f32 %v2890, 1.442695
      %v2894 = vpow.pop %v2893
      %v2895 = vsel %vm677, %v2892, 0.0
      %2896 = vadd.xlane.f32.xlu0 %v2895
      %v2897 = vpop.xlane.xlu0 %2896
      %v2898 = vsel %vm677, %v2894, 0.0
      %2899 = vadd.xlane.f32.xlu0 %v2898
      %v2900 = vpop.xlane.xlu0 %2899
      %v2901 = vrcp.pop %v2897
      %v2902 = vrcp.pop %v2900
      %v2903 = vmul.f32 %v2892, %v2901
      %v2904 = vmul.f32 %v2894, %v2902
      %v2905 = vpack.c.bf16 %v2904, %v2903
      %2906 = vrot.lane.b32.xlu0 %v2706, 56
      %v2907 = vpop.permute.xlu0 %2906
      %v2910 = vsel %vm677, %v2905, 0
      %2912 = vmatprep.subr.bf16.mxu0 0
      %2913 = vmatpush1.bf16.msra.mxu0 %v2907
      %2914 = vmatprep.subr.bf16.mxu0 0
      %2915 = vmatpush1.bf16.msra.mxu0 0
      %2916 = vmatprep.subr.bf16.mxu0 0
      %2917 = vmatpush1.bf16.msra.mxu0 0
      %2918 = vmatprep.subr.bf16.mxu0 0
      %2919 = vmatpush1.bf16.msra.mxu0 0
      %2920 = vmatprep.subr.bf16.mxu0 0
      %2921 = vmatpush1.bf16.msra.mxu0 0
      %2922 = vmatprep.subr.bf16.mxu0 0
      %2923 = vmatpush1.bf16.msra.mxu0 0
      %2924 = vmatprep.subr.bf16.mxu0 0
      %2925 = vmatpush1.bf16.msra.mxu0 0
      %2926 = vmatprep.subr.bf16.mxu0 0
      %2927 = vmatpush1.bf16.msra.mxu0 0
      %2928 = vmatprep.subr.bf16.mxu0 0
      %2929 = vmatpush1.bf16.msra.mxu0 0
      %2930 = vmatprep.subr.bf16.mxu0 0
      %2931 = vmatpush1.bf16.msra.mxu0 0
      %2932 = vmatprep.subr.bf16.mxu0 0
      %2933 = vmatpush1.bf16.msra.mxu0 0
      %2934 = vmatprep.subr.bf16.mxu0 0
      %2935 = vmatpush1.bf16.msra.mxu0 0
      %2936 = vmatprep.subr.bf16.mxu0 0
      %2937 = vmatpush1.bf16.msra.mxu0 0
      %2938 = vmatprep.subr.bf16.mxu0 0
      %2939 = vmatpush1.bf16.msra.mxu0 0
      %2940 = vmatprep.subr.bf16.mxu0 0
      %2941 = vmatpush1.bf16.msra.mxu0 0
      %2942 = vmatprep.subr.bf16.mxu0 0
      %2943 = vmatpush1.bf16.msra.mxu0 0
      %2944 = vmatprep.mubr.bf16.mxu0 0
      %2945 = vmatmul.mubr.bf16.gmra.mrb[0].mxu0 %v2910
      %v2946 = vpop.f32.mrb[0].mxu0
      %v2947 = vadd.f32 0.0, %v2946
      %v2948 = vpop.f32.mrb[0].mxu0
      %v2949 = vpop.f32.mrb[0].mxu0
      %v2950 = vadd.f32 0.0, %v2949
      %v2951 = vpop.f32.mrb[0].mxu0
      %2952 = vdwg.mxu0
      %2953 = vrot.lane.b32.xlu0 %v2705, 112
      %v2954 = vpop.permute.xlu0 %2953
      %2955 = vrot.lane.b32.xlu0 %v2706, 80
      %v2956 = vpop.permute.xlu0 %2955
      %v2958 = vsel %vm1747, %v2954, 0
      %v2961 = vsel %vm1747, %v2956, 0
      %2963 = vmatprep.subr.bf16.mxu0 0
      %2964 = vmatpush1.bf16.xpose.msra.mxu0 %v2961
      %2965 = vmatprep.subr.bf16.mxu0 0
      %2966 = vmatpush1.bf16.xpose.msra.mxu0 0
      %2967 = vmatprep.subr.bf16.mxu0 0
      %2968 = vmatpush1.bf16.xpose.msra.mxu0 0
      %2969 = vmatprep.subr.bf16.mxu0 0
      %2970 = vmatpush1.bf16.xpose.msra.mxu0 0
      %2971 = vmatprep.subr.bf16.mxu0 0
      %2972 = vmatpush1.bf16.xpose.msra.mxu0 0
      %2973 = vmatprep.subr.bf16.mxu0 0
      %2974 = vmatpush1.bf16.xpose.msra.mxu0 0
      %2975 = vmatprep.subr.bf16.mxu0 0
      %2976 = vmatpush1.bf16.xpose.msra.mxu0 0
      %2977 = vmatprep.subr.bf16.mxu0 0
      %2978 = vmatpush1.bf16.xpose.msra.mxu0 0
      %2979 = vmatprep.subr.bf16.mxu0 0
      %2980 = vmatpush1.bf16.xpose.msra.mxu0 0
      %2981 = vmatprep.subr.bf16.mxu0 0
      %2982 = vmatpush1.bf16.xpose.msra.mxu0 0
      %2983 = vmatprep.subr.bf16.mxu0 0
      %2984 = vmatpush1.bf16.xpose.msra.mxu0 0
      %2985 = vmatprep.subr.bf16.mxu0 0
      %2986 = vmatpush1.bf16.xpose.msra.mxu0 0
      %2987 = vmatprep.subr.bf16.mxu0 0
      %2988 = vmatpush1.bf16.xpose.msra.mxu0 0
      %2989 = vmatprep.subr.bf16.mxu0 0
      %2990 = vmatpush1.bf16.xpose.msra.mxu0 0
      %2991 = vmatprep.subr.bf16.mxu0 0
      %2992 = vmatpush1.bf16.xpose.msra.mxu0 0
      %2993 = vmatprep.subr.bf16.mxu0 0
      %2994 = vmatpush1.bf16.xpose.msra.mxu0 0
      %2995 = vmatprep.mubr.bf16.mxu0 0
      %2996 = vmatmul.mubr.bf16.gmra.mrb[0].mxu0 %v2958
      %v2997 = vpop.f32.mrb[0].mxu0
      %v2998 = vadd.f32 0.0, %v2997
      %v2999 = vpop.f32.mrb[0].mxu0
      %v3000 = vpop.f32.mrb[0].mxu0
      %v3001 = vadd.f32 0.0, %v3000
      %v3002 = vpop.f32.mrb[0].mxu0
      %3003 = vdwg.mxu0
      %v3004 = vsel %vm1624, %v2998, -1e+09
      %v3005 = vsel %vm1625, %v3001, -1e+09
      %v3006 = vsel %vm677, %v3004, -inf
      %3007 = vmax.xlane.f32.xlu0 %v3006
      %v3008 = vpop.xlane.xlu0 %3007
      %v3009 = vsel %vm677, %v3005, -inf
      %3010 = vmax.xlane.f32.xlu0 %v3009
      %v3011 = vpop.xlane.xlu0 %3010
      %v3012 = vsub.f32 %v3004, %v3008
      %v3013 = vsub.f32 %v3005, %v3011
      %v3014 = vmul.f32 %v3012, 1.442695
      %v3015 = vpow.pop %v3014
      %v3016 = vmul.f32 %v3013, 1.442695
      %v3017 = vpow.pop %v3016
      %v3018 = vsel %vm677, %v3015, 0.0
      %3019 = vadd.xlane.f32.xlu0 %v3018
      %v3020 = vpop.xlane.xlu0 %3019
      %v3021 = vsel %vm677, %v3017, 0.0
      %3022 = vadd.xlane.f32.xlu0 %v3021
      %v3023 = vpop.xlane.xlu0 %3022
      %v3024 = vrcp.pop %v3020
      %v3025 = vrcp.pop %v3023
      %v3026 = vmul.f32 %v3015, %v3024
      %v3027 = vmul.f32 %v3017, %v3025
      %v3028 = vpack.c.bf16 %v3027, %v3026
      %3029 = vrot.lane.b32.xlu0 %v2706, 48
      %v3030 = vpop.permute.xlu0 %3029
      %v3033 = vsel %vm677, %v3028, 0
      %3035 = vmatprep.subr.bf16.mxu0 0
      %3036 = vmatpush1.bf16.msra.mxu0 %v3030
      %3037 = vmatprep.subr.bf16.mxu0 0
      %3038 = vmatpush1.bf16.msra.mxu0 0
      %3039 = vmatprep.subr.bf16.mxu0 0
      %3040 = vmatpush1.bf16.msra.mxu0 0
      %3041 = vmatprep.subr.bf16.mxu0 0
      %3042 = vmatpush1.bf16.msra.mxu0 0
      %3043 = vmatprep.subr.bf16.mxu0 0
      %3044 = vmatpush1.bf16.msra.mxu0 0
      %3045 = vmatprep.subr.bf16.mxu0 0
      %3046 = vmatpush1.bf16.msra.mxu0 0
      %3047 = vmatprep.subr.bf16.mxu0 0
      %3048 = vmatpush1.bf16.msra.mxu0 0
      %3049 = vmatprep.subr.bf16.mxu0 0
      %3050 = vmatpush1.bf16.msra.mxu0 0
      %3051 = vmatprep.subr.bf16.mxu0 0
      %3052 = vmatpush1.bf16.msra.mxu0 0
      %3053 = vmatprep.subr.bf16.mxu0 0
      %3054 = vmatpush1.bf16.msra.mxu0 0
      %3055 = vmatprep.subr.bf16.mxu0 0
      %3056 = vmatpush1.bf16.msra.mxu0 0
      %3057 = vmatprep.subr.bf16.mxu0 0
      %3058 = vmatpush1.bf16.msra.mxu0 0
      %3059 = vmatprep.subr.bf16.mxu0 0
      %3060 = vmatpush1.bf16.msra.mxu0 0
      %3061 = vmatprep.subr.bf16.mxu0 0
      %3062 = vmatpush1.bf16.msra.mxu0 0
      %3063 = vmatprep.subr.bf16.mxu0 0
      %3064 = vmatpush1.bf16.msra.mxu0 0
      %3065 = vmatprep.subr.bf16.mxu0 0
      %3066 = vmatpush1.bf16.msra.mxu0 0
      %3067 = vmatprep.mubr.bf16.mxu0 0
      %3068 = vmatmul.mubr.bf16.gmra.mrb[0].mxu0 %v3033
      %v3069 = vpop.f32.mrb[0].mxu0
      %v3070 = vadd.f32 0.0, %v3069
      %v3071 = vpop.f32.mrb[0].mxu0
      %v3072 = vpop.f32.mrb[0].mxu0
      %v3073 = vadd.f32 0.0, %v3072
      %v3074 = vpop.f32.mrb[0].mxu0
      %3075 = vdwg.mxu0
      %3076 = vrot.lane.b32.xlu0 %v2705, 104
      %v3077 = vpop.permute.xlu0 %3076
      %3078 = vrot.lane.b32.xlu0 %v2706, 72
      %v3079 = vpop.permute.xlu0 %3078
      %v3081 = vsel %vm1747, %v3077, 0
      %v3084 = vsel %vm1747, %v3079, 0
      %3086 = vmatprep.subr.bf16.mxu0 0
      %3087 = vmatpush1.bf16.xpose.msra.mxu0 %v3084
      %3088 = vmatprep.subr.bf16.mxu0 0
      %3089 = vmatpush1.bf16.xpose.msra.mxu0 0
      %3090 = vmatprep.subr.bf16.mxu0 0
      %3091 = vmatpush1.bf16.xpose.msra.mxu0 0
      %3092 = vmatprep.subr.bf16.mxu0 0
      %3093 = vmatpush1.bf16.xpose.msra.mxu0 0
      %3094 = vmatprep.subr.bf16.mxu0 0
      %3095 = vmatpush1.bf16.xpose.msra.mxu0 0
      %3096 = vmatprep.subr.bf16.mxu0 0
      %3097 = vmatpush1.bf16.xpose.msra.mxu0 0
      %3098 = vmatprep.subr.bf16.mxu0 0
      %3099 = vmatpush1.bf16.xpose.msra.mxu0 0
      %3100 = vmatprep.subr.bf16.mxu0 0
      %3101 = vmatpush1.bf16.xpose.msra.mxu0 0
      %3102 = vmatprep.subr.bf16.mxu0 0
      %3103 = vmatpush1.bf16.xpose.msra.mxu0 0
      %3104 = vmatprep.subr.bf16.mxu0 0
      %3105 = vmatpush1.bf16.xpose.msra.mxu0 0
      %3106 = vmatprep.subr.bf16.mxu0 0
      %3107 = vmatpush1.bf16.xpose.msra.mxu0 0
      %3108 = vmatprep.subr.bf16.mxu0 0
      %3109 = vmatpush1.bf16.xpose.msra.mxu0 0
      %3110 = vmatprep.subr.bf16.mxu0 0
      %3111 = vmatpush1.bf16.xpose.msra.mxu0 0
      %3112 = vmatprep.subr.bf16.mxu0 0
      %3113 = vmatpush1.bf16.xpose.msra.mxu0 0
      %3114 = vmatprep.subr.bf16.mxu0 0
      %3115 = vmatpush1.bf16.xpose.msra.mxu0 0
      %3116 = vmatprep.subr.bf16.mxu0 0
      %3117 = vmatpush1.bf16.xpose.msra.mxu0 0
      %3118 = vmatprep.mubr.bf16.mxu0 0
      %3119 = vmatmul.mubr.bf16.gmra.mrb[0].mxu0 %v3081
      %v3120 = vpop.f32.mrb[0].mxu0
      %v3121 = vadd.f32 0.0, %v3120
      %v3122 = vpop.f32.mrb[0].mxu0
      %v3123 = vpop.f32.mrb[0].mxu0
      %v3124 = vadd.f32 0.0, %v3123
      %v3125 = vpop.f32.mrb[0].mxu0
      %3126 = vdwg.mxu0
      %v3127 = vsel %vm1624, %v3121, -1e+09
      %v3128 = vsel %vm1625, %v3124, -1e+09
      %v3129 = vsel %vm677, %v3127, -inf
      %3130 = vmax.xlane.f32.xlu0 %v3129
      %v3131 = vpop.xlane.xlu0 %3130
      %v3132 = vsel %vm677, %v3128, -inf
      %3133 = vmax.xlane.f32.xlu0 %v3132
      %v3134 = vpop.xlane.xlu0 %3133
      %v3135 = vsub.f32 %v3127, %v3131
      %v3136 = vsub.f32 %v3128, %v3134
      %v3137 = vmul.f32 %v3135, 1.442695
      %v3138 = vpow.pop %v3137
      %v3139 = vmul.f32 %v3136, 1.442695
      %v3140 = vpow.pop %v3139
      %v3141 = vsel %vm677, %v3138, 0.0
      %3142 = vadd.xlane.f32.xlu0 %v3141
      %v3143 = vpop.xlane.xlu0 %3142
      %v3144 = vsel %vm677, %v3140, 0.0
      %3145 = vadd.xlane.f32.xlu0 %v3144
      %v3146 = vpop.xlane.xlu0 %3145
      %v3147 = vrcp.pop %v3143
      %v3148 = vrcp.pop %v3146
      %v3149 = vmul.f32 %v3138, %v3147
      %v3150 = vmul.f32 %v3140, %v3148
      %v3151 = vpack.c.bf16 %v3150, %v3149
      %3152 = vrot.lane.b32.xlu0 %v2706, 40
      %v3153 = vpop.permute.xlu0 %3152
      %v3156 = vsel %vm677, %v3151, 0
      %3158 = vmatprep.subr.bf16.mxu0 0
      %3159 = vmatpush1.bf16.msra.mxu0 %v3153
      %3160 = vmatprep.subr.bf16.mxu0 0
      %3161 = vmatpush1.bf16.msra.mxu0 0
      %3162 = vmatprep.subr.bf16.mxu0 0
      %3163 = vmatpush1.bf16.msra.mxu0 0
      %3164 = vmatprep.subr.bf16.mxu0 0
      %3165 = vmatpush1.bf16.msra.mxu0 0
      %3166 = vmatprep.subr.bf16.mxu0 0
      %3167 = vmatpush1.bf16.msra.mxu0 0
      %3168 = vmatprep.subr.bf16.mxu0 0
      %3169 = vmatpush1.bf16.msra.mxu0 0
      %3170 = vmatprep.subr.bf16.mxu0 0
      %3171 = vmatpush1.bf16.msra.mxu0 0
      %3172 = vmatprep.subr.bf16.mxu0 0
      %3173 = vmatpush1.bf16.msra.mxu0 0
      %3174 = vmatprep.subr.bf16.mxu0 0
      %3175 = vmatpush1.bf16.msra.mxu0 0
      %3176 = vmatprep.subr.bf16.mxu0 0
      %3177 = vmatpush1.bf16.msra.mxu0 0
      %3178 = vmatprep.subr.bf16.mxu0 0
      %3179 = vmatpush1.bf16.msra.mxu0 0
      %3180 = vmatprep.subr.bf16.mxu0 0
      %3181 = vmatpush1.bf16.msra.mxu0 0
      %3182 = vmatprep.subr.bf16.mxu0 0
      %3183 = vmatpush1.bf16.msra.mxu0 0
      %3184 = vmatprep.subr.bf16.mxu0 0
      %3185 = vmatpush1.bf16.msra.mxu0 0
      %3186 = vmatprep.subr.bf16.mxu0 0
      %3187 = vmatpush1.bf16.msra.mxu0 0
      %3188 = vmatprep.subr.bf16.mxu0 0
      %3189 = vmatpush1.bf16.msra.mxu0 0
      %3190 = vmatprep.mubr.bf16.mxu0 0
      %3191 = vmatmul.mubr.bf16.gmra.mrb[0].mxu0 %v3156
      %v3192 = vpop.f32.mrb[0].mxu0
      %v3193 = vadd.f32 0.0, %v3192
      %v3194 = vpop.f32.mrb[0].mxu0
      %v3195 = vpop.f32.mrb[0].mxu0
      %v3196 = vadd.f32 0.0, %v3195
      %v3197 = vpop.f32.mrb[0].mxu0
      %3198 = vdwg.mxu0
      %3201 = vrot.lane.b32.xlu0 %v2947, 8
      %v3202 = vpop.permute.xlu0 %3201
      %3203 = vrot.lane.b32.xlu0 %v2950, 8
      %v3204 = vpop.permute.xlu0 %3203
      %3209 = vrot.lane.b32.xlu0 %v3070, 16
      %v3210 = vpop.permute.xlu0 %3209
      %3211 = vrot.lane.b32.xlu0 %v3073, 16
      %v3212 = vpop.permute.xlu0 %3211
      %3217 = vrot.lane.b32.xlu0 %v3193, 24
      %v3218 = vpop.permute.xlu0 %3217
      %3219 = vrot.lane.b32.xlu0 %v3196, 24
      %v3220 = vpop.permute.xlu0 %3219
      %v3223 = vsel %vm1747, %v2823, %v3202
      %v3224 = vsel %vm1747, %v2826, %v3204
      %v3225 = vsel %vm677, %v3223, %v3210
      %v3226 = vsel %vm677, %v3224, %v3212
      %v3227 = vsel %vm2265, %v3225, %v3218
      %v3228 = vsel %vm2265, %v3226, %v3220
      %v3229 = vpack.c.bf16 %v3228, %v3227
      %s3230 = scalar_lea.vmem %s12, 16
      %v3231 = vld [vmem:[%s3230] sm:$0xf]
      %v3232 = vld [vmem:[%s3230 + $0x4] sm:$0xf]
      %v3233 = vld [vmem:[%s3230 + $0x8] sm:$0xf]
      %v3234 = vld [vmem:[%s3230 + $0xc] sm:$0xf]
      %v3239 = vunpack.c.l.b16 %v3231
      %v3240 = vunpack.c.l.b16 %v3232
      %v3241 = vunpack.c.l.b16 %v3233
      %v3242 = vunpack.c.l.b16 %v3234
      %v3243 = vpack.c.b16 %v3240, %v3239
      %v3244 = vpack.c.b16 %v3242, %v3241
      %v3248 = vsel %vm1628, %v3229, 0
      %3250 = vmatprep.subr.bf16.mxu0 0
      %3251 = vmatpush1.bf16.msra.mxu0 %v3243
      %3252 = vmatprep.subr.bf16.mxu0 0
      %3253 = vmatpush1.bf16.msra.mxu0 %v3244
      %3254 = vmatprep.subr.bf16.mxu0 0
      %3255 = vmatpush1.bf16.msra.mxu0 0
      %3256 = vmatprep.subr.bf16.mxu0 0
      %3257 = vmatpush1.bf16.msra.mxu0 0
      %3258 = vmatprep.subr.bf16.mxu0 0
      %3259 = vmatpush1.bf16.msra.mxu0 0
      %3260 = vmatprep.subr.bf16.mxu0 0
      %3261 = vmatpush1.bf16.msra.mxu0 0
      %3262 = vmatprep.subr.bf16.mxu0 0
      %3263 = vmatpush1.bf16.msra.mxu0 0
      %3264 = vmatprep.subr.bf16.mxu0 0
      %3265 = vmatpush1.bf16.msra.mxu0 0
      %3266 = vmatprep.subr.bf16.mxu0 0
      %3267 = vmatpush1.bf16.msra.mxu0 0
      %3268 = vmatprep.subr.bf16.mxu0 0
      %3269 = vmatpush1.bf16.msra.mxu0 0
      %3270 = vmatprep.subr.bf16.mxu0 0
      %3271 = vmatpush1.bf16.msra.mxu0 0
      %3272 = vmatprep.subr.bf16.mxu0 0
      %3273 = vmatpush1.bf16.msra.mxu0 0
      %3274 = vmatprep.subr.bf16.mxu0 0
      %3275 = vmatpush1.bf16.msra.mxu0 0
      %3276 = vmatprep.subr.bf16.mxu0 0
      %3277 = vmatpush1.bf16.msra.mxu0 0
      %3278 = vmatprep.subr.bf16.mxu0 0
      %3279 = vmatpush1.bf16.msra.mxu0 0
      %3280 = vmatprep.subr.bf16.mxu0 0
      %3281 = vmatpush1.bf16.msra.mxu0 0
      %3282 = vmatprep.mubr.bf16.mxu0 0
      %3283 = vmatmul.mubr.bf16.gmra.mrb[0].mxu0 %v3248
      %v3284 = vpop.f32.mrb[0].mxu0
      %v3285 = vadd.f32 0.0, %v3284
      %v3286 = vpop.f32.mrb[0].mxu0
      %v3287 = vpop.f32.mrb[0].mxu0
      %v3288 = vadd.f32 0.0, %v3287
      %v3289 = vpop.f32.mrb[0].mxu0
      %3290 = vdwg.mxu0
      %v3291 = vadd.f32 %v2585, %v3285
      %v3292 = vadd.f32 %v2586, %v3288
      %s3293 = scalar_lea.vmem %s13, 1
      %v3294 = vld [vmem:[%s3293] sm:$0x1]
      %v3296 = vlaneseq
      %v3297 = vshrl.u32 %v3296, 7
      %v3298 = vsub.s32 0, %v3297
      %v3299 = vrot.slane %v3294, %v3298
      %v3301 = vadd.f32 %v3291, %v3299
      %v3302 = vadd.f32 %v3292, %v3299
      %s3303 = scalar_lea.vmem %s14, 1
      %v3304 = vld [vmem:[%s3303] sm:$0x1]
      %s3305 = scalar_lea.vmem %s15, 1
      %v3306 = vld [vmem:[%s3305] sm:$0x1]
      %v3307 = vsel %vm1628, %v3301, 0.0
      %3308 = vadd.xlane.f32.xlu0 %v3307
      %v3309 = vpop.xlane.xlu0 %3308
      %v3310 = vsel %vm1628, %v3302, 0.0
      %3311 = vadd.xlane.f32.xlu0 %v3310
      %v3312 = vpop.xlane.xlu0 %3311
      %v3313 = vmul.f32 %v3309, %v1635
      %v3314 = vmul.f32 %v3312, %v1635
      %v3315 = vsub.f32 %v3301, %v3313
      %v3316 = vsub.f32 %v3302, %v3314
      %v3317 = vmul.f32 %v3315, %v3315
      %v3318 = vmul.f32 %v3316, %v3316
      %v3319 = vsel %vm1628, %v3317, 0.0
      %3320 = vadd.xlane.f32.xlu0 %v3319
      %v3321 = vpop.xlane.xlu0 %3320
      %v3322 = vsel %vm1628, %v3318, 0.0
      %3323 = vadd.xlane.f32.xlu0 %v3322
      %v3324 = vpop.xlane.xlu0 %3323
      %v3325 = vmul.f32 %v3321, %v1635
      %v3326 = vmul.f32 %v3324, %v1635
      %v3327 = vadd.f32 %v3325, 1e-05
      %v3328 = vadd.f32 %v3326, 1e-05
      %v3329 = vrsqrt.pop %v3327
      %v3330 = vrsqrt.pop %v3328
      %v3331 = vmul.f32 %v3315, %v3329
      %v3332 = vmul.f32 %v3316, %v3330
      %v3334 = vlaneseq
      %v3335 = vshrl.u32 %v3334, 7
      %v3336 = vsub.s32 0, %v3335
      %v3337 = vrot.slane %v3304, %v3336
      %v3339 = vmul.f32 %v3331, %v3337
      %v3340 = vmul.f32 %v3332, %v3337
      %v3342 = vlaneseq
      %v3343 = vshrl.u32 %v3342, 7
      %v3344 = vsub.s32 0, %v3343
      %v3345 = vrot.slane %v3306, %v3344
      %v3347 = vadd.f32 %v3339, %v3345
      %v3348 = vadd.f32 %v3340, %v3345
      %v3349 = vpack.c.bf16 %v3348, %v3347
      %s3350 = scalar_lea.vmem %s16, 16
      %v3351 = vld [vmem:[%s3350] sm:$0xf]
      %v3352 = vld [vmem:[%s3350 + $0x4] sm:$0xf]
      %v3353 = vld [vmem:[%s3350 + $0x8] sm:$0xf]
      %v3354 = vld [vmem:[%s3350 + $0xc] sm:$0xf]
      %s3355 = scalar_lea.vmem %s17, 1
      %v3356 = vld [vmem:[%s3355] sm:$0x1]
      %v3358 = vlaneseq
      %v3359 = vshrl.u32 %v3358, 7
      %v3360 = vsub.s32 0, %v3359
      %v3361 = vrot.slane %v3356, %v3360
      %v3367 = vunpack.c.l.b16 %v3351
      %v3368 = vunpack.c.l.b16 %v3352
      %v3369 = vunpack.c.l.b16 %v3353
      %v3370 = vunpack.c.l.b16 %v3354
      %v3371 = vpack.c.b16 %v3368, %v3367
      %v3372 = vpack.c.b16 %v3370, %v3369
      %v3376 = vsel %vm1628, %v3349, 0
      %3378 = vmatprep.subr.bf16.mxu0 0
      %3379 = vmatpush1.bf16.msra.mxu0 %v3371
      %3380 = vmatprep.subr.bf16.mxu0 0
      %3381 = vmatpush1.bf16.msra.mxu0 %v3372
      %3382 = vmatprep.subr.bf16.mxu0 0
      %3383 = vmatpush1.bf16.msra.mxu0 0
      %3384 = vmatprep.subr.bf16.mxu0 0
      %3385 = vmatpush1.bf16.msra.mxu0 0
      %3386 = vmatprep.subr.bf16.mxu0 0
      %3387 = vmatpush1.bf16.msra.mxu0 0
      %3388 = vmatprep.subr.bf16.mxu0 0
      %3389 = vmatpush1.bf16.msra.mxu0 0
      %3390 = vmatprep.subr.bf16.mxu0 0
      %3391 = vmatpush1.bf16.msra.mxu0 0
      %3392 = vmatprep.subr.bf16.mxu0 0
      %3393 = vmatpush1.bf16.msra.mxu0 0
      %3394 = vmatprep.subr.bf16.mxu0 0
      %3395 = vmatpush1.bf16.msra.mxu0 0
      %3396 = vmatprep.subr.bf16.mxu0 0
      %3397 = vmatpush1.bf16.msra.mxu0 0
      %3398 = vmatprep.subr.bf16.mxu0 0
      %3399 = vmatpush1.bf16.msra.mxu0 0
      %3400 = vmatprep.subr.bf16.mxu0 0
      %3401 = vmatpush1.bf16.msra.mxu0 0
      %3402 = vmatprep.subr.bf16.mxu0 0
      %3403 = vmatpush1.bf16.msra.mxu0 0
      %3404 = vmatprep.subr.bf16.mxu0 0
      %3405 = vmatpush1.bf16.msra.mxu0 0
      %3406 = vmatprep.subr.bf16.mxu0 0
      %3407 = vmatpush1.bf16.msra.mxu0 0
      %3408 = vmatprep.subr.bf16.mxu0 0
      %3409 = vmatpush1.bf16.msra.mxu0 0
      %3410 = vmatprep.mubr.bf16.mxu0 0
      %3411 = vmatmul.mubr.bf16.gmra.mrb[0].mxu0 %v3376
      %v3412 = vpop.f32.mrb[0].mxu0
      %v3413 = vadd.f32 %v3361, %v3412
      %v3414 = vpop.f32.mrb[0].mxu0
      %v3415 = vpop.f32.mrb[0].mxu0
      %v3416 = vadd.f32 %v3361, %v3415
      %v3417 = vpop.f32.mrb[0].mxu0
      %3418 = vdwg.mxu0
      %v3419 = vmul.f32 %v3413, 0.5
      %v3420 = vmul.f32 %v3416, 0.5
      %v3421 = vmul.f32 %v3413, 0.044715
      %v3422 = vmul.f32 %v3416, 0.044715
      %v3423 = vmul.f32 %v3421, %v3413
      %v3424 = vmul.f32 %v3422, %v3416
      %v3425 = vmul.f32 %v3423, %v3413
      %v3426 = vmul.f32 %v3424, %v3416
      %v3427 = vadd.f32 %v3413, %v3425
      %v3428 = vadd.f32 %v3416, %v3426
      %v3429 = vmul.f32 %v3427, 0.7978846
      %v3430 = vmul.f32 %v3428, 0.7978846
      %v3431 = vtanh.pop %v3429
      %v3432 = vtanh.pop %v3430
      %v3433 = vadd.f32 %v3431, 1.0
      %v3434 = vadd.f32 %v3432, 1.0
      %v3435 = vmul.f32 %v3419, %v3433
      %v3436 = vmul.f32 %v3420, %v3434
      %v3437 = vpack.c.bf16 %v3436, %v3435
      %s3438 = scalar_lea.vmem %s18, 64
      %v3439 = vld [vmem:[%s3438] sm:$0xf]
      %v3440 = vld [vmem:[%s3438 + $0x4] sm:$0xf]
      %v3441 = vld [vmem:[%s3438 + $0x8] sm:$0xf]
      %v3442 = vld [vmem:[%s3438 + $0xc] sm:$0xf]
      %v3443 = vld [vmem:[%s3438 + $0x10] sm:$0xf]
      %v3444 = vld [vmem:[%s3438 + $0x14] sm:$0xf]
      %v3445 = vld [vmem:[%s3438 + $0x18] sm:$0xf]
      %v3446 = vld [vmem:[%s3438 + $0x1c] sm:$0xf]
      %v3447 = vld [vmem:[%s3438 + $0x20] sm:$0xf]
      %v3448 = vld [vmem:[%s3438 + $0x24] sm:$0xf]
      %v3449 = vld [vmem:[%s3438 + $0x28] sm:$0xf]
      %v3450 = vld [vmem:[%s3438 + $0x2c] sm:$0xf]
      %v3451 = vld [vmem:[%s3438 + $0x30] sm:$0xf]
      %v3452 = vld [vmem:[%s3438 + $0x34] sm:$0xf]
      %v3453 = vld [vmem:[%s3438 + $0x38] sm:$0xf]
      %v3454 = vld [vmem:[%s3438 + $0x3c] sm:$0xf]
      %v3471 = vunpack.c.l.b16 %v3439
      %v3472 = vunpack.c.l.b16 %v3440
      %v3473 = vunpack.c.l.b16 %v3441
      %v3474 = vunpack.c.l.b16 %v3442
      %v3475 = vunpack.c.l.b16 %v3443
      %v3476 = vunpack.c.l.b16 %v3444
      %v3477 = vunpack.c.l.b16 %v3445
      %v3478 = vunpack.c.l.b16 %v3446
      %v3479 = vunpack.c.l.b16 %v3447
      %v3480 = vunpack.c.l.b16 %v3448
      %v3481 = vunpack.c.l.b16 %v3449
      %v3482 = vunpack.c.l.b16 %v3450
      %v3483 = vunpack.c.l.b16 %v3451
      %v3484 = vunpack.c.l.b16 %v3452
      %v3485 = vunpack.c.l.b16 %v3453
      %v3486 = vunpack.c.l.b16 %v3454
      %v3487 = vpack.c.b16 %v3472, %v3471
      %v3488 = vpack.c.b16 %v3474, %v3473
      %v3489 = vpack.c.b16 %v3476, %v3475
      %v3490 = vpack.c.b16 %v3478, %v3477
      %v3491 = vpack.c.b16 %v3480, %v3479
      %v3492 = vpack.c.b16 %v3482, %v3481
      %v3493 = vpack.c.b16 %v3484, %v3483
      %v3494 = vpack.c.b16 %v3486, %v3485
      %3503 = vmatprep.subr.bf16.mxu0 0
      %3504 = vmatpush1.bf16.msra.mxu0 %v3487
      %3505 = vmatprep.subr.bf16.mxu0 0
      %3506 = vmatpush1.bf16.msra.mxu0 %v3488
      %3507 = vmatprep.subr.bf16.mxu0 0
      %3508 = vmatpush1.bf16.msra.mxu0 %v3489
      %3509 = vmatprep.subr.bf16.mxu0 0
      %3510 = vmatpush1.bf16.msra.mxu0 %v3490
      %3511 = vmatprep.subr.bf16.mxu0 0
      %3512 = vmatpush1.bf16.msra.mxu0 %v3491
      %3513 = vmatprep.subr.bf16.mxu0 0
      %3514 = vmatpush1.bf16.msra.mxu0 %v3492
      %3515 = vmatprep.subr.bf16.mxu0 0
      %3516 = vmatpush1.bf16.msra.mxu0 %v3493
      %3517 = vmatprep.subr.bf16.mxu0 0
      %3518 = vmatpush1.bf16.msra.mxu0 %v3494
      %3519 = vmatprep.subr.bf16.mxu0 0
      %3520 = vmatpush1.bf16.msra.mxu0 0
      %3521 = vmatprep.subr.bf16.mxu0 0
      %3522 = vmatpush1.bf16.msra.mxu0 0
      %3523 = vmatprep.subr.bf16.mxu0 0
      %3524 = vmatpush1.bf16.msra.mxu0 0
      %3525 = vmatprep.subr.bf16.mxu0 0
      %3526 = vmatpush1.bf16.msra.mxu0 0
      %3527 = vmatprep.subr.bf16.mxu0 0
      %3528 = vmatpush1.bf16.msra.mxu0 0
      %3529 = vmatprep.subr.bf16.mxu0 0
      %3530 = vmatpush1.bf16.msra.mxu0 0
      %3531 = vmatprep.subr.bf16.mxu0 0
      %3532 = vmatpush1.bf16.msra.mxu0 0
      %3533 = vmatprep.subr.bf16.mxu0 0
      %3534 = vmatpush1.bf16.msra.mxu0 0
      %3535 = vmatprep.mubr.bf16.mxu0 0
      %3536 = vmatmul.mubr.bf16.gmra.mrb[0].mxu0 %v3437
      %v3537 = vpop.f32.mrb[0].mxu0
      %v3538 = vadd.f32 0.0, %v3537
      %v3539 = vpop.f32.mrb[0].mxu0
      %v3540 = vpop.f32.mrb[0].mxu0
      %v3541 = vadd.f32 0.0, %v3540
      %v3542 = vpop.f32.mrb[0].mxu0
      %3543 = vdwg.mxu0
      %v3544 = vadd.f32 %v3301, %v3538
      %v3545 = vadd.f32 %v3302, %v3541
      %s3546 = scalar_lea.vmem %s19, 1
      %v3547 = vld [vmem:[%s3546] sm:$0x1]
      %v3549 = vlaneseq
      %v3550 = vshrl.u32 %v3549, 7
      %v3551 = vsub.s32 0, %v3550
      %v3552 = vrot.slane %v3547, %v3551
      %v3554 = vadd.f32 %v3544, %v3552
      %v3555 = vadd.f32 %v3545, %v3552
      %v3556 = vld [vmem:[%s20] sm:$0x1]
      %v3557 = vld [vmem:[%s21] sm:$0x1]
      %v3558 = vsel %vm1628, %v3554, 0.0
      %3559 = vadd.xlane.f32.xlu0 %v3558
      %v3560 = vpop.xlane.xlu0 %3559
      %v3561 = vsel %vm1628, %v3555, 0.0
      %3562 = vadd.xlane.f32.xlu0 %v3561
      %v3563 = vpop.xlane.xlu0 %3562
      %v3564 = vmul.f32 %v3560, %v1635
      %v3565 = vmul.f32 %v3563, %v1635
      %v3566 = vsub.f32 %v3554, %v3564
      %v3567 = vsub.f32 %v3555, %v3565
      %v3568 = vmul.f32 %v3566, %v3566
      %v3569 = vmul.f32 %v3567, %v3567
      %v3570 = vsel %vm1628, %v3568, 0.0
      %3571 = vadd.xlane.f32.xlu0 %v3570
      %v3572 = vpop.xlane.xlu0 %3571
      %v3573 = vsel %vm1628, %v3569, 0.0
      %3574 = vadd.xlane.f32.xlu0 %v3573
      %v3575 = vpop.xlane.xlu0 %3574
      %v3576 = vmul.f32 %v3572, %v1635
      %v3577 = vmul.f32 %v3575, %v1635
      %v3578 = vadd.f32 %v3576, 1e-05
      %v3579 = vadd.f32 %v3577, 1e-05
      %v3580 = vrsqrt.pop %v3578
      %v3581 = vrsqrt.pop %v3579
      %v3582 = vmul.f32 %v3566, %v3580
      %v3583 = vmul.f32 %v3567, %v3581
      %v3585 = vlaneseq
      %v3586 = vshrl.u32 %v3585, 7
      %v3587 = vsub.s32 0, %v3586
      %v3588 = vrot.slane %v3556, %v3587
      %v3590 = vmul.f32 %v3582, %v3588
      %v3591 = vmul.f32 %v3583, %v3588
      %v3593 = vlaneseq
      %v3594 = vshrl.u32 %v3593, 7
      %v3595 = vsub.s32 0, %v3594
      %v3596 = vrot.slane %v3557, %v3595
      %v3598 = vadd.f32 %v3590, %v3596
      %v3599 = vadd.f32 %v3591, %v3596
      %v3600 = vpack.c.bf16 %v3599, %v3598
      %v3601 = vld [vmem:[%s3] sm:$0xf]
      %v3602 = vld [vmem:[%s3 + $0x4] sm:$0xf]
      %v3603 = vld [vmem:[%s3 + $0x8] sm:$0xf]
      %v3604 = vld [vmem:[%s3 + $0xc] sm:$0xf]
      %v3605 = vld [vmem:[%s3 + $0x10] sm:$0xf]
      %v3606 = vld [vmem:[%s3 + $0x14] sm:$0xf]
      %v3607 = vld [vmem:[%s3 + $0x18] sm:$0xf]
      %v3608 = vld [vmem:[%s3 + $0x1c] sm:$0xf]
      %v3617 = vunpack.c.l.b16 %v3601
      %v3618 = vunpack.c.l.b16 %v3602
      %v3619 = vunpack.c.l.b16 %v3603
      %v3620 = vunpack.c.l.b16 %v3604
      %v3621 = vunpack.c.l.b16 %v3605
      %v3622 = vunpack.c.l.b16 %v3606
      %v3623 = vunpack.c.l.b16 %v3607
      %v3624 = vunpack.c.l.b16 %v3608
      %v3625 = vpack.c.b16 %v3618, %v3617
      %v3626 = vpack.c.b16 %v3620, %v3619
      %v3627 = vpack.c.b16 %v3622, %v3621
      %v3628 = vpack.c.b16 %v3624, %v3623
      %v3630 = vsel %vm1628, %v3600, 0
      %v3633 = vsel %vm1628, %v3625, 0
      %v3636 = vsel %vm1628, %v3626, 0
      %v3639 = vsel %vm1628, %v3627, 0
      %v3642 = vsel %vm1628, %v3628, 0
      %3644 = vmatprep.subr.bf16.mxu0 0
      %3645 = vmatpush1.bf16.xpose.msra.mxu0 %v3633
      %3646 = vmatprep.subr.bf16.mxu0 0
      %3647 = vmatpush1.bf16.xpose.msra.mxu0 %v3636
      %3648 = vmatprep.subr.bf16.mxu0 0
      %3649 = vmatpush1.bf16.xpose.msra.mxu0 %v3639
      %3650 = vmatprep.subr.bf16.mxu0 0
      %3651 = vmatpush1.bf16.xpose.msra.mxu0 %v3642
      %3652 = vmatprep.subr.bf16.mxu0 0
      %3653 = vmatpush1.bf16.xpose.msra.mxu0 0
      %3654 = vmatprep.subr.bf16.mxu0 0
      %3655 = vmatpush1.bf16.xpose.msra.mxu0 0
      %3656 = vmatprep.subr.bf16.mxu0 0
      %3657 = vmatpush1.bf16.xpose.msra.mxu0 0
      %3658 = vmatprep.subr.bf16.mxu0 0
      %3659 = vmatpush1.bf16.xpose.msra.mxu0 0
      %3660 = vmatprep.subr.bf16.mxu0 0
      %3661 = vmatpush1.bf16.xpose.msra.mxu0 0
      %3662 = vmatprep.subr.bf16.mxu0 0
      %3663 = vmatpush1.bf16.xpose.msra.mxu0 0
      %3664 = vmatprep.subr.bf16.mxu0 0
      %3665 = vmatpush1.bf16.xpose.msra.mxu0 0
      %3666 = vmatprep.subr.bf16.mxu0 0
      %3667 = vmatpush1.bf16.xpose.msra.mxu0 0
      %3668 = vmatprep.subr.bf16.mxu0 0
      %3669 = vmatpush1.bf16.xpose.msra.mxu0 0
      %3670 = vmatprep.subr.bf16.mxu0 0
      %3671 = vmatpush1.bf16.xpose.msra.mxu0 0
      %3672 = vmatprep.subr.bf16.mxu0 0
      %3673 = vmatpush1.bf16.xpose.msra.mxu0 0
      %3674 = vmatprep.subr.bf16.mxu0 0
      %3675 = vmatpush1.bf16.xpose.msra.mxu0 0
      %3676 = vmatprep.mubr.bf16.mxu0 0
      %3677 = vmatmul.mubr.bf16.gmra.mrb[0].mxu0 %v3630
      %v3678 = vpop.f32.mrb[0].mxu0
      %v3679 = vadd.f32 0.0, %v3678
      %v3680 = vpop.f32.mrb[0].mxu0
      %v3681 = vpop.f32.mrb[0].mxu0
      %v3682 = vadd.f32 0.0, %v3681
      %v3683 = vpop.f32.mrb[0].mxu0
      %3684 = vdwg.mxu0
      %vm3685 = vcmask 523264
      %3686 = vst.msk [vmem:[%s663] sm:$0xff] %vm3685, %v3679
      %3687 = vst.msk [vmem:[%s663 + $0x8] sm:$0xff] %vm3685, %v3682
      %p3688 = scmp.lt.s32.totalorder %s33, 1
      %s3689 = scalar_select %p3688, %s33, 1
      %s3690 = smul.addr %s3689, 2
      %s3691 = smul.addr %s3690, 8
      %s3692 = scalar_lea.vmem %s22, %s3691
      // Predicated region
      $region109: #{clip_caption_forward.1} parent=107 // pred_check
        %p3693 = pneg %p513
      $region110: #{clip_caption_forward.1} parent=107 // pred_check_branch
        %3695 = sbr.rel (%p3693) target = $region112
      $region111: #{clip_caption_forward.1} parent=107 // pred_region
        _
      $region112: #{clip_caption_forward.1} parent=107 // pred_fallthru
        _
    $region108: #{clip_caption_forward.1} parent=5 // pred_fallthru
      _
    %p3696 = scmp.le.s32.totalorder 2, %s28
    // Predicated region
    $region113: #{clip_caption_forward.1} parent=5 // pred_check
      %p3697 = pneg %p3696
    $region114: #{clip_caption_forward.1} parent=5 // pred_check_branch
      %3699 = sbr.rel (%p3697) target = $region116
    $region115: #{clip_caption_forward.1} parent=5 // pred_region
      %s3700 = ssub.s32 %s28, 2
      // Predicated region
      $region117: #{clip_caption_forward.1} parent=115 // pred_check
        %p3701 = pneg %p519
      $region118: #{clip_caption_forward.1} parent=115 // pred_check_branch
        %3703 = sbr.rel (%p3701) target = $region120
      $region119: #{clip_caption_forward.1} parent=115 // pred_region
        %p3704 = scmp.lt.s32.totalorder %s34, 1
        %s3705 = scalar_select %p3704, %s34, 1
        %s3706 = smul.addr %s3705, 2
        %s3707 = smul.addr %s3706, 8
        %s3708 = scalar_lea.vmem %s22, %s3707
      $region120: #{clip_caption_forward.1} parent=115 // pred_fallthru
        _
    $region116: #{clip_caption_forward.1} parent=5 // pred_fallthru
      _
  $region6: #{clip_caption_forward.1} parent=0 // loop_footer
    %s32 = sadd.s32 1, %s28
  $region7: #{clip_caption_forward.1} parent=0 // loop_footer_branch
    %27 = sbr.rel target = $region3
  $region8: #{clip_caption_forward.1} parent=0 // loop_exit
    _

</llo_original>
